<compile_context>
chip_gen: v6e
topology: v6e:2x2x1
jax: 0.10.0
libtpu: 0.0.40
codegen_flags: <defaults>
</compile_context>

<pallas_src>
import functools

import jax
import jax.numpy as jnp
from jax import lax
from jax.experimental import pallas as pl
from jax.experimental.pallas import tpu as pltpu

_EPS = 1e-5
_VMEM_LIMIT = 48 * 1024 * 1024  # keep under v7x's 64 MiB physical VMEM


# ----------------------------- Pallas kernels ----------------------------- #

def _conv_stats_kernel(a_ref, w_ref, y_ref, sum_ref, sq_ref):
    """Conv-as-matmul + per-channel sum / sum-of-squares accumulation (pass 1 of InstanceNorm).

    a_ref: (1, CKK, TP) bf16   w_ref: (Cout, CKK) bf16
    y_ref: (1, Cout, TP) f32   sum_ref/sq_ref: (1, Cout, 1) f32, resident across the P axis.
    Conv bias is intentionally skipped: it is exactly absorbed by InstanceNorm's mean subtraction.
    """
    @pl.when(pl.program_id(1) == 0)
    def _():
        sum_ref[...] = jnp.zeros_like(sum_ref)
        sq_ref[...] = jnp.zeros_like(sq_ref)

    y = jnp.dot(w_ref[...], a_ref[0], preferred_element_type=jnp.float32)  # (Cout, TP) on MXU
    y_ref[0] = y
    sum_ref[0] += jnp.sum(y, axis=1, keepdims=True)        # (Cout, 1)
    sq_ref[0] += jnp.sum(y * y, axis=1, keepdims=True)     # (Cout, 1)


def _scale_shift_kernel(y_ref, scale_ref, shift_ref, o_ref):
    """Pass 2 of InstanceNorm: o = y * scale + shift (per sample & channel), lane-dense."""
    o_ref[0] = y_ref[0] * scale_ref[0] + shift_ref[0]


def _conv_bias_kernel(a_ref, w_ref, b_ref, o_ref, *, apply_sigmoid):
    """Conv-as-matmul + bias (+ optional fused sigmoid) for blocks without InstanceNorm."""
    y = jnp.dot(w_ref[...], a_ref[0], preferred_element_type=jnp.float32)  # (Cout, TP)
    y = y + b_ref[...]                                                     # (Cout, 1) broadcast
    if apply_sigmoid:
        y = jax.nn.sigmoid(y)
    o_ref[0] = y.astype(o_ref.dtype)


# ------------------------------- wrappers --------------------------------- #

def _round_up(x, m):
    return (x + m - 1) // m * m


def _choose_tile_p(ckk, cout, p, max_tp):
    """Largest P tile (multiple of 128) whose double-buffered A (bf16) + y (f32) fit the budget."""
    per_col = 2 * 2 * ckk + 2 * 4 * cout       # bytes per output column, x2 pipeline buffers
    budget = 24 * 1024 * 1024                  # headroom under the 48 MiB scoped-VMEM limit
    tp = max_tp
    while tp > 128 and tp * per_col > budget:
        tp //= 2
    return max(128, min(tp, _round_up(p, 128)))


def conv_block_share(x, weight, bias, gamma=None, beta=None, *, stride=2, padding=1,
                     activation=True, instance_norm=True, apply_sigmoid=False,
                     eps=_EPS, max_tp=2048):
    """Forward of ConvBlockShare. x: (N,Cin,H,W) f32; weight: (Cout,Cin,K,K); bias: (Cout,).
    Returns (N, Cout, Hout, Wout) f32."""
    if activation:
        # LeakyReLU(0.2) hoisted out of the per-patch hot path (done once, not K*K times).
        x = jnp.where(x > 0, x, 0.2 * x)

    N, Cin, H, W = x.shape
    Cout, _, K, _ = weight.shape
    Hout = (H + 2 * padding - K) // stride + 1
    Wout = (W + 2 * padding - K) // stride + 1
    P = Hout * Wout
    CKK = Cin * K * K

    # im2col in channel-major layout: A[n, (ci,kh,kw), (i,j)]; spatial P is the last (lane) axis.
    xp = jnp.pad(x, ((0, 0), (0, 0), (padding, padding), (padding, padding)))
    cols = [xp[:, :, kh:kh + stride * Hout:stride, kw:kw + stride * Wout:stride]
            for kh in range(K) for kw in range(K)]
    a = jnp.stack(cols, axis=2).reshape(N, CKK, P)

    tp = _choose_tile_p(CKK, Cout, P, max_tp)
    p_pad = _round_up(P, tp)
    if p_pad != P:
        # zero columns: contribute nothing to the IN statistics (bias is skipped there).
        a = jnp.pad(a, ((0, 0), (0, 0), (0, p_pad - P)))
    a = a.astype(jnp.bfloat16)                               # bf16 operands, f32 accumulation
    wm = weight.reshape(Cout, CKK).astype(jnp.bfloat16)
    n_p = p_pad // tp

    if instance_norm:
        y, ysum, ysq = pl.pallas_call(
            _conv_stats_kernel,
            out_shape=(jax.ShapeDtypeStruct((N, Cout, p_pad), jnp.float32),
                       jax.ShapeDtypeStruct((N, Cout, 1), jnp.float32),
                       jax.ShapeDtypeStruct((N, Cout, 1), jnp.float32)),
            grid_spec=pltpu.PrefetchScalarGridSpec(
                num_scalar_prefetch=0,
                grid=(N, n_p),
                in_specs=[pl.BlockSpec((1, CKK, tp), lambda n, p: (n, 0, p)),
                          pl.BlockSpec((Cout, CKK), lambda n, p: (0, 0))],
                out_specs=(pl.BlockSpec((1, Cout, tp), lambda n, p: (n, 0, p)),
                           pl.BlockSpec((1, Cout, 1), lambda n, p: (n, 0, 0)),
                           pl.BlockSpec((1, Cout, 1), lambda n, p: (n, 0, 0)))),
            compiler_params=pltpu.CompilerParams(
                dimension_semantics=("parallel", "arbitrary"),   # P is the IN reduction axis
                vmem_limit_bytes=_VMEM_LIMIT),
        )(a, wm)

        # Finalize per-(sample, channel) statistics (tiny) and fold in the affine parameters.
        mean = ysum[:, :, 0] / P                                 # true P: padded columns add 0
        var = jnp.maximum(ysq[:, :, 0] / P - mean * mean, 0.0)
        inv_std = lax.rsqrt(var + eps)
        scale = gamma[None, :] * inv_std                         # (N, Cout)
        shift = beta[None, :] - mean * scale                     # conv bias absorbed by IN

        out = pl.pallas_call(
            _scale_shift_kernel,
            out_shape=jax.ShapeDtypeStruct((N, Cout, p_pad), jnp.float32),
            grid_spec=pltpu.PrefetchScalarGridSpec(
                num_scalar_prefetch=0,
                grid=(N, n_p),
                in_specs=[pl.BlockSpec((1, Cout, tp), lambda n, p: (n, 0, p)),
                          pl.BlockSpec((1, Cout, 1), lambda n, p: (n, 0, 0)),
                          pl.BlockSpec((1, Cout, 1), lambda n, p: (n, 0, 0))],
                out_specs=pl.BlockSpec((1, Cout, tp), lambda n, p: (n, 0, p))),
            compiler_params=pltpu.CompilerParams(
                dimension_semantics=("parallel", "parallel"),
                vmem_limit_bytes=_VMEM_LIMIT),
        )(y, scale[:, :, None], shift[:, :, None])
    else:
        out = pl.pallas_call(
            functools.partial(_conv_bias_kernel, apply_sigmoid=apply_sigmoid),
            out_shape=jax.ShapeDtypeStruct((N, Cout, p_pad), jnp.float32),
            grid_spec=pltpu.PrefetchScalarGridSpec(
                num_scalar_prefetch=0,
                grid=(N, n_p),
                in_specs=[pl.BlockSpec((1, CKK, tp), lambda n, p: (n, 0, p)),
                          pl.BlockSpec((Cout, CKK), lambda n, p: (0, 0)),
                          pl.BlockSpec((Cout, 1), lambda n, p: (0, 0))],
                out_specs=pl.BlockSpec((1, Cout, tp), lambda n, p: (n, 0, p))),
            compiler_params=pltpu.CompilerParams(
                dimension_semantics=("parallel", "parallel"),
                vmem_limit_bytes=_VMEM_LIMIT),
        )(a, wm, bias.reshape(Cout, 1).astype(jnp.float32))

    # Output is already channel-major NCHW-flat: slice off P padding and restore (Hout, Wout).
    return out[:, :, :P].reshape(N, Cout, Hout, Wout)


def discriminator_forward(xs, label, params, *, max_tp=2048):
    """Discriminator(input_dim, num_filter, output_dim).forward(x, label) with shared weights
    applied to every element of the list `xs` (ModuleParallel semantics)."""
    if not isinstance(xs, (list, tuple)):
        xs = [xs]
    labels = label if isinstance(label, (list, tuple)) else [label] * len(xs)
    outs = []
    for x_, l_ in zip(xs, labels):
        h = jnp.concatenate([x_, l_], axis=1)
        h = conv_block_share(h, *params["conv1"], stride=2, activation=False,
                             instance_norm=False, max_tp=max_tp)
        h = conv_block_share(h, *params["conv2"], stride=2, max_tp=max_tp)
        h = conv_block_share(h, *params["conv3"], stride=2, max_tp=max_tp)
        h = conv_block_share(h, *params["conv4"], stride=1, max_tp=max_tp)
        h = conv_block_share(h, *params["conv5"], stride=1, instance_norm=False,
                             apply_sigmoid=True, max_tp=max_tp)
        outs.append(h)
    return outs


# ---------------------------- pure-JAX reference --------------------------- #

def _reference_block(x, w, b, gamma=None, beta=None, *, stride=2, padding=1, activation=True,
                     instance_norm=True, apply_sigmoid=False, eps=_EPS):
    if activation:
        x = jnp.where(x > 0, x, 0.2 * x)
    y = lax.conv_general_dilated(x, w, (stride, stride),
                                 ((padding, padding), (padding, padding)),
                                 dimension_numbers=("NCHW", "OIHW", "NCHW"))
    y = y + b.reshape(1, -1, 1, 1)
    if instance_norm:
        mean = jnp.mean(y, axis=(2, 3), keepdims=True)
        var = jnp.mean(jnp.square(y - mean), axis=(2, 3), keepdims=True)
        y = (y - mean) * lax.rsqrt(var + eps)
        y = y * gamma.reshape(1, -1, 1, 1) + beta.reshape(1, -1, 1, 1)
    if apply_sigmoid:
        y = jax.nn.sigmoid(y)
    return y


def _reference_discriminator(xs, label, params, *, eps=_EPS):
    if not isinstance(xs, (list, tuple)):
        xs = [xs]
    labels = label if isinstance(label, (list, tuple)) else [label] * len(xs)
    outs = []
    for x_, l_ in zip(xs, labels):
        h = jnp.concatenate([x_, l_], axis=1)
        h = _reference_block(h, *params["conv1"], stride=2, activation=False,
                             instance_norm=False, eps=eps)
        h = _reference_block(h, *params["conv2"], stride=2, eps=eps)
        h = _reference_block(h, *params["conv3"], stride=2, eps=eps)
        h = _reference_block(h, *params["conv4"], stride=1, eps=eps)
        h = _reference_block(h, *params["conv5"], stride=1, instance_norm=False,
                             apply_sigmoid=True, eps=eps)
        outs.append(h)
    return outs


# ---------------------------------- test ----------------------------------- #

if __name__ == "__main__":
    key = jax.random.PRNGKey(0)
    keys = jax.random.split(key, 16)

    # Discriminator(input_dim=4, num_filter=8, output_dim=1); list of 2 inputs + shared label.
    N, Cx, Cl, S = 2, 3, 1, 64
    nf, out_dim = 8, 1
    in_dim = Cx + Cl

    xs = [jax.random.normal(keys[0], (N, Cx, S, S), jnp.float32),
          jax.random.normal(keys[1], (N, Cx, S, S), jnp.float32)]
    label = jax.random.normal(keys[2], (N, Cl, S, S), jnp.float32)

    def conv_init(k, cin, cout):
        k1, k2 = jax.random.split(k)
        w = 0.02 * jax.random.normal(k1, (cout, cin, 4, 4), jnp.float32)   # normal_weight_init
        b = 0.01 * jax.random.normal(k2, (cout,), jnp.float32)
        return w, b

    def in_init(k, c):
        k1, k2 = jax.random.split(k)
        return (1.0 + 0.1 * jax.random.normal(k1, (c,), jnp.float32),
                0.1 * jax.random.normal(k2, (c,), jnp.float32))

    w1, b1 = conv_init(keys[3], in_dim, nf)
    w2, b2 = conv_init(keys[4], nf, nf * 2); g2, be2 = in_init(keys[5], nf * 2)
    w3, b3 = conv_init(keys[6], nf * 2, nf * 4); g3, be3 = in_init(keys[7], nf * 4)
    w4, b4 = conv_init(keys[8], nf * 4, nf * 8); g4, be4 = in_init(keys[9], nf * 8)
    w5, b5 = conv_init(keys[10], nf * 8, out_dim)

    params = {
        "conv1": (w1, b1),
        "conv2": (w2, b2, g2, be2),
        "conv3": (w3, b3, g3, be3),
        "conv4": (w4, b4, g4, be4),
        "conv5": (w5, b5),
    }

    # small TP so the test also exercises multi-tile accumulation across the P axis.
    fwd = jax.jit(functools.partial(discriminator_forward, max_tp=128))
    outs = jax.block_until_ready(fwd(xs, label, params))

    refs = _reference_discriminator(xs, label, params)
    shapes_ok = all(o.shape == r.shape for o, r in zip(outs, refs))
    max_err = max(float(jnp.max(jnp.abs(o - r))) for o, r in zip(outs, refs))
    if shapes_ok and max_err < 2e-2:
        print("KERNEL_OK")
    else:
        print(f"MISMATCH shapes_ok={shapes_ok} max_abs_err={max_err}")
</pallas_src>

<mosaic_0001>
module attributes {stable_mosaic.version = 11 : i64} {
  func.func @_conv_bias_kernel(%arg0: i32, %arg1: i32, %arg2: memref<1x64x128xbf16, #tpu.memory_space<vmem>>, %arg3: memref<8x64xbf16, #tpu.memory_space<vmem>>, %arg4: memref<8x1xf32, #tpu.memory_space<vmem>>, %arg5: memref<1x8x128xf32, #tpu.memory_space<vmem>>) attributes {dimension_semantics = [#tpu.dimension_semantics<parallel>, #tpu.dimension_semantics<parallel>], iteration_bounds = array<i64: 2, 8>, scalar_prefetch = 0 : i64, scratch_operands = 0 : i64, tpu.core_type = #tpu.core_type<tc>, window_params = [{transform_indices = @transform_0, window_bounds = array<i64: 1, 64, 128>}, {pipeline_mode = #tpu.pipeline_mode<synchronous>, transform_indices = @transform_1, window_bounds = array<i64: 8, 64>}, {pipeline_mode = #tpu.pipeline_mode<synchronous>, transform_indices = @transform_2, window_bounds = array<i64: 8, 1>}, {transform_indices = @transform_3, window_bounds = array<i64: 1, 8, 128>}]} {
    %c0 = arith.constant 0 : index
    %c0_0 = arith.constant 0 : index
    %0 = vector.load %arg3[%c0, %c0_0] : memref<8x64xbf16, #tpu.memory_space<vmem>>, vector<8x64xbf16>
    %c0_1 = arith.constant 0 : index
    %c0_2 = arith.constant 0 : index
    %c0_3 = arith.constant 0 : index
    %1 = vector.load %arg2[%c0_1, %c0_2, %c0_3] : memref<1x64x128xbf16, #tpu.memory_space<vmem>>, vector<1x64x128xbf16>
    %2 = vector.shape_cast %1 : vector<1x64x128xbf16> to vector<64x128xbf16>
    %cst = arith.constant dense<0.000000e+00> : vector<8x128xf32>
    %3 = tpu.matmul %0, %2, %cst {dimension_numbers = #tpu.dot_dimension_numbers<[1], [0], [0], [1], [0, 0, 1, 1], [], []>} : vector<8x64xbf16>, vector<64x128xbf16>, vector<8x128xf32> -> vector<8x128xf32>
    %c0_4 = arith.constant 0 : index
    %c0_5 = arith.constant 0 : index
    %4 = vector.load %arg4[%c0_4, %c0_5] : memref<8x1xf32, #tpu.memory_space<vmem>>, vector<8x1xf32>
    %5 = vector.broadcast %4 : vector<8x1xf32> to vector<8x128xf32>
    %6 = arith.addf %3, %5 : vector<8x128xf32>
    %c0_6 = arith.constant 0 : index
    %c0_7 = arith.constant 0 : index
    %c0_8 = arith.constant 0 : index
    %7 = vector.load %arg5[%c0_6, %c0_7, %c0_8] : memref<1x8x128xf32, #tpu.memory_space<vmem>>, vector<1x8x128xf32>
    %8 = vector.shape_cast %7 : vector<1x8x128xf32> to vector<8x128xf32>
    %9 = vector.shape_cast %6 : vector<8x128xf32> to vector<1x8x128xf32>
    tpu.vector_store %arg5[%c0_6, %c0_7, %c0_8], %9 {strides = array<i32>} : memref<1x8x128xf32, #tpu.memory_space<vmem>>, vector<1x8x128xf32>,
    return
  }
  func.func @transform_0(%arg0: i32, %arg1: i32) -> (i32, i32, i32) {
    %c0_i32 = arith.constant 0 : i32
    %c0_i32_0 = arith.constant 0 : i32
    return %arg0, %c0_i32, %arg1 : i32, i32, i32
  }
  func.func @transform_1(%arg0: i32, %arg1: i32) -> (i32, i32) {
    %c0_i32 = arith.constant 0 : i32
    %c0_i32_0 = arith.constant 0 : i32
    %c0_i32_1 = arith.constant 0 : i32
    return %c0_i32, %c0_i32_0 : i32, i32
  }
  func.func @transform_2(%arg0: i32, %arg1: i32) -> (i32, i32) {
    %c0_i32 = arith.constant 0 : i32
    %c0_i32_0 = arith.constant 0 : i32
    %c0_i32_1 = arith.constant 0 : i32
    return %c0_i32, %c0_i32_0 : i32, i32
  }
  func.func @transform_3(%arg0: i32, %arg1: i32) -> (i32, i32, i32) {
    %c0_i32 = arith.constant 0 : i32
    %c0_i32_0 = arith.constant 0 : i32
    return %arg0, %c0_i32, %arg1 : i32, i32, i32
  }
}

module attributes {stable_mosaic.version = 11 : i64} {
  func.func @_conv_stats_kernel(%arg0: i32, %arg1: i32, %arg2: memref<1x128x128xbf16, #tpu.memory_space<vmem>>, %arg3: memref<16x128xbf16, #tpu.memory_space<vmem>>, %arg4: memref<1x16x128xf32, #tpu.memory_space<vmem>>, %arg5: memref<1x16x1xf32, #tpu.memory_space<vmem>>, %arg6: memref<1x16x1xf32, #tpu.memory_space<vmem>>) attributes {dimension_semantics = [#tpu.dimension_semantics<parallel>, #tpu.dimension_semantics<arbitrary>], iteration_bounds = array<i64: 2, 2>, scalar_prefetch = 0 : i64, scratch_operands = 0 : i64, tpu.core_type = #tpu.core_type<tc>, window_params = [{transform_indices = @transform_0, window_bounds = array<i64: 1, 128, 128>}, {pipeline_mode = #tpu.pipeline_mode<synchronous>, transform_indices = @transform_1, window_bounds = array<i64: 16, 128>}, {transform_indices = @transform_2, window_bounds = array<i64: 1, 16, 128>}, {transform_indices = @transform_3, window_bounds = array<i64: 1, 16, 1>}, {transform_indices = @transform_4, window_bounds = array<i64: 1, 16, 1>}]} {
    %c0_i32 = arith.constant 0 : i32
    %0 = arith.cmpi eq, %arg1, %c0_i32 : i32
    %1 = arith.extui %0 : i1 to i32
    %c0_i32_0 = arith.constant 0 : i32
    %2 = arith.cmpi ne, %1, %c0_i32_0 : i32
    scf.if %2 {
      %cst_22 = arith.constant 0.000000e+00 : f32
      %27 = vector.broadcast %cst_22 : f32 to vector<1x16x1xf32>
      %c0_23 = arith.constant 0 : index
      %c0_24 = arith.constant 0 : index
      %c0_25 = arith.constant 0 : index
      %28 = vector.load %arg5[%c0_23, %c0_24, %c0_25] : memref<1x16x1xf32, #tpu.memory_space<vmem>>, vector<1x16x1xf32>
      tpu.vector_store %arg5[%c0_23, %c0_24, %c0_25], %27 {strides = array<i32>} : memref<1x16x1xf32, #tpu.memory_space<vmem>>, vector<1x16x1xf32>,
      %cst_26 = arith.constant 0.000000e+00 : f32
      %29 = vector.broadcast %cst_26 : f32 to vector<1x16x1xf32>
      %c0_27 = arith.constant 0 : index
      %c0_28 = arith.constant 0 : index
      %c0_29 = arith.constant 0 : index
      %30 = vector.load %arg6[%c0_27, %c0_28, %c0_29] : memref<1x16x1xf32, #tpu.memory_space<vmem>>, vector<1x16x1xf32>
      tpu.vector_store %arg6[%c0_27, %c0_28, %c0_29], %29 {strides = array<i32>} : memref<1x16x1xf32, #tpu.memory_space<vmem>>, vector<1x16x1xf32>,
    } else {
    }
    %c0 = arith.constant 0 : index
    %c0_1 = arith.constant 0 : index
    %3 = vector.load %arg3[%c0, %c0_1] : memref<16x128xbf16, #tpu.memory_space<vmem>>, vector<16x128xbf16>
    %c0_2 = arith.constant 0 : index
    %c0_3 = arith.constant 0 : index
    %c0_4 = arith.constant 0 : index
    %4 = vector.load %arg2[%c0_2, %c0_3, %c0_4] : memref<1x128x128xbf16, #tpu.memory_space<vmem>>, vector<1x128x128xbf16>
    %5 = vector.shape_cast %4 : vector<1x128x128xbf16> to vector<128x128xbf16>
    %cst = arith.constant dense<0.000000e+00> : vector<16x128xf32>
    %6 = tpu.matmul %3, %5, %cst {dimension_numbers = #tpu.dot_dimension_numbers<[1], [0], [0], [1], [0, 0, 1, 1], [], []>} : vector<16x128xbf16>, vector<128x128xbf16>, vector<16x128xf32> -> vector<16x128xf32>
    %c0_5 = arith.constant 0 : index
    %c0_6 = arith.constant 0 : index
    %c0_7 = arith.constant 0 : index
    %7 = vector.load %arg4[%c0_5, %c0_6, %c0_7] : memref<1x16x128xf32, #tpu.memory_space<vmem>>, vector<1x16x128xf32>
    %8 = vector.shape_cast %7 : vector<1x16x128xf32> to vector<16x128xf32>
    %9 = vector.shape_cast %6 : vector<16x128xf32> to vector<1x16x128xf32>
    tpu.vector_store %arg4[%c0_5, %c0_6, %c0_7], %9 {strides = array<i32>} : memref<1x16x128xf32, #tpu.memory_space<vmem>>, vector<1x16x128xf32>,
    %c0_8 = arith.constant 0 : index
    %c0_9 = arith.constant 0 : index
    %c0_10 = arith.constant 0 : index
    %10 = vector.load %arg5[%c0_8, %c0_9, %c0_10] : memref<1x16x1xf32, #tpu.memory_space<vmem>>, vector<1x16x1xf32>
    %11 = vector.shape_cast %10 : vector<1x16x1xf32> to vector<16x1xf32>
    %cst_11 = arith.constant dense<0.000000e+00> : vector<16xf32>
    %12 = vector.multi_reduction <add>, %6, %cst_11 [1] : vector<16x128xf32> to vector<16xf32>
    %13 = vector.shape_cast %12 : vector<16xf32> to vector<16x1xf32>
    %14 = arith.addf %11, %13 : vector<16x1xf32>
    %c0_12 = arith.constant 0 : index
    %c0_13 = arith.constant 0 : index
    %c0_14 = arith.constant 0 : index
    %15 = vector.load %arg5[%c0_12, %c0_13, %c0_14] : memref<1x16x1xf32, #tpu.memory_space<vmem>>, vector<1x16x1xf32>
    %16 = vector.shape_cast %15 : vector<1x16x1xf32> to vector<16x1xf32>
    %17 = vector.shape_cast %14 : vector<16x1xf32> to vector<1x16x1xf32>
    tpu.vector_store %arg5[%c0_12, %c0_13, %c0_14], %17 {strides = array<i32>} : memref<1x16x1xf32, #tpu.memory_space<vmem>>, vector<1x16x1xf32>,
    %c0_15 = arith.constant 0 : index
    %c0_16 = arith.constant 0 : index
    %c0_17 = arith.constant 0 : index
    %18 = vector.load %arg6[%c0_15, %c0_16, %c0_17] : memref<1x16x1xf32, #tpu.memory_space<vmem>>, vector<1x16x1xf32>
    %19 = vector.shape_cast %18 : vector<1x16x1xf32> to vector<16x1xf32>
    %20 = arith.mulf %6, %6 : vector<16x128xf32>
    %cst_18 = arith.constant dense<0.000000e+00> : vector<16xf32>
    %21 = vector.multi_reduction <add>, %20, %cst_18 [1] : vector<16x128xf32> to vector<16xf32>
    %22 = vector.shape_cast %21 : vector<16xf32> to vector<16x1xf32>
    %23 = arith.addf %19, %22 : vector<16x1xf32>
    %c0_19 = arith.constant 0 : index
    %c0_20 = arith.constant 0 : index
    %c0_21 = arith.constant 0 : index
    %24 = vector.load %arg6[%c0_19, %c0_20, %c0_21] : memref<1x16x1xf32, #tpu.memory_space<vmem>>, vector<1x16x1xf32>
    %25 = vector.shape_cast %24 : vector<1x16x1xf32> to vector<16x1xf32>
    %26 = vector.shape_cast %23 : vector<16x1xf32> to vector<1x16x1xf32>
    tpu.vector_store %arg6[%c0_19, %c0_20, %c0_21], %26 {strides = array<i32>} : memref<1x16x1xf32, #tpu.memory_space<vmem>>, vector<1x16x1xf32>,
    return
  }
  func.func @transform_0(%arg0: i32, %arg1: i32) -> (i32, i32, i32) {
    %c0_i32 = arith.constant 0 : i32
    %c0_i32_0 = arith.constant 0 : i32
    return %arg0, %c0_i32, %arg1 : i32, i32, i32
  }
  func.func @transform_1(%arg0: i32, %arg1: i32) -> (i32, i32) {
    %c0_i32 = arith.constant 0 : i32
    %c0_i32_0 = arith.constant 0 : i32
    %c0_i32_1 = arith.constant 0 : i32
    return %c0_i32, %c0_i32_0 : i32, i32
  }
  func.func @transform_2(%arg0: i32, %arg1: i32) -> (i32, i32, i32) {
    %c0_i32 = arith.constant 0 : i32
    %c0_i32_0 = arith.constant 0 : i32
    return %arg0, %c0_i32, %arg1 : i32, i32, i32
  }
  func.func @transform_3(%arg0: i32, %arg1: i32) -> (i32, i32, i32) {
    %c0_i32 = arith.constant 0 : i32
    %c0_i32_0 = arith.constant 0 : i32
    %c0_i32_1 = arith.constant 0 : i32
    return %arg0, %c0_i32, %c0_i32_0 : i32, i32, i32
  }
  func.func @transform_4(%arg0: i32, %arg1: i32) -> (i32, i32, i32) {
    %c0_i32 = arith.constant 0 : i32
    %c0_i32_0 = arith.constant 0 : i32
    %c0_i32_1 = arith.constant 0 : i32
    return %arg0, %c0_i32, %c0_i32_0 : i32, i32, i32
  }
}

module attributes {stable_mosaic.version = 11 : i64} {
  func.func @_scale_shift_kernel(%arg0: i32, %arg1: i32, %arg2: memref<1x16x128xf32, #tpu.memory_space<vmem>>, %arg3: memref<1x16x1xf32, #tpu.memory_space<vmem>>, %arg4: memref<1x16x1xf32, #tpu.memory_space<vmem>>, %arg5: memref<1x16x128xf32, #tpu.memory_space<vmem>>) attributes {dimension_semantics = [#tpu.dimension_semantics<parallel>, #tpu.dimension_semantics<parallel>], iteration_bounds = array<i64: 2, 2>, scalar_prefetch = 0 : i64, scratch_operands = 0 : i64, tpu.core_type = #tpu.core_type<tc>, window_params = [{transform_indices = @transform_0, window_bounds = array<i64: 1, 16, 128>}, {transform_indices = @transform_1, window_bounds = array<i64: 1, 16, 1>}, {transform_indices = @transform_2, window_bounds = array<i64: 1, 16, 1>}, {transform_indices = @transform_3, window_bounds = array<i64: 1, 16, 128>}]} {
    %c0 = arith.constant 0 : index
    %c0_0 = arith.constant 0 : index
    %c0_1 = arith.constant 0 : index
    %0 = vector.load %arg2[%c0, %c0_0, %c0_1] : memref<1x16x128xf32, #tpu.memory_space<vmem>>, vector<1x16x128xf32>
    %1 = vector.shape_cast %0 : vector<1x16x128xf32> to vector<16x128xf32>
    %c0_2 = arith.constant 0 : index
    %c0_3 = arith.constant 0 : index
    %c0_4 = arith.constant 0 : index
    %2 = vector.load %arg3[%c0_2, %c0_3, %c0_4] : memref<1x16x1xf32, #tpu.memory_space<vmem>>, vector<1x16x1xf32>
    %3 = vector.shape_cast %2 : vector<1x16x1xf32> to vector<16x1xf32>
    %4 = vector.broadcast %3 : vector<16x1xf32> to vector<16x128xf32>
    %5 = arith.mulf %1, %4 : vector<16x128xf32>
    %c0_5 = arith.constant 0 : index
    %c0_6 = arith.constant 0 : index
    %c0_7 = arith.constant 0 : index
    %6 = vector.load %arg4[%c0_5, %c0_6, %c0_7] : memref<1x16x1xf32, #tpu.memory_space<vmem>>, vector<1x16x1xf32>
    %7 = vector.shape_cast %6 : vector<1x16x1xf32> to vector<16x1xf32>
    %8 = vector.broadcast %7 : vector<16x1xf32> to vector<16x128xf32>
    %9 = arith.addf %5, %8 : vector<16x128xf32>
    %c0_8 = arith.constant 0 : index
    %c0_9 = arith.constant 0 : index
    %c0_10 = arith.constant 0 : index
    %10 = vector.load %arg5[%c0_8, %c0_9, %c0_10] : memref<1x16x128xf32, #tpu.memory_space<vmem>>, vector<1x16x128xf32>
    %11 = vector.shape_cast %10 : vector<1x16x128xf32> to vector<16x128xf32>
    %12 = vector.shape_cast %9 : vector<16x128xf32> to vector<1x16x128xf32>
    tpu.vector_store %arg5[%c0_8, %c0_9, %c0_10], %12 {strides = array<i32>} : memref<1x16x128xf32, #tpu.memory_space<vmem>>, vector<1x16x128xf32>,
    return
  }
  func.func @transform_0(%arg0: i32, %arg1: i32) -> (i32, i32, i32) {
    %c0_i32 = arith.constant 0 : i32
    %c0_i32_0 = arith.constant 0 : i32
    return %arg0, %c0_i32, %arg1 : i32, i32, i32
  }
  func.func @transform_1(%arg0: i32, %arg1: i32) -> (i32, i32, i32) {
    %c0_i32 = arith.constant 0 : i32
    %c0_i32_0 = arith.constant 0 : i32
    %c0_i32_1 = arith.constant 0 : i32
    return %arg0, %c0_i32, %c0_i32_0 : i32, i32, i32
  }
  func.func @transform_2(%arg0: i32, %arg1: i32) -> (i32, i32, i32) {
    %c0_i32 = arith.constant 0 : i32
    %c0_i32_0 = arith.constant 0 : i32
    %c0_i32_1 = arith.constant 0 : i32
    return %arg0, %c0_i32, %c0_i32_0 : i32, i32, i32
  }
  func.func @transform_3(%arg0: i32, %arg1: i32) -> (i32, i32, i32) {
    %c0_i32 = arith.constant 0 : i32
    %c0_i32_0 = arith.constant 0 : i32
    return %arg0, %c0_i32, %arg1 : i32, i32, i32
  }
}

module attributes {stable_mosaic.version = 11 : i64} {
  func.func @_conv_stats_kernel(%arg0: i32, %arg1: i32, %arg2: memref<1x256x128xbf16, #tpu.memory_space<vmem>>, %arg3: memref<32x256xbf16, #tpu.memory_space<vmem>>, %arg4: memref<1x32x128xf32, #tpu.memory_space<vmem>>, %arg5: memref<1x32x1xf32, #tpu.memory_space<vmem>>, %arg6: memref<1x32x1xf32, #tpu.memory_space<vmem>>) attributes {dimension_semantics = [#tpu.dimension_semantics<parallel>, #tpu.dimension_semantics<arbitrary>], iteration_bounds = array<i64: 2, 1>, scalar_prefetch = 0 : i64, scratch_operands = 0 : i64, tpu.core_type = #tpu.core_type<tc>, window_params = [{transform_indices = @transform_0, window_bounds = array<i64: 1, 256, 128>}, {pipeline_mode = #tpu.pipeline_mode<synchronous>, transform_indices = @transform_1, window_bounds = array<i64: 32, 256>}, {transform_indices = @transform_2, window_bounds = array<i64: 1, 32, 128>}, {transform_indices = @transform_3, window_bounds = array<i64: 1, 32, 1>}, {transform_indices = @transform_4, window_bounds = array<i64: 1, 32, 1>}]} {
    %c0_i32 = arith.constant 0 : i32
    %0 = arith.cmpi eq, %arg1, %c0_i32 : i32
    %1 = arith.extui %0 : i1 to i32
    %c0_i32_0 = arith.constant 0 : i32
    %2 = arith.cmpi ne, %1, %c0_i32_0 : i32
    scf.if %2 {
      %cst_22 = arith.constant 0.000000e+00 : f32
      %27 = vector.broadcast %cst_22 : f32 to vector<1x32x1xf32>
      %c0_23 = arith.constant 0 : index
      %c0_24 = arith.constant 0 : index
      %c0_25 = arith.constant 0 : index
      %28 = vector.load %arg5[%c0_23, %c0_24, %c0_25] : memref<1x32x1xf32, #tpu.memory_space<vmem>>, vector<1x32x1xf32>
      tpu.vector_store %arg5[%c0_23, %c0_24, %c0_25], %27 {strides = array<i32>} : memref<1x32x1xf32, #tpu.memory_space<vmem>>, vector<1x32x1xf32>,
      %cst_26 = arith.constant 0.000000e+00 : f32
      %29 = vector.broadcast %cst_26 : f32 to vector<1x32x1xf32>
      %c0_27 = arith.constant 0 : index
      %c0_28 = arith.constant 0 : index
      %c0_29 = arith.constant 0 : index
      %30 = vector.load %arg6[%c0_27, %c0_28, %c0_29] : memref<1x32x1xf32, #tpu.memory_space<vmem>>, vector<1x32x1xf32>
      tpu.vector_store %arg6[%c0_27, %c0_28, %c0_29], %29 {strides = array<i32>} : memref<1x32x1xf32, #tpu.memory_space<vmem>>, vector<1x32x1xf32>,
    } else {
    }
    %c0 = arith.constant 0 : index
    %c0_1 = arith.constant 0 : index
    %3 = vector.load %arg3[%c0, %c0_1] : memref<32x256xbf16, #tpu.memory_space<vmem>>, vector<32x256xbf16>
    %c0_2 = arith.constant 0 : index
    %c0_3 = arith.constant 0 : index
    %c0_4 = arith.constant 0 : index
    %4 = vector.load %arg2[%c0_2, %c0_3, %c0_4] : memref<1x256x128xbf16, #tpu.memory_space<vmem>>, vector<1x256x128xbf16>
    %5 = vector.shape_cast %4 : vector<1x256x128xbf16> to vector<256x128xbf16>
    %cst = arith.constant dense<0.000000e+00> : vector<32x128xf32>
    %6 = tpu.matmul %3, %5, %cst {dimension_numbers = #tpu.dot_dimension_numbers<[1], [0], [0], [1], [0, 0, 1, 1], [], []>} : vector<32x256xbf16>, vector<256x128xbf16>, vector<32x128xf32> -> vector<32x128xf32>
    %c0_5 = arith.constant 0 : index
    %c0_6 = arith.constant 0 : index
    %c0_7 = arith.constant 0 : index
    %7 = vector.load %arg4[%c0_5, %c0_6, %c0_7] : memref<1x32x128xf32, #tpu.memory_space<vmem>>, vector<1x32x128xf32>
    %8 = vector.shape_cast %7 : vector<1x32x128xf32> to vector<32x128xf32>
    %9 = vector.shape_cast %6 : vector<32x128xf32> to vector<1x32x128xf32>
    tpu.vector_store %arg4[%c0_5, %c0_6, %c0_7], %9 {strides = array<i32>} : memref<1x32x128xf32, #tpu.memory_space<vmem>>, vector<1x32x128xf32>,
    %c0_8 = arith.constant 0 : index
    %c0_9 = arith.constant 0 : index
    %c0_10 = arith.constant 0 : index
    %10 = vector.load %arg5[%c0_8, %c0_9, %c0_10] : memref<1x32x1xf32, #tpu.memory_space<vmem>>, vector<1x32x1xf32>
    %11 = vector.shape_cast %10 : vector<1x32x1xf32> to vector<32x1xf32>
    %cst_11 = arith.constant dense<0.000000e+00> : vector<32xf32>
    %12 = vector.multi_reduction <add>, %6, %cst_11 [1] : vector<32x128xf32> to vector<32xf32>
    %13 = vector.shape_cast %12 : vector<32xf32> to vector<32x1xf32>
    %14 = arith.addf %11, %13 : vector<32x1xf32>
    %c0_12 = arith.constant 0 : index
    %c0_13 = arith.constant 0 : index
    %c0_14 = arith.constant 0 : index
    %15 = vector.load %arg5[%c0_12, %c0_13, %c0_14] : memref<1x32x1xf32, #tpu.memory_space<vmem>>, vector<1x32x1xf32>
    %16 = vector.shape_cast %15 : vector<1x32x1xf32> to vector<32x1xf32>
    %17 = vector.shape_cast %14 : vector<32x1xf32> to vector<1x32x1xf32>
    tpu.vector_store %arg5[%c0_12, %c0_13, %c0_14], %17 {strides = array<i32>} : memref<1x32x1xf32, #tpu.memory_space<vmem>>, vector<1x32x1xf32>,
    %c0_15 = arith.constant 0 : index
    %c0_16 = arith.constant 0 : index
    %c0_17 = arith.constant 0 : index
    %18 = vector.load %arg6[%c0_15, %c0_16, %c0_17] : memref<1x32x1xf32, #tpu.memory_space<vmem>>, vector<1x32x1xf32>
    %19 = vector.shape_cast %18 : vector<1x32x1xf32> to vector<32x1xf32>
    %20 = arith.mulf %6, %6 : vector<32x128xf32>
    %cst_18 = arith.constant dense<0.000000e+00> : vector<32xf32>
    %21 = vector.multi_reduction <add>, %20, %cst_18 [1] : vector<32x128xf32> to vector<32xf32>
    %22 = vector.shape_cast %21 : vector<32xf32> to vector<32x1xf32>
    %23 = arith.addf %19, %22 : vector<32x1xf32>
    %c0_19 = arith.constant 0 : index
    %c0_20 = arith.constant 0 : index
    %c0_21 = arith.constant 0 : index
    %24 = vector.load %arg6[%c0_19, %c0_20, %c0_21] : memref<1x32x1xf32, #tpu.memory_space<vmem>>, vector<1x32x1xf32>
    %25 = vector.shape_cast %24 : vector<1x32x1xf32> to vector<32x1xf32>
    %26 = vector.shape_cast %23 : vector<32x1xf32> to vector<1x32x1xf32>
    tpu.vector_store %arg6[%c0_19, %c0_20, %c0_21], %26 {strides = array<i32>} : memref<1x32x1xf32, #tpu.memory_space<vmem>>, vector<1x32x1xf32>,
    return
  }
  func.func @transform_0(%arg0: i32, %arg1: i32) -> (i32, i32, i32) {
    %c0_i32 = arith.constant 0 : i32
    %c0_i32_0 = arith.constant 0 : i32
    return %arg0, %c0_i32, %arg1 : i32, i32, i32
  }
  func.func @transform_1(%arg0: i32, %arg1: i32) -> (i32, i32) {
    %c0_i32 = arith.constant 0 : i32
    %c0_i32_0 = arith.constant 0 : i32
    %c0_i32_1 = arith.constant 0 : i32
    return %c0_i32, %c0_i32_0 : i32, i32
  }
  func.func @transform_2(%arg0: i32, %arg1: i32) -> (i32, i32, i32) {
    %c0_i32 = arith.constant 0 : i32
    %c0_i32_0 = arith.constant 0 : i32
    return %arg0, %c0_i32, %arg1 : i32, i32, i32
  }
  func.func @transform_3(%arg0: i32, %arg1: i32) -> (i32, i32, i32) {
    %c0_i32 = arith.constant 0 : i32
    %c0_i32_0 = arith.constant 0 : i32
    %c0_i32_1 = arith.constant 0 : i32
    return %arg0, %c0_i32, %c0_i32_0 : i32, i32, i32
  }
  func.func @transform_4(%arg0: i32, %arg1: i32) -> (i32, i32, i32) {
    %c0_i32 = arith.constant 0 : i32
    %c0_i32_0 = arith.constant 0 : i32
    %c0_i32_1 = arith.constant 0 : i32
    return %arg0, %c0_i32, %c0_i32_0 : i32, i32, i32
  }
}

module attributes {stable_mosaic.version = 11 : i64} {
  func.func @_scale_shift_kernel(%arg0: i32, %arg1: i32, %arg2: memref<1x32x128xf32, #tpu.memory_space<vmem>>, %arg3: memref<1x32x1xf32, #tpu.memory_space<vmem>>, %arg4: memref<1x32x1xf32, #tpu.memory_space<vmem>>, %arg5: memref<1x32x128xf32, #tpu.memory_space<vmem>>) attributes {dimension_semantics = [#tpu.dimension_semantics<parallel>, #tpu.dimension_semantics<parallel>], iteration_bounds = array<i64: 2, 1>, scalar_prefetch = 0 : i64, scratch_operands = 0 : i64, tpu.core_type = #tpu.core_type<tc>, window_params = [{transform_indices = @transform_0, window_bounds = array<i64: 1, 32, 128>}, {transform_indices = @transform_1, window_bounds = array<i64: 1, 32, 1>}, {transform_indices = @transform_2, window_bounds = array<i64: 1, 32, 1>}, {transform_indices = @transform_3, window_bounds = array<i64: 1, 32, 128>}]} {
    %c0 = arith.constant 0 : index
    %c0_0 = arith.constant 0 : index
    %c0_1 = arith.constant 0 : index
    %0 = vector.load %arg2[%c0, %c0_0, %c0_1] : memref<1x32x128xf32, #tpu.memory_space<vmem>>, vector<1x32x128xf32>
    %1 = vector.shape_cast %0 : vector<1x32x128xf32> to vector<32x128xf32>
    %c0_2 = arith.constant 0 : index
    %c0_3 = arith.constant 0 : index
    %c0_4 = arith.constant 0 : index
    %2 = vector.load %arg3[%c0_2, %c0_3, %c0_4] : memref<1x32x1xf32, #tpu.memory_space<vmem>>, vector<1x32x1xf32>
    %3 = vector.shape_cast %2 : vector<1x32x1xf32> to vector<32x1xf32>
    %4 = vector.broadcast %3 : vector<32x1xf32> to vector<32x128xf32>
    %5 = arith.mulf %1, %4 : vector<32x128xf32>
    %c0_5 = arith.constant 0 : index
    %c0_6 = arith.constant 0 : index
    %c0_7 = arith.constant 0 : index
    %6 = vector.load %arg4[%c0_5, %c0_6, %c0_7] : memref<1x32x1xf32, #tpu.memory_space<vmem>>, vector<1x32x1xf32>
    %7 = vector.shape_cast %6 : vector<1x32x1xf32> to vector<32x1xf32>
    %8 = vector.broadcast %7 : vector<32x1xf32> to vector<32x128xf32>
    %9 = arith.addf %5, %8 : vector<32x128xf32>
    %c0_8 = arith.constant 0 : index
    %c0_9 = arith.constant 0 : index
    %c0_10 = arith.constant 0 : index
    %10 = vector.load %arg5[%c0_8, %c0_9, %c0_10] : memref<1x32x128xf32, #tpu.memory_space<vmem>>, vector<1x32x128xf32>
    %11 = vector.shape_cast %10 : vector<1x32x128xf32> to vector<32x128xf32>
    %12 = vector.shape_cast %9 : vector<32x128xf32> to vector<1x32x128xf32>
    tpu.vector_store %arg5[%c0_8, %c0_9, %c0_10], %12 {strides = array<i32>} : memref<1x32x128xf32, #tpu.memory_space<vmem>>, vector<1x32x128xf32>,
    return
  }
  func.func @transform_0(%arg0: i32, %arg1: i32) -> (i32, i32, i32) {
    %c0_i32 = arith.constant 0 : i32
    %c0_i32_0 = arith.constant 0 : i32
    return %arg0, %c0_i32, %arg1 : i32, i32, i32
  }
  func.func @transform_1(%arg0: i32, %arg1: i32) -> (i32, i32, i32) {
    %c0_i32 = arith.constant 0 : i32
    %c0_i32_0 = arith.constant 0 : i32
    %c0_i32_1 = arith.constant 0 : i32
    return %arg0, %c0_i32, %c0_i32_0 : i32, i32, i32
  }
  func.func @transform_2(%arg0: i32, %arg1: i32) -> (i32, i32, i32) {
    %c0_i32 = arith.constant 0 : i32
    %c0_i32_0 = arith.constant 0 : i32
    %c0_i32_1 = arith.constant 0 : i32
    return %arg0, %c0_i32, %c0_i32_0 : i32, i32, i32
  }
  func.func @transform_3(%arg0: i32, %arg1: i32) -> (i32, i32, i32) {
    %c0_i32 = arith.constant 0 : i32
    %c0_i32_0 = arith.constant 0 : i32
    return %arg0, %c0_i32, %arg1 : i32, i32, i32
  }
}

module attributes {stable_mosaic.version = 11 : i64} {
  func.func @_conv_stats_kernel(%arg0: i32, %arg1: i32, %arg2: memref<1x512x128xbf16, #tpu.memory_space<vmem>>, %arg3: memref<64x512xbf16, #tpu.memory_space<vmem>>, %arg4: memref<1x64x128xf32, #tpu.memory_space<vmem>>, %arg5: memref<1x64x1xf32, #tpu.memory_space<vmem>>, %arg6: memref<1x64x1xf32, #tpu.memory_space<vmem>>) attributes {dimension_semantics = [#tpu.dimension_semantics<parallel>, #tpu.dimension_semantics<arbitrary>], iteration_bounds = array<i64: 2, 1>, scalar_prefetch = 0 : i64, scratch_operands = 0 : i64, tpu.core_type = #tpu.core_type<tc>, window_params = [{transform_indices = @transform_0, window_bounds = array<i64: 1, 512, 128>}, {pipeline_mode = #tpu.pipeline_mode<synchronous>, transform_indices = @transform_1, window_bounds = array<i64: 64, 512>}, {transform_indices = @transform_2, window_bounds = array<i64: 1, 64, 128>}, {transform_indices = @transform_3, window_bounds = array<i64: 1, 64, 1>}, {transform_indices = @transform_4, window_bounds = array<i64: 1, 64, 1>}]} {
    %c0_i32 = arith.constant 0 : i32
    %0 = arith.cmpi eq, %arg1, %c0_i32 : i32
    %1 = arith.extui %0 : i1 to i32
    %c0_i32_0 = arith.constant 0 : i32
    %2 = arith.cmpi ne, %1, %c0_i32_0 : i32
    scf.if %2 {
      %cst_22 = arith.constant 0.000000e+00 : f32
      %27 = vector.broadcast %cst_22 : f32 to vector<1x64x1xf32>
      %c0_23 = arith.constant 0 : index
      %c0_24 = arith.constant 0 : index
      %c0_25 = arith.constant 0 : index
      %28 = vector.load %arg5[%c0_23, %c0_24, %c0_25] : memref<1x64x1xf32, #tpu.memory_space<vmem>>, vector<1x64x1xf32>
      tpu.vector_store %arg5[%c0_23, %c0_24, %c0_25], %27 {strides = array<i32>} : memref<1x64x1xf32, #tpu.memory_space<vmem>>, vector<1x64x1xf32>,
      %cst_26 = arith.constant 0.000000e+00 : f32
      %29 = vector.broadcast %cst_26 : f32 to vector<1x64x1xf32>
      %c0_27 = arith.constant 0 : index
      %c0_28 = arith.constant 0 : index
      %c0_29 = arith.constant 0 : index
      %30 = vector.load %arg6[%c0_27, %c0_28, %c0_29] : memref<1x64x1xf32, #tpu.memory_space<vmem>>, vector<1x64x1xf32>
      tpu.vector_store %arg6[%c0_27, %c0_28, %c0_29], %29 {strides = array<i32>} : memref<1x64x1xf32, #tpu.memory_space<vmem>>, vector<1x64x1xf32>,
    } else {
    }
    %c0 = arith.constant 0 : index
    %c0_1 = arith.constant 0 : index
    %3 = vector.load %arg3[%c0, %c0_1] : memref<64x512xbf16, #tpu.memory_space<vmem>>, vector<64x512xbf16>
    %c0_2 = arith.constant 0 : index
    %c0_3 = arith.constant 0 : index
    %c0_4 = arith.constant 0 : index
    %4 = vector.load %arg2[%c0_2, %c0_3, %c0_4] : memref<1x512x128xbf16, #tpu.memory_space<vmem>>, vector<1x512x128xbf16>
    %5 = vector.shape_cast %4 : vector<1x512x128xbf16> to vector<512x128xbf16>
    %cst = arith.constant dense<0.000000e+00> : vector<64x128xf32>
    %6 = tpu.matmul %3, %5, %cst {dimension_numbers = #tpu.dot_dimension_numbers<[1], [0], [0], [1], [0, 0, 1, 1], [], []>} : vector<64x512xbf16>, vector<512x128xbf16>, vector<64x128xf32> -> vector<64x128xf32>
    %c0_5 = arith.constant 0 : index
    %c0_6 = arith.constant 0 : index
    %c0_7 = arith.constant 0 : index
    %7 = vector.load %arg4[%c0_5, %c0_6, %c0_7] : memref<1x64x128xf32, #tpu.memory_space<vmem>>, vector<1x64x128xf32>
    %8 = vector.shape_cast %7 : vector<1x64x128xf32> to vector<64x128xf32>
    %9 = vector.shape_cast %6 : vector<64x128xf32> to vector<1x64x128xf32>
    tpu.vector_store %arg4[%c0_5, %c0_6, %c0_7], %9 {strides = array<i32>} : memref<1x64x128xf32, #tpu.memory_space<vmem>>, vector<1x64x128xf32>,
    %c0_8 = arith.constant 0 : index
    %c0_9 = arith.constant 0 : index
    %c0_10 = arith.constant 0 : index
    %10 = vector.load %arg5[%c0_8, %c0_9, %c0_10] : memref<1x64x1xf32, #tpu.memory_space<vmem>>, vector<1x64x1xf32>
    %11 = vector.shape_cast %10 : vector<1x64x1xf32> to vector<64x1xf32>
    %cst_11 = arith.constant dense<0.000000e+00> : vector<64xf32>
    %12 = vector.multi_reduction <add>, %6, %cst_11 [1] : vector<64x128xf32> to vector<64xf32>
    %13 = vector.shape_cast %12 : vector<64xf32> to vector<64x1xf32>
    %14 = arith.addf %11, %13 : vector<64x1xf32>
    %c0_12 = arith.constant 0 : index
    %c0_13 = arith.constant 0 : index
    %c0_14 = arith.constant 0 : index
    %15 = vector.load %arg5[%c0_12, %c0_13, %c0_14] : memref<1x64x1xf32, #tpu.memory_space<vmem>>, vector<1x64x1xf32>
    %16 = vector.shape_cast %15 : vector<1x64x1xf32> to vector<64x1xf32>
    %17 = vector.shape_cast %14 : vector<64x1xf32> to vector<1x64x1xf32>
    tpu.vector_store %arg5[%c0_12, %c0_13, %c0_14], %17 {strides = array<i32>} : memref<1x64x1xf32, #tpu.memory_space<vmem>>, vector<1x64x1xf32>,
    %c0_15 = arith.constant 0 : index
    %c0_16 = arith.constant 0 : index
    %c0_17 = arith.constant 0 : index
    %18 = vector.load %arg6[%c0_15, %c0_16, %c0_17] : memref<1x64x1xf32, #tpu.memory_space<vmem>>, vector<1x64x1xf32>
    %19 = vector.shape_cast %18 : vector<1x64x1xf32> to vector<64x1xf32>
    %20 = arith.mulf %6, %6 : vector<64x128xf32>
    %cst_18 = arith.constant dense<0.000000e+00> : vector<64xf32>
    %21 = vector.multi_reduction <add>, %20, %cst_18 [1] : vector<64x128xf32> to vector<64xf32>
    %22 = vector.shape_cast %21 : vector<64xf32> to vector<64x1xf32>
    %23 = arith.addf %19, %22 : vector<64x1xf32>
    %c0_19 = arith.constant 0 : index
    %c0_20 = arith.constant 0 : index
    %c0_21 = arith.constant 0 : index
    %24 = vector.load %arg6[%c0_19, %c0_20, %c0_21] : memref<1x64x1xf32, #tpu.memory_space<vmem>>, vector<1x64x1xf32>
    %25 = vector.shape_cast %24 : vector<1x64x1xf32> to vector<64x1xf32>
    %26 = vector.shape_cast %23 : vector<64x1xf32> to vector<1x64x1xf32>
    tpu.vector_store %arg6[%c0_19, %c0_20, %c0_21], %26 {strides = array<i32>} : memref<1x64x1xf32, #tpu.memory_space<vmem>>, vector<1x64x1xf32>,
    return
  }
  func.func @transform_0(%arg0: i32, %arg1: i32) -> (i32, i32, i32) {
    %c0_i32 = arith.constant 0 : i32
    %c0_i32_0 = arith.constant 0 : i32
    return %arg0, %c0_i32, %arg1 : i32, i32, i32
  }
  func.func @transform_1(%arg0: i32, %arg1: i32) -> (i32, i32) {
    %c0_i32 = arith.constant 0 : i32
    %c0_i32_0 = arith.constant 0 : i32
    %c0_i32_1 = arith.constant 0 : i32
    return %c0_i32, %c0_i32_0 : i32, i32
  }
  func.func @transform_2(%arg0: i32, %arg1: i32) -> (i32, i32, i32) {
    %c0_i32 = arith.constant 0 : i32
    %c0_i32_0 = arith.constant 0 : i32
    return %arg0, %c0_i32, %arg1 : i32, i32, i32
  }
  func.func @transform_3(%arg0: i32, %arg1: i32) -> (i32, i32, i32) {
    %c0_i32 = arith.constant 0 : i32
    %c0_i32_0 = arith.constant 0 : i32
    %c0_i32_1 = arith.constant 0 : i32
    return %arg0, %c0_i32, %c0_i32_0 : i32, i32, i32
  }
  func.func @transform_4(%arg0: i32, %arg1: i32) -> (i32, i32, i32) {
    %c0_i32 = arith.constant 0 : i32
    %c0_i32_0 = arith.constant 0 : i32
    %c0_i32_1 = arith.constant 0 : i32
    return %arg0, %c0_i32, %c0_i32_0 : i32, i32, i32
  }
}

module attributes {stable_mosaic.version = 11 : i64} {
  func.func @_scale_shift_kernel(%arg0: i32, %arg1: i32, %arg2: memref<1x64x128xf32, #tpu.memory_space<vmem>>, %arg3: memref<1x64x1xf32, #tpu.memory_space<vmem>>, %arg4: memref<1x64x1xf32, #tpu.memory_space<vmem>>, %arg5: memref<1x64x128xf32, #tpu.memory_space<vmem>>) attributes {dimension_semantics = [#tpu.dimension_semantics<parallel>, #tpu.dimension_semantics<parallel>], iteration_bounds = array<i64: 2, 1>, scalar_prefetch = 0 : i64, scratch_operands = 0 : i64, tpu.core_type = #tpu.core_type<tc>, window_params = [{transform_indices = @transform_0, window_bounds = array<i64: 1, 64, 128>}, {transform_indices = @transform_1, window_bounds = array<i64: 1, 64, 1>}, {transform_indices = @transform_2, window_bounds = array<i64: 1, 64, 1>}, {transform_indices = @transform_3, window_bounds = array<i64: 1, 64, 128>}]} {
    %c0 = arith.constant 0 : index
    %c0_0 = arith.constant 0 : index
    %c0_1 = arith.constant 0 : index
    %0 = vector.load %arg2[%c0, %c0_0, %c0_1] : memref<1x64x128xf32, #tpu.memory_space<vmem>>, vector<1x64x128xf32>
    %1 = vector.shape_cast %0 : vector<1x64x128xf32> to vector<64x128xf32>
    %c0_2 = arith.constant 0 : index
    %c0_3 = arith.constant 0 : index
    %c0_4 = arith.constant 0 : index
    %2 = vector.load %arg3[%c0_2, %c0_3, %c0_4] : memref<1x64x1xf32, #tpu.memory_space<vmem>>, vector<1x64x1xf32>
    %3 = vector.shape_cast %2 : vector<1x64x1xf32> to vector<64x1xf32>
    %4 = vector.broadcast %3 : vector<64x1xf32> to vector<64x128xf32>
    %5 = arith.mulf %1, %4 : vector<64x128xf32>
    %c0_5 = arith.constant 0 : index
    %c0_6 = arith.constant 0 : index
    %c0_7 = arith.constant 0 : index
    %6 = vector.load %arg4[%c0_5, %c0_6, %c0_7] : memref<1x64x1xf32, #tpu.memory_space<vmem>>, vector<1x64x1xf32>
    %7 = vector.shape_cast %6 : vector<1x64x1xf32> to vector<64x1xf32>
    %8 = vector.broadcast %7 : vector<64x1xf32> to vector<64x128xf32>
    %9 = arith.addf %5, %8 : vector<64x128xf32>
    %c0_8 = arith.constant 0 : index
    %c0_9 = arith.constant 0 : index
    %c0_10 = arith.constant 0 : index
    %10 = vector.load %arg5[%c0_8, %c0_9, %c0_10] : memref<1x64x128xf32, #tpu.memory_space<vmem>>, vector<1x64x128xf32>
    %11 = vector.shape_cast %10 : vector<1x64x128xf32> to vector<64x128xf32>
    %12 = vector.shape_cast %9 : vector<64x128xf32> to vector<1x64x128xf32>
    tpu.vector_store %arg5[%c0_8, %c0_9, %c0_10], %12 {strides = array<i32>} : memref<1x64x128xf32, #tpu.memory_space<vmem>>, vector<1x64x128xf32>,
    return
  }
  func.func @transform_0(%arg0: i32, %arg1: i32) -> (i32, i32, i32) {
    %c0_i32 = arith.constant 0 : i32
    %c0_i32_0 = arith.constant 0 : i32
    return %arg0, %c0_i32, %arg1 : i32, i32, i32
  }
  func.func @transform_1(%arg0: i32, %arg1: i32) -> (i32, i32, i32) {
    %c0_i32 = arith.constant 0 : i32
    %c0_i32_0 = arith.constant 0 : i32
    %c0_i32_1 = arith.constant 0 : i32
    return %arg0, %c0_i32, %c0_i32_0 : i32, i32, i32
  }
  func.func @transform_2(%arg0: i32, %arg1: i32) -> (i32, i32, i32) {
    %c0_i32 = arith.constant 0 : i32
    %c0_i32_0 = arith.constant 0 : i32
    %c0_i32_1 = arith.constant 0 : i32
    return %arg0, %c0_i32, %c0_i32_0 : i32, i32, i32
  }
  func.func @transform_3(%arg0: i32, %arg1: i32) -> (i32, i32, i32) {
    %c0_i32 = arith.constant 0 : i32
    %c0_i32_0 = arith.constant 0 : i32
    return %arg0, %c0_i32, %arg1 : i32, i32, i32
  }
}

module attributes {stable_mosaic.version = 11 : i64} {
  func.func @_conv_bias_kernel(%arg0: i32, %arg1: i32, %arg2: memref<1x1024x128xbf16, #tpu.memory_space<vmem>>, %arg3: memref<1x1024xbf16, #tpu.memory_space<vmem>>, %arg4: memref<1x1xf32, #tpu.memory_space<vmem>>, %arg5: memref<1x1x128xf32, #tpu.memory_space<vmem>>) attributes {dimension_semantics = [#tpu.dimension_semantics<parallel>, #tpu.dimension_semantics<parallel>], iteration_bounds = array<i64: 2, 1>, scalar_prefetch = 0 : i64, scratch_operands = 0 : i64, tpu.core_type = #tpu.core_type<tc>, window_params = [{transform_indices = @transform_0, window_bounds = array<i64: 1, 1024, 128>}, {pipeline_mode = #tpu.pipeline_mode<synchronous>, transform_indices = @transform_1, window_bounds = array<i64: 1, 1024>}, {pipeline_mode = #tpu.pipeline_mode<synchronous>, transform_indices = @transform_2, window_bounds = array<i64: 1, 1>}, {transform_indices = @transform_3, window_bounds = array<i64: 1, 1, 128>}]} {
    %c0 = arith.constant 0 : index
    %c0_0 = arith.constant 0 : index
    %0 = vector.load %arg3[%c0, %c0_0] : memref<1x1024xbf16, #tpu.memory_space<vmem>>, vector<1x1024xbf16>
    %c0_1 = arith.constant 0 : index
    %c0_2 = arith.constant 0 : index
    %c0_3 = arith.constant 0 : index
    %1 = vector.load %arg2[%c0_1, %c0_2, %c0_3] : memref<1x1024x128xbf16, #tpu.memory_space<vmem>>, vector<1x1024x128xbf16>
    %2 = vector.shape_cast %1 : vector<1x1024x128xbf16> to vector<1024x128xbf16>
    %cst = arith.constant dense<0.000000e+00> : vector<1x128xf32>
    %3 = tpu.matmul %0, %2, %cst {dimension_numbers = #tpu.dot_dimension_numbers<[1], [0], [0], [1], [0, 0, 1, 1], [], []>} : vector<1x1024xbf16>, vector<1024x128xbf16>, vector<1x128xf32> -> vector<1x128xf32>
    %c0_4 = arith.constant 0 : index
    %c0_5 = arith.constant 0 : index
    %4 = vector.load %arg4[%c0_4, %c0_5] : memref<1x1xf32, #tpu.memory_space<vmem>>, vector<1x1xf32>
    %5 = vector.broadcast %4 : vector<1x1xf32> to vector<1x128xf32>
    %6 = arith.addf %3, %5 : vector<1x128xf32>
    %7 = arith.negf %6 : vector<1x128xf32>
    %8 = math.exp %7 : vector<1x128xf32>
    %cst_6 = arith.constant 1.000000e+00 : f32
    %9 = vector.broadcast %cst_6 : f32 to vector<1x128xf32>
    %10 = arith.addf %9, %8 : vector<1x128xf32>
    %11 = arith.divf %9, %10 : vector<1x128xf32>
    %c0_7 = arith.constant 0 : index
    %c0_8 = arith.constant 0 : index
    %c0_9 = arith.constant 0 : index
    %12 = vector.load %arg5[%c0_7, %c0_8, %c0_9] : memref<1x1x128xf32, #tpu.memory_space<vmem>>, vector<1x1x128xf32>
    %13 = vector.shape_cast %12 : vector<1x1x128xf32> to vector<1x128xf32>
    %14 = vector.shape_cast %11 : vector<1x128xf32> to vector<1x1x128xf32>
    tpu.vector_store %arg5[%c0_7, %c0_8, %c0_9], %14 {strides = array<i32>} : memref<1x1x128xf32, #tpu.memory_space<vmem>>, vector<1x1x128xf32>,
    return
  }
  func.func @transform_0(%arg0: i32, %arg1: i32) -> (i32, i32, i32) {
    %c0_i32 = arith.constant 0 : i32
    %c0_i32_0 = arith.constant 0 : i32
    return %arg0, %c0_i32, %arg1 : i32, i32, i32
  }
  func.func @transform_1(%arg0: i32, %arg1: i32) -> (i32, i32) {
    %c0_i32 = arith.constant 0 : i32
    %c0_i32_0 = arith.constant 0 : i32
    %c0_i32_1 = arith.constant 0 : i32
    return %c0_i32, %c0_i32_0 : i32, i32
  }
  func.func @transform_2(%arg0: i32, %arg1: i32) -> (i32, i32) {
    %c0_i32 = arith.constant 0 : i32
    %c0_i32_0 = arith.constant 0 : i32
    %c0_i32_1 = arith.constant 0 : i32
    return %c0_i32, %c0_i32_0 : i32, i32
  }
  func.func @transform_3(%arg0: i32, %arg1: i32) -> (i32, i32, i32) {
    %c0_i32 = arith.constant 0 : i32
    %c0_i32_0 = arith.constant 0 : i32
    return %arg0, %c0_i32, %arg1 : i32, i32, i32
  }
}

</mosaic_0001>

<llo_original>
// kernel: discriminator_forward.16
$region0: #{discriminator_forward.16}
  #allocation0 [shape = 'u32[]', space=smem, size = 0x4, offset = 0x4, fixed_abs, tag = 'smem constant byte address 0x4 - core index']
  #allocation1 [shape = 'u32[144,128]{1,0:T(1,128)}', space=vmem, size = 0x12000, scoped, tag = 'internal scratch']
  %s0 = inlined_call_operand.vmem [shape: bf16[2,64,1024], index: 0, kind: input, shape index: {}]
  %s1 = inlined_call_operand.vmem [shape: bf16[8,64], index: 1, kind: input, shape index: {}]
  %s2 = inlined_call_operand.vmem [shape: f32[8,1], index: 2, kind: input, shape index: {}]
  %s3 = inlined_call_operand.vmem [shape: f32[2,8,1024], index: 3, kind: output, shape index: {}]
  %s4 = sld [smem:[#allocation0]]
  $region86: #{discriminator_forward.16} parent=0
    _
  %s6 = ssub.s32 1, %s4
  %s7 = scalar_select 0, %s6, %s4
  $region1: #{discriminator_forward.16} parent=0
    #allocation2 [shape = 'u8[32768]{0}', space=vmem, size = 0x8000, scoped, tag = 'input window, operand 0']
    loop: start=0, step=1, limit=18
    $region2: #{discriminator_forward.16} parent=1 // loop_pre_header
      _
    $region3: #{discriminator_forward.16} parent=1 // loop_header
      %s9 = sphi 0, %s13
      %p10 = scmp.ge.s32.totalorder %s9, 18
      %s16 = sphi 0, %s28
      %s17 = sphi 0, %s24
      %s18 = sphi 0, %s16
      %s19 = sphi 0, %s17
      %s20 = sphi 0, %s18
      %s21 = sphi 0, %s19
      %s33 = sphi 0, %s35
      %s36 = sphi 0, %s33
      %s37 = sphi 0, %s36
      %s53 = sphi 0, %s37
      %s57 = sphi 0, %s57
      %s59 = sphi 0, %s57
      %s60 = sphi 0, %s59
      %s74 = sphi 0, %s60
      %s78 = sphi 0, %s78
      %s80 = sphi 0, %s78
      %s81 = sphi 0, %s80
      %s95 = sphi 0, %s81
      %s103 = sphi 0, %s105
      %s106 = sphi 0, %s103
      %s107 = sphi 0, %s106
      %s123 = sphi 0, %s107
    $region4: #{discriminator_forward.16} parent=1 // loop_header_branch
      %12 = sbr.rel (%p10) target = $region8
    $region5: #{discriminator_forward.16} parent=1 // loop_body
      %s14 = ssub.s32 %s9, 1
      %s15 = ssub.s32 %s9, 2
      %s22 = sadd.s32 1, %s17
      %p23 = scmp.ge.s32.totalorder %s22, 8
      %s24 = scalar_select %p23, 0, %s22
      %s25 = sadd.s32 1, %s16
      %s26 = scalar_select %p23, %s25, %s16
      %p27 = scmp.ge.s32.totalorder %s26, 2
      %s28 = scalar_select %p27, 0, %s26
      %s29 = ssub.s32 %s16, %s28
      %s30 = ssub.s32 %s17, %s24
      %s31 = sor.u32 %s29, %s30
      %p32 = scmp.eq.s32.totalorder %s31, 0
      %s34 = sadd.s32 %s33, 1
      %s35 = scalar_select %p32, %s33, %s34
      %p38 = pneg %p32
      %p39 = scmp.eq.s32.totalorder %s9, 15
      %p40 = por %p38, %p39
      %p41 = scmp.ne.s32.totalorder %s33, %s36
      %p42 = scmp.eq.s32.totalorder %s9, 0
      %p43 = por %p41, %p42
      %p44 = scmp.ne.s32.totalorder %s33, %s36
      %p45 = scmp.eq.s32.totalorder %s14, 15
      %p46 = por %p44, %p45
      %p47 = scmp.ne.s32.totalorder %s36, %s37
      %p48 = scmp.eq.s32.totalorder %s14, 0
      %p49 = por %p47, %p48
      %p50 = scmp.ne.s32.totalorder %s36, %s37
      %p51 = scmp.eq.s32.totalorder %s15, 15
      %p52 = por %p50, %p51
      %p54 = scmp.ne.s32.totalorder %s37, %s53
      %p55 = scmp.eq.s32.totalorder %s15, 0
      %p56 = por %p54, %p55
      %s58 = sadd.s32 %s57, 1
      %p61 = scmp.eq.s32.totalorder %s9, 15
      %p62 = scmp.ne.s32.totalorder %s57, %s59
      %p63 = scmp.eq.s32.totalorder %s9, 0
      %p64 = por %p62, %p63
      %p65 = scmp.ne.s32.totalorder %s57, %s59
      %p66 = scmp.eq.s32.totalorder %s14, 15
      %p67 = por %p65, %p66
      %p68 = scmp.ne.s32.totalorder %s59, %s60
      %p69 = scmp.eq.s32.totalorder %s14, 0
      %p70 = por %p68, %p69
      %p71 = scmp.ne.s32.totalorder %s59, %s60
      %p72 = scmp.eq.s32.totalorder %s15, 15
      %p73 = por %p71, %p72
      %p75 = scmp.ne.s32.totalorder %s60, %s74
      %p76 = scmp.eq.s32.totalorder %s15, 0
      %p77 = por %p75, %p76
      %s79 = sadd.s32 %s78, 1
      %p82 = scmp.eq.s32.totalorder %s9, 15
      %p83 = scmp.ne.s32.totalorder %s78, %s80
      %p84 = scmp.eq.s32.totalorder %s9, 0
      %p85 = por %p83, %p84
      %p86 = scmp.ne.s32.totalorder %s78, %s80
      %p87 = scmp.eq.s32.totalorder %s14, 15
      %p88 = por %p86, %p87
      %p89 = scmp.ne.s32.totalorder %s80, %s81
      %p90 = scmp.eq.s32.totalorder %s14, 0
      %p91 = por %p89, %p90
      %p92 = scmp.ne.s32.totalorder %s80, %s81
      %p93 = scmp.eq.s32.totalorder %s15, 15
      %p94 = por %p92, %p93
      %p96 = scmp.ne.s32.totalorder %s81, %s95
      %p97 = scmp.eq.s32.totalorder %s15, 0
      %p98 = por %p96, %p97
      %s99 = ssub.s32 %s16, %s28
      %s100 = ssub.s32 %s17, %s24
      %s101 = sor.u32 %s99, %s100
      %p102 = scmp.eq.s32.totalorder %s101, 0
      %s104 = sadd.s32 %s103, 1
      %s105 = scalar_select %p102, %s103, %s104
      %p108 = pneg %p102
      %p109 = scmp.eq.s32.totalorder %s9, 15
      %p110 = por %p108, %p109
      %p111 = scmp.ne.s32.totalorder %s103, %s106
      %p112 = scmp.eq.s32.totalorder %s9, 0
      %p113 = por %p111, %p112
      %p114 = scmp.ne.s32.totalorder %s103, %s106
      %p115 = scmp.eq.s32.totalorder %s14, 15
      %p116 = por %p114, %p115
      %p117 = scmp.ne.s32.totalorder %s106, %s107
      %p118 = scmp.eq.s32.totalorder %s14, 0
      %p119 = por %p117, %p118
      %p120 = scmp.ne.s32.totalorder %s106, %s107
      %p121 = scmp.eq.s32.totalorder %s15, 15
      %p122 = por %p120, %p121
      %p124 = scmp.ne.s32.totalorder %s107, %s123
      %p125 = scmp.eq.s32.totalorder %s15, 0
      %p126 = por %p124, %p125
      %p127 = scmp.le.s32.totalorder 1, %s9
      %p128 = scmp.lt.s32.totalorder %s9, 17
      %p129 = pnand %p127, %p128
      %p130 = pneg %p129
      // Predicated region
      $region9: #{discriminator_forward.16} parent=5 // pred_check
        _
      $region10: #{discriminator_forward.16} parent=5 // pred_check_branch
        %132 = sbr.rel (%p129) target = $region12
      $region11: #{discriminator_forward.16} parent=5 // pred_region
        %s133 = ssub.s32 %s9, 1
        // Predicated region
        $region13: #{discriminator_forward.16} parent=11 // pred_check
          %p134 = pneg %p70
        $region14: #{discriminator_forward.16} parent=11 // pred_check_branch
          %136 = sbr.rel (%p134) target = $region16
        $region15: #{discriminator_forward.16} parent=11 // pred_region
          _
        $region16: #{discriminator_forward.16} parent=11 // pred_fallthru
          _
        // Predicated region
        $region17: #{discriminator_forward.16} parent=11 // pred_check
          %p137 = pneg %p91
        $region18: #{discriminator_forward.16} parent=11 // pred_check_branch
          %139 = sbr.rel (%p137) target = $region20
        $region19: #{discriminator_forward.16} parent=11 // pred_region
          _
        $region20: #{discriminator_forward.16} parent=11 // pred_fallthru
          _
      $region12: #{discriminator_forward.16} parent=5 // pred_fallthru
        _
      %p140 = scmp.lt.s32.totalorder %s9, 16
      // Predicated region
      $region21: #{discriminator_forward.16} parent=5 // pred_check
        %p141 = pneg %p140
      $region22: #{discriminator_forward.16} parent=5 // pred_check_branch
        %143 = sbr.rel (%p141) target = $region24
      $region23: #{discriminator_forward.16} parent=5 // pred_region
        // Predicated region
        $region25: #{discriminator_forward.16} parent=23 // pred_check
          %p144 = pneg %p43
        $region26: #{discriminator_forward.16} parent=23 // pred_check_branch
          %146 = sbr.rel (%p144) target = $region28
        $region27: #{discriminator_forward.16} parent=23 // pred_region
          %s147 = sand.u32 %s33, 1
          %s148 = sand.u32 %s33, 1
          %s149 = smul.addr %s148, 32
          %s150 = scalar_lea.vmem [#allocation2], %s149
          %s151 = smul.addr %s16, 64
          %s152 = sadd.s32 %s17, %s151
          %s153 = smul.addr %s152, 4
          %s154 = scalar_lea.vmem %s0, %s153
          // Predicated region
          $region29: #{discriminator_forward.16} parent=27 // pred_check
            _
          $region30: #{discriminator_forward.16} parent=27 // pred_check_branch
            %156 = sbr.rel (0) target = $region32
          $region31: #{discriminator_forward.16} parent=27 // pred_region
            // Predicated region
            $region33: #{discriminator_forward.16} parent=31 // pred_check
              _
            $region34: #{discriminator_forward.16} parent=31 // pred_check_branch
              %158 = sbr.rel target = $region36
            $region35: #{discriminator_forward.16} parent=31 // pred_region
              // Predicated region
              $region48: #{discriminator_forward.16} parent=35 // pred_check
                _
              $region49: #{discriminator_forward.16} parent=35 // pred_check_branch
                %188 = sbr.rel (0) target = $region51
              $region50: #{discriminator_forward.16} parent=35 // pred_region
                loop: start=0, step=1, limit=1
                $region52: #{discriminator_forward.16} parent=50 // loop_pre_header
                  _
                $region53: #{discriminator_forward.16} parent=50 // loop_header
                  %s190 = sphi 0, %s194
                  %p191 = scmp.ge.s32.totalorder %s190, 1
                  %s195 = sphi %s154, %s154
                  %s196 = sphi %s150, %s150
                $region54: #{discriminator_forward.16} parent=50 // loop_header_branch
                  %193 = sbr.rel (%p191) target = $region58
                $region55: #{discriminator_forward.16} parent=50 // loop_body
                  _
                $region56: #{discriminator_forward.16} parent=50 // loop_footer
                  %s194 = sadd.s32 1, %s190
                $region57: #{discriminator_forward.16} parent=50 // loop_footer_branch
                  %189 = sbr.rel target = $region53
                $region58: #{discriminator_forward.16} parent=50 // loop_exit
                  _
                %s198 = ssub.s32 16, 1
                loop: start=0, step=1, limit=1
                $region59: #{discriminator_forward.16} parent=50 // loop_pre_header
                  _
                $region60: #{discriminator_forward.16} parent=50 // loop_header
                  %s200 = sphi 0, %s204
                  %p201 = scmp.ge.s32.totalorder %s200, 1
                  %s205 = sphi %s154, %s154
                  %s206 = sphi %s150, %s150
                $region61: #{discriminator_forward.16} parent=50 // loop_header_branch
                  %203 = sbr.rel (%p201) target = $region65
                $region62: #{discriminator_forward.16} parent=50 // loop_body
                  %v207 = vld [vmem:[%s205] sm:%s198]
                  %208 = vst [vmem:[%s206] sm:%s198] %v207
                  %v209 = vld [vmem:[%s205 + $0x20] sm:%s198]
                  %210 = vst [vmem:[%s206 + $0x4] sm:%s198] %v209
                  %v211 = vld [vmem:[%s205 + $0x40] sm:%s198]
                  %212 = vst [vmem:[%s206 + $0x8] sm:%s198] %v211
                  %v213 = vld [vmem:[%s205 + $0x60] sm:%s198]
                  %214 = vst [vmem:[%s206 + $0xc] sm:%s198] %v213
                  %v215 = vld [vmem:[%s205 + $0x80] sm:%s198]
                  %216 = vst [vmem:[%s206 + $0x10] sm:%s198] %v215
                  %v217 = vld [vmem:[%s205 + $0xa0] sm:%s198]
                  %218 = vst [vmem:[%s206 + $0x14] sm:%s198] %v217
                  %v219 = vld [vmem:[%s205 + $0xc0] sm:%s198]
                  %220 = vst [vmem:[%s206 + $0x18] sm:%s198] %v219
                  %v221 = vld [vmem:[%s205 + $0xe0] sm:%s198]
                  %222 = vst [vmem:[%s206 + $0x1c] sm:%s198] %v221
                $region63: #{discriminator_forward.16} parent=50 // loop_footer
                  %s204 = sadd.s32 1, %s200
                $region64: #{discriminator_forward.16} parent=50 // loop_footer_branch
                  %199 = sbr.rel target = $region60
                $region65: #{discriminator_forward.16} parent=50 // loop_exit
                  _
              $region51: #{discriminator_forward.16} parent=35 // pred_fallthru
                _
            $region36: #{discriminator_forward.16} parent=31 // pred_fallthru
              _
            // Predicated region
            $region37: #{discriminator_forward.16} parent=31 // pred_check
              _
            $region38: #{discriminator_forward.16} parent=31 // pred_check_branch
              %160 = sbr.rel (0) target = $region40
            $region39: #{discriminator_forward.16} parent=31 // pred_region
              %s162 = ssub.s32 16, 1
              loop: start=0, step=1, limit=1
              $region41: #{discriminator_forward.16} parent=39 // loop_pre_header
                _
              $region42: #{discriminator_forward.16} parent=39 // loop_header
                %s164 = sphi 0, %s168
                %p165 = scmp.ge.s32.totalorder %s164, 1
                %s169 = sphi %s154, %s154
                %s170 = sphi %s150, %s150
              $region43: #{discriminator_forward.16} parent=39 // loop_header_branch
                %167 = sbr.rel (%p165) target = $region47
              $region44: #{discriminator_forward.16} parent=39 // loop_body
                %v171 = vld [vmem:[%s169] sm:%s162]
                %172 = vst [vmem:[%s170] sm:%s162] %v171
                %v173 = vld [vmem:[%s169 + $0x20] sm:%s162]
                %174 = vst [vmem:[%s170 + $0x4] sm:%s162] %v173
                %v175 = vld [vmem:[%s169 + $0x40] sm:%s162]
                %176 = vst [vmem:[%s170 + $0x8] sm:%s162] %v175
                %v177 = vld [vmem:[%s169 + $0x60] sm:%s162]
                %178 = vst [vmem:[%s170 + $0xc] sm:%s162] %v177
                %v179 = vld [vmem:[%s169 + $0x80] sm:%s162]
                %180 = vst [vmem:[%s170 + $0x10] sm:%s162] %v179
                %v181 = vld [vmem:[%s169 + $0xa0] sm:%s162]
                %182 = vst [vmem:[%s170 + $0x14] sm:%s162] %v181
                %v183 = vld [vmem:[%s169 + $0xc0] sm:%s162]
                %184 = vst [vmem:[%s170 + $0x18] sm:%s162] %v183
                %v185 = vld [vmem:[%s169 + $0xe0] sm:%s162]
                %186 = vst [vmem:[%s170 + $0x1c] sm:%s162] %v185
              $region45: #{discriminator_forward.16} parent=39 // loop_footer
                %s168 = sadd.s32 1, %s164
              $region46: #{discriminator_forward.16} parent=39 // loop_footer_branch
                %163 = sbr.rel target = $region42
              $region47: #{discriminator_forward.16} parent=39 // loop_exit
                _
            $region40: #{discriminator_forward.16} parent=31 // pred_fallthru
              _
          $region32: #{discriminator_forward.16} parent=27 // pred_fallthru
            _
          %223 = vnop
        $region28: #{discriminator_forward.16} parent=23 // pred_fallthru
          _
      $region24: #{discriminator_forward.16} parent=5 // pred_fallthru
        _
      %p224 = scmp.le.s32.totalorder 1, %s9
      %p225 = scmp.lt.s32.totalorder %s9, 17
      %p226 = pnand %p224, %p225
      %p227 = pneg %p226
      // Predicated region
      $region66: #{discriminator_forward.16} parent=5 // pred_check
        _
      $region67: #{discriminator_forward.16} parent=5 // pred_check_branch
        %229 = sbr.rel (%p226) target = $region69
      $region68: #{discriminator_forward.16} parent=5 // pred_region
        %s230 = ssub.s32 %s9, 1
        %s231 = sand.u32 %s36, 1
        %s232 = sand.u32 %s36, 1
        %s233 = smul.addr %s232, 32
        %s234 = scalar_lea.vmem [#allocation2], %s233
        // Predicated region
        $region70: #{discriminator_forward.16} parent=68 // pred_check
          %p235 = pneg %p49
        $region71: #{discriminator_forward.16} parent=68 // pred_check_branch
          %237 = sbr.rel (%p235) target = $region73
        $region72: #{discriminator_forward.16} parent=68 // pred_region
          _
        $region73: #{discriminator_forward.16} parent=68 // pred_fallthru
          _
        %s238 = sand.u32 %s36, 1
        %s239 = sand.u32 %s36, 1
        %s240 = smul.addr %s239, 32
        %s241 = scalar_lea.vmem [#allocation2], %s240
        %p242 = pneg %p49
        %p243 = pneg %p46
        %p244 = pneg %p70
        %p245 = pneg %p67
        %p246 = pneg %p91
        %p247 = pneg %p88
        %p248 = pneg %p119
        %p249 = pneg %p116
        %p250 = scmp.lt.s32.totalorder %s18, 1
        %s251 = scalar_select %p250, %s18, 1
        %p252 = scmp.lt.s32.totalorder %s19, 7
        %s253 = scalar_select %p252, %s19, 7
        %s254 = smul.addr %s251, 8
        %s255 = sadd.s32 %s253, %s254
        %s256 = smul.addr %s255, 8
        %s257 = scalar_lea.vmem %s3, %s256
        %p258 = scmp.lt.s32.totalorder %s18, 1
        %s259 = scalar_select %p258, %s18, 1
        %p260 = scmp.lt.s32.totalorder %s19, 7
        %s261 = scalar_select %p260, %s19, 7
        %s262 = smul.addr %s259, 8
        %s263 = sadd.s32 %s261, %s262
        %s264 = smul.addr %s263, 8
        %s265 = scalar_lea.vmem %s3, %s264
        %v267 = vld [vmem:[%s1] sm:$0xf]
        %v268 = vld [vmem:[%s234] sm:$0xf]
        %v269 = vld [vmem:[%s234 + $0x4] sm:$0xf]
        %v270 = vld [vmem:[%s234 + $0x8] sm:$0xf]
        %v271 = vld [vmem:[%s234 + $0xc] sm:$0xf]
        %v272 = vld [vmem:[%s234 + $0x10] sm:$0xf]
        %v273 = vld [vmem:[%s234 + $0x14] sm:$0xf]
        %v274 = vld [vmem:[%s234 + $0x18] sm:$0xf]
        %v275 = vld [vmem:[%s234 + $0x1c] sm:$0xf]
        %v276 = vld [vmem:[%s2] sm:$0xff]
        %278 = vset.pattern.permute.xlu0 0
        %279 = vperm.xlu0 %278, %v276
        %v280 = vpop.permute.xlu0 %279
        %v290 = vunpack.c.l.b16 %v268
        %v291 = vunpack.c.l.b16 %v269
        %v292 = vunpack.c.l.b16 %v270
        %v293 = vunpack.c.l.b16 %v271
        %v294 = vunpack.c.l.b16 %v272
        %v295 = vunpack.c.l.b16 %v273
        %v296 = vunpack.c.l.b16 %v274
        %v297 = vunpack.c.l.b16 %v275
        %v298 = vpack.c.b16 %v291, %v290
        %v299 = vpack.c.b16 %v293, %v292
        %v300 = vpack.c.b16 %v295, %v294
        %v301 = vpack.c.b16 %v297, %v296
        %vm306 = vcmask 523264
        %v308 = vsel %vm306, %v267, 0
        %310 = vmatprep.subr.bf16.mxu0 0
        %311 = vmatpush1.bf16.msra.mxu0 0
        %312 = vmatprep.subr.bf16.mxu0 0
        %313 = vmatpush1.bf16.msra.mxu0 0
        %314 = vmatprep.subr.bf16.mxu0 0
        %315 = vmatpush1.bf16.msra.mxu0 0
        %316 = vmatprep.subr.bf16.mxu0 0
        %317 = vmatpush1.bf16.msra.mxu0 0
        %318 = vmatprep.subr.bf16.mxu0 0
        %319 = vmatpush1.bf16.msra.mxu0 %v301
        %320 = vmatprep.subr.bf16.mxu0 0
        %321 = vmatpush1.bf16.msra.mxu0 %v300
        %322 = vmatprep.subr.bf16.mxu0 0
        %323 = vmatpush1.bf16.msra.mxu0 %v299
        %324 = vmatprep.subr.bf16.mxu0 0
        %325 = vmatpush1.bf16.msra.mxu0 %v298
        %326 = vmatprep.subr.bf16.mxu0 0
        %327 = vmatpush2.bf16.msra.mxu0 0
        %328 = vmatprep.subr.bf16.mxu0 0
        %329 = vmatpush2.bf16.msra.mxu0 0
        %330 = vmatprep.subr.bf16.mxu0 0
        %331 = vmatpush2.bf16.msra.mxu0 0
        %332 = vmatprep.subr.bf16.mxu0 0
        %333 = vmatpush2.bf16.msra.mxu0 0
        %334 = vmatprep.subr.bf16.mxu0 0
        %335 = vmatpush2.bf16.msra.mxu0 0
        %336 = vmatprep.subr.bf16.mxu0 0
        %337 = vmatpush2.bf16.msra.mxu0 0
        %338 = vmatprep.subr.bf16.mxu0 0
        %339 = vmatpush2.bf16.msra.mxu0 0
        %340 = vmatprep.subr.bf16.mxu0 0
        %341 = vmatpush2.bf16.msra.mxu0 0
        %342 = vmatprep.mubr.bf16.mxu0 0
        %343 = vmatmul.mubr.bf16.gmra.mxu0 %v308
        %v344 = vpop.f32.mrf.mxu0
        %v345 = vadd.f32 %v280, %v344
        %v346 = vpop.f32.mrf.mxu0
        %v347 = vpop.f32.mrf.mxu0
        %v348 = vpop.f32.mrf.mxu0
        %349 = vdwg.mxu0
        %350 = vst [vmem:[%s265] sm:$0xff] %v345
        %p351 = scmp.lt.s32.totalorder %s18, 1
        %s352 = scalar_select %p351, %s18, 1
        %p353 = scmp.lt.s32.totalorder %s19, 7
        %s354 = scalar_select %p353, %s19, 7
        %s355 = smul.addr %s352, 8
        %s356 = sadd.s32 %s354, %s355
        %s357 = smul.addr %s356, 8
        %s358 = scalar_lea.vmem %s3, %s357
        // Predicated region
        $region74: #{discriminator_forward.16} parent=68 // pred_check
          %p359 = pneg %p116
        $region75: #{discriminator_forward.16} parent=68 // pred_check_branch
          %361 = sbr.rel (%p359) target = $region77
        $region76: #{discriminator_forward.16} parent=68 // pred_region
          _
        $region77: #{discriminator_forward.16} parent=68 // pred_fallthru
          _
      $region69: #{discriminator_forward.16} parent=5 // pred_fallthru
        _
      %p362 = scmp.le.s32.totalorder 2, %s9
      // Predicated region
      $region78: #{discriminator_forward.16} parent=5 // pred_check
        %p363 = pneg %p362
      $region79: #{discriminator_forward.16} parent=5 // pred_check_branch
        %365 = sbr.rel (%p363) target = $region81
      $region80: #{discriminator_forward.16} parent=5 // pred_region
        %s366 = ssub.s32 %s9, 2
        // Predicated region
        $region82: #{discriminator_forward.16} parent=80 // pred_check
          %p367 = pneg %p122
        $region83: #{discriminator_forward.16} parent=80 // pred_check_branch
          %369 = sbr.rel (%p367) target = $region85
        $region84: #{discriminator_forward.16} parent=80 // pred_region
          %p370 = scmp.lt.s32.totalorder %s20, 1
          %s371 = scalar_select %p370, %s20, 1
          %p372 = scmp.lt.s32.totalorder %s21, 7
          %s373 = scalar_select %p372, %s21, 7
          %s374 = smul.addr %s371, 8
          %s375 = sadd.s32 %s373, %s374
          %s376 = smul.addr %s375, 8
          %s377 = scalar_lea.vmem %s3, %s376
        $region85: #{discriminator_forward.16} parent=80 // pred_fallthru
          _
      $region81: #{discriminator_forward.16} parent=5 // pred_fallthru
        _
    $region6: #{discriminator_forward.16} parent=1 // loop_footer
      %s13 = sadd.s32 1, %s9
    $region7: #{discriminator_forward.16} parent=1 // loop_footer_branch
      %8 = sbr.rel target = $region3
    $region8: #{discriminator_forward.16} parent=1 // loop_exit
      _

// kernel: discriminator_forward.17
$region0: #{discriminator_forward.17}
  #allocation0 [shape = 'u32[]', space=smem, size = 0x4, offset = 0x4, fixed_abs, tag = 'smem constant byte address 0x4 - core index']
  #allocation1 [shape = 'u32[144,128]{1,0:T(1,128)}', space=vmem, size = 0x12000, scoped, tag = 'internal scratch']
  %s0 = inlined_call_operand.vmem [shape: bf16[2,128,256], index: 0, kind: input, shape index: {}]
  %s1 = inlined_call_operand.vmem [shape: bf16[16,128], index: 1, kind: input, shape index: {}]
  %s2 = inlined_call_operand.vmem [shape: f32[2,16,256], index: 2, kind: output, shape index: {0}]
  %s3 = inlined_call_operand.vmem [shape: f32[2,16,1], index: 3, kind: output, shape index: {1}]
  %s4 = inlined_call_operand.vmem [shape: f32[2,16,1], index: 4, kind: output, shape index: {2}]
  %5 = xla_tuple %s2, %s3, %s4
  %s6 = sld [smem:[#allocation0]]
  $region136: #{discriminator_forward.17} parent=0
    _
  %s8 = ssub.s32 1, %s6
  %s9 = scalar_select 0, %s8, %s6
  $region1: #{discriminator_forward.17} parent=0
    #allocation2 [shape = 'u8[65536]{0}', space=vmem, size = 0x10000, scoped, tag = 'input window, operand 0']
    #allocation3 [shape = 'u8[16384]{0}', space=vmem, size = 0x4000, scoped, tag = 'output window, operand 0']
    loop: start=0, step=1, limit=6
    $region2: #{discriminator_forward.17} parent=1 // loop_pre_header
      _
    $region3: #{discriminator_forward.17} parent=1 // loop_header
      %s11 = sphi 0, %s15
      %p12 = scmp.ge.s32.totalorder %s11, 6
      %s18 = sphi 0, %s30
      %s19 = sphi 0, %s26
      %s20 = sphi 0, %s18
      %s21 = sphi 0, %s19
      %s22 = sphi 0, %s20
      %s23 = sphi 0, %s21
      %s35 = sphi 0, %s37
      %s38 = sphi 0, %s35
      %s39 = sphi 0, %s38
      %s55 = sphi 0, %s39
      %s59 = sphi 0, %s59
      %s61 = sphi 0, %s59
      %s62 = sphi 0, %s61
      %s76 = sphi 0, %s62
      %s84 = sphi 0, %s86
      %s87 = sphi 0, %s84
      %s88 = sphi 0, %s87
      %s104 = sphi 0, %s88
      %s110 = sphi 0, %s112
      %s113 = sphi 0, %s110
      %s114 = sphi 0, %s113
      %s130 = sphi 0, %s114
      %s136 = sphi 0, %s138
      %s139 = sphi 0, %s136
      %s140 = sphi 0, %s139
      %s156 = sphi 0, %s140
    $region4: #{discriminator_forward.17} parent=1 // loop_header_branch
      %14 = sbr.rel (%p12) target = $region8
    $region5: #{discriminator_forward.17} parent=1 // loop_body
      %s16 = ssub.s32 %s11, 1
      %s17 = ssub.s32 %s11, 2
      %s24 = sadd.s32 1, %s19
      %p25 = scmp.ge.s32.totalorder %s24, 2
      %s26 = scalar_select %p25, 0, %s24
      %s27 = sadd.s32 1, %s18
      %s28 = scalar_select %p25, %s27, %s18
      %p29 = scmp.ge.s32.totalorder %s28, 2
      %s30 = scalar_select %p29, 0, %s28
      %s31 = ssub.s32 %s18, %s30
      %s32 = ssub.s32 %s19, %s26
      %s33 = sor.u32 %s31, %s32
      %p34 = scmp.eq.s32.totalorder %s33, 0
      %s36 = sadd.s32 %s35, 1
      %s37 = scalar_select %p34, %s35, %s36
      %p40 = pneg %p34
      %p41 = scmp.eq.s32.totalorder %s11, 3
      %p42 = por %p40, %p41
      %p43 = scmp.ne.s32.totalorder %s35, %s38
      %p44 = scmp.eq.s32.totalorder %s11, 0
      %p45 = por %p43, %p44
      %p46 = scmp.ne.s32.totalorder %s35, %s38
      %p47 = scmp.eq.s32.totalorder %s16, 3
      %p48 = por %p46, %p47
      %p49 = scmp.ne.s32.totalorder %s38, %s39
      %p50 = scmp.eq.s32.totalorder %s16, 0
      %p51 = por %p49, %p50
      %p52 = scmp.ne.s32.totalorder %s38, %s39
      %p53 = scmp.eq.s32.totalorder %s17, 3
      %p54 = por %p52, %p53
      %p56 = scmp.ne.s32.totalorder %s39, %s55
      %p57 = scmp.eq.s32.totalorder %s17, 0
      %p58 = por %p56, %p57
      %s60 = sadd.s32 %s59, 1
      %p63 = scmp.eq.s32.totalorder %s11, 3
      %p64 = scmp.ne.s32.totalorder %s59, %s61
      %p65 = scmp.eq.s32.totalorder %s11, 0
      %p66 = por %p64, %p65
      %p67 = scmp.ne.s32.totalorder %s59, %s61
      %p68 = scmp.eq.s32.totalorder %s16, 3
      %p69 = por %p67, %p68
      %p70 = scmp.ne.s32.totalorder %s61, %s62
      %p71 = scmp.eq.s32.totalorder %s16, 0
      %p72 = por %p70, %p71
      %p73 = scmp.ne.s32.totalorder %s61, %s62
      %p74 = scmp.eq.s32.totalorder %s17, 3
      %p75 = por %p73, %p74
      %p77 = scmp.ne.s32.totalorder %s62, %s76
      %p78 = scmp.eq.s32.totalorder %s17, 0
      %p79 = por %p77, %p78
      %s80 = ssub.s32 %s18, %s30
      %s81 = ssub.s32 %s19, %s26
      %s82 = sor.u32 %s80, %s81
      %p83 = scmp.eq.s32.totalorder %s82, 0
      %s85 = sadd.s32 %s84, 1
      %s86 = scalar_select %p83, %s84, %s85
      %p89 = pneg %p83
      %p90 = scmp.eq.s32.totalorder %s11, 3
      %p91 = por %p89, %p90
      %p92 = scmp.ne.s32.totalorder %s84, %s87
      %p93 = scmp.eq.s32.totalorder %s11, 0
      %p94 = por %p92, %p93
      %p95 = scmp.ne.s32.totalorder %s84, %s87
      %p96 = scmp.eq.s32.totalorder %s16, 3
      %p97 = por %p95, %p96
      %p98 = scmp.ne.s32.totalorder %s87, %s88
      %p99 = scmp.eq.s32.totalorder %s16, 0
      %p100 = por %p98, %p99
      %p101 = scmp.ne.s32.totalorder %s87, %s88
      %p102 = scmp.eq.s32.totalorder %s17, 3
      %p103 = por %p101, %p102
      %p105 = scmp.ne.s32.totalorder %s88, %s104
      %p106 = scmp.eq.s32.totalorder %s17, 0
      %p107 = por %p105, %p106
      %s108 = ssub.s32 %s18, %s30
      %p109 = scmp.eq.s32.totalorder %s108, 0
      %s111 = sadd.s32 %s110, 1
      %s112 = scalar_select %p109, %s110, %s111
      %p115 = pneg %p109
      %p116 = scmp.eq.s32.totalorder %s11, 3
      %p117 = por %p115, %p116
      %p118 = scmp.ne.s32.totalorder %s110, %s113
      %p119 = scmp.eq.s32.totalorder %s11, 0
      %p120 = por %p118, %p119
      %p121 = scmp.ne.s32.totalorder %s110, %s113
      %p122 = scmp.eq.s32.totalorder %s16, 3
      %p123 = por %p121, %p122
      %p124 = scmp.ne.s32.totalorder %s113, %s114
      %p125 = scmp.eq.s32.totalorder %s16, 0
      %p126 = por %p124, %p125
      %p127 = scmp.ne.s32.totalorder %s113, %s114
      %p128 = scmp.eq.s32.totalorder %s17, 3
      %p129 = por %p127, %p128
      %p131 = scmp.ne.s32.totalorder %s114, %s130
      %p132 = scmp.eq.s32.totalorder %s17, 0
      %p133 = por %p131, %p132
      %s134 = ssub.s32 %s18, %s30
      %p135 = scmp.eq.s32.totalorder %s134, 0
      %s137 = sadd.s32 %s136, 1
      %s138 = scalar_select %p135, %s136, %s137
      %p141 = pneg %p135
      %p142 = scmp.eq.s32.totalorder %s11, 3
      %p143 = por %p141, %p142
      %p144 = scmp.ne.s32.totalorder %s136, %s139
      %p145 = scmp.eq.s32.totalorder %s11, 0
      %p146 = por %p144, %p145
      %p147 = scmp.ne.s32.totalorder %s136, %s139
      %p148 = scmp.eq.s32.totalorder %s16, 3
      %p149 = por %p147, %p148
      %p150 = scmp.ne.s32.totalorder %s139, %s140
      %p151 = scmp.eq.s32.totalorder %s16, 0
      %p152 = por %p150, %p151
      %p153 = scmp.ne.s32.totalorder %s139, %s140
      %p154 = scmp.eq.s32.totalorder %s17, 3
      %p155 = por %p153, %p154
      %p157 = scmp.ne.s32.totalorder %s140, %s156
      %p158 = scmp.eq.s32.totalorder %s17, 0
      %p159 = por %p157, %p158
      %p160 = scmp.le.s32.totalorder 1, %s11
      %p161 = scmp.lt.s32.totalorder %s11, 5
      %p162 = pnand %p160, %p161
      %p163 = pneg %p162
      // Predicated region
      $region9: #{discriminator_forward.17} parent=5 // pred_check
        _
      $region10: #{discriminator_forward.17} parent=5 // pred_check_branch
        %165 = sbr.rel (%p162) target = $region12
      $region11: #{discriminator_forward.17} parent=5 // pred_region
        %s166 = ssub.s32 %s11, 1
        // Predicated region
        $region13: #{discriminator_forward.17} parent=11 // pred_check
          %p167 = pneg %p72
        $region14: #{discriminator_forward.17} parent=11 // pred_check_branch
          %169 = sbr.rel (%p167) target = $region16
        $region15: #{discriminator_forward.17} parent=11 // pred_region
          _
        $region16: #{discriminator_forward.17} parent=11 // pred_fallthru
          _
      $region12: #{discriminator_forward.17} parent=5 // pred_fallthru
        _
      %p170 = scmp.lt.s32.totalorder %s11, 4
      // Predicated region
      $region17: #{discriminator_forward.17} parent=5 // pred_check
        %p171 = pneg %p170
      $region18: #{discriminator_forward.17} parent=5 // pred_check_branch
        %173 = sbr.rel (%p171) target = $region20
      $region19: #{discriminator_forward.17} parent=5 // pred_region
        // Predicated region
        $region21: #{discriminator_forward.17} parent=19 // pred_check
          %p174 = pneg %p45
        $region22: #{discriminator_forward.17} parent=19 // pred_check_branch
          %176 = sbr.rel (%p174) target = $region24
        $region23: #{discriminator_forward.17} parent=19 // pred_region
          %s177 = sand.u32 %s35, 1
          %s178 = sand.u32 %s35, 1
          %s179 = smul.addr %s178, 64
          %s180 = scalar_lea.vmem [#allocation2], %s179
          %s181 = smul.addr %s18, 32
          %s182 = sadd.s32 %s19, %s181
          %s183 = smul.addr %s182, 4
          %s184 = scalar_lea.vmem %s0, %s183
          // Predicated region
          $region25: #{discriminator_forward.17} parent=23 // pred_check
            _
          $region26: #{discriminator_forward.17} parent=23 // pred_check_branch
            %186 = sbr.rel (0) target = $region28
          $region27: #{discriminator_forward.17} parent=23 // pred_region
            // Predicated region
            $region29: #{discriminator_forward.17} parent=27 // pred_check
              _
            $region30: #{discriminator_forward.17} parent=27 // pred_check_branch
              %188 = sbr.rel target = $region32
            $region31: #{discriminator_forward.17} parent=27 // pred_region
              // Predicated region
              $region44: #{discriminator_forward.17} parent=31 // pred_check
                _
              $region45: #{discriminator_forward.17} parent=31 // pred_check_branch
                %234 = sbr.rel (0) target = $region47
              $region46: #{discriminator_forward.17} parent=31 // pred_region
                loop: start=0, step=1, limit=1
                $region48: #{discriminator_forward.17} parent=46 // loop_pre_header
                  _
                $region49: #{discriminator_forward.17} parent=46 // loop_header
                  %s236 = sphi 0, %s240
                  %p237 = scmp.ge.s32.totalorder %s236, 1
                  %s241 = sphi %s184, %s184
                  %s242 = sphi %s180, %s180
                $region50: #{discriminator_forward.17} parent=46 // loop_header_branch
                  %239 = sbr.rel (%p237) target = $region54
                $region51: #{discriminator_forward.17} parent=46 // loop_body
                  _
                $region52: #{discriminator_forward.17} parent=46 // loop_footer
                  %s240 = sadd.s32 1, %s236
                $region53: #{discriminator_forward.17} parent=46 // loop_footer_branch
                  %235 = sbr.rel target = $region49
                $region54: #{discriminator_forward.17} parent=46 // loop_exit
                  _
                %s244 = ssub.s32 16, 1
                loop: start=0, step=1, limit=1
                $region55: #{discriminator_forward.17} parent=46 // loop_pre_header
                  _
                $region56: #{discriminator_forward.17} parent=46 // loop_header
                  %s246 = sphi 0, %s250
                  %p247 = scmp.ge.s32.totalorder %s246, 1
                  %s251 = sphi %s184, %s184
                  %s252 = sphi %s180, %s180
                $region57: #{discriminator_forward.17} parent=46 // loop_header_branch
                  %249 = sbr.rel (%p247) target = $region61
                $region58: #{discriminator_forward.17} parent=46 // loop_body
                  %v253 = vld [vmem:[%s251] sm:%s244]
                  %254 = vst [vmem:[%s252] sm:%s244] %v253
                  %v255 = vld [vmem:[%s251 + $0x8] sm:%s244]
                  %256 = vst [vmem:[%s252 + $0x4] sm:%s244] %v255
                  %v257 = vld [vmem:[%s251 + $0x10] sm:%s244]
                  %258 = vst [vmem:[%s252 + $0x8] sm:%s244] %v257
                  %v259 = vld [vmem:[%s251 + $0x18] sm:%s244]
                  %260 = vst [vmem:[%s252 + $0xc] sm:%s244] %v259
                  %v261 = vld [vmem:[%s251 + $0x20] sm:%s244]
                  %262 = vst [vmem:[%s252 + $0x10] sm:%s244] %v261
                  %v263 = vld [vmem:[%s251 + $0x28] sm:%s244]
                  %264 = vst [vmem:[%s252 + $0x14] sm:%s244] %v263
                  %v265 = vld [vmem:[%s251 + $0x30] sm:%s244]
                  %266 = vst [vmem:[%s252 + $0x18] sm:%s244] %v265
                  %v267 = vld [vmem:[%s251 + $0x38] sm:%s244]
                  %268 = vst [vmem:[%s252 + $0x1c] sm:%s244] %v267
                  %v269 = vld [vmem:[%s251 + $0x40] sm:%s244]
                  %270 = vst [vmem:[%s252 + $0x20] sm:%s244] %v269
                  %v271 = vld [vmem:[%s251 + $0x48] sm:%s244]
                  %272 = vst [vmem:[%s252 + $0x24] sm:%s244] %v271
                  %v273 = vld [vmem:[%s251 + $0x50] sm:%s244]
                  %274 = vst [vmem:[%s252 + $0x28] sm:%s244] %v273
                  %v275 = vld [vmem:[%s251 + $0x58] sm:%s244]
                  %276 = vst [vmem:[%s252 + $0x2c] sm:%s244] %v275
                  %v277 = vld [vmem:[%s251 + $0x60] sm:%s244]
                  %278 = vst [vmem:[%s252 + $0x30] sm:%s244] %v277
                  %v279 = vld [vmem:[%s251 + $0x68] sm:%s244]
                  %280 = vst [vmem:[%s252 + $0x34] sm:%s244] %v279
                  %v281 = vld [vmem:[%s251 + $0x70] sm:%s244]
                  %282 = vst [vmem:[%s252 + $0x38] sm:%s244] %v281
                  %v283 = vld [vmem:[%s251 + $0x78] sm:%s244]
                  %284 = vst [vmem:[%s252 + $0x3c] sm:%s244] %v283
                $region59: #{discriminator_forward.17} parent=46 // loop_footer
                  %s250 = sadd.s32 1, %s246
                $region60: #{discriminator_forward.17} parent=46 // loop_footer_branch
                  %245 = sbr.rel target = $region56
                $region61: #{discriminator_forward.17} parent=46 // loop_exit
                  _
              $region47: #{discriminator_forward.17} parent=31 // pred_fallthru
                _
            $region32: #{discriminator_forward.17} parent=27 // pred_fallthru
              _
            // Predicated region
            $region33: #{discriminator_forward.17} parent=27 // pred_check
              _
            $region34: #{discriminator_forward.17} parent=27 // pred_check_branch
              %190 = sbr.rel (0) target = $region36
            $region35: #{discriminator_forward.17} parent=27 // pred_region
              %s192 = ssub.s32 16, 1
              loop: start=0, step=1, limit=1
              $region37: #{discriminator_forward.17} parent=35 // loop_pre_header
                _
              $region38: #{discriminator_forward.17} parent=35 // loop_header
                %s194 = sphi 0, %s198
                %p195 = scmp.ge.s32.totalorder %s194, 1
                %s199 = sphi %s184, %s184
                %s200 = sphi %s180, %s180
              $region39: #{discriminator_forward.17} parent=35 // loop_header_branch
                %197 = sbr.rel (%p195) target = $region43
              $region40: #{discriminator_forward.17} parent=35 // loop_body
                %v201 = vld [vmem:[%s199] sm:%s192]
                %202 = vst [vmem:[%s200] sm:%s192] %v201
                %v203 = vld [vmem:[%s199 + $0x8] sm:%s192]
                %204 = vst [vmem:[%s200 + $0x4] sm:%s192] %v203
                %v205 = vld [vmem:[%s199 + $0x10] sm:%s192]
                %206 = vst [vmem:[%s200 + $0x8] sm:%s192] %v205
                %v207 = vld [vmem:[%s199 + $0x18] sm:%s192]
                %208 = vst [vmem:[%s200 + $0xc] sm:%s192] %v207
                %v209 = vld [vmem:[%s199 + $0x20] sm:%s192]
                %210 = vst [vmem:[%s200 + $0x10] sm:%s192] %v209
                %v211 = vld [vmem:[%s199 + $0x28] sm:%s192]
                %212 = vst [vmem:[%s200 + $0x14] sm:%s192] %v211
                %v213 = vld [vmem:[%s199 + $0x30] sm:%s192]
                %214 = vst [vmem:[%s200 + $0x18] sm:%s192] %v213
                %v215 = vld [vmem:[%s199 + $0x38] sm:%s192]
                %216 = vst [vmem:[%s200 + $0x1c] sm:%s192] %v215
                %v217 = vld [vmem:[%s199 + $0x40] sm:%s192]
                %218 = vst [vmem:[%s200 + $0x20] sm:%s192] %v217
                %v219 = vld [vmem:[%s199 + $0x48] sm:%s192]
                %220 = vst [vmem:[%s200 + $0x24] sm:%s192] %v219
                %v221 = vld [vmem:[%s199 + $0x50] sm:%s192]
                %222 = vst [vmem:[%s200 + $0x28] sm:%s192] %v221
                %v223 = vld [vmem:[%s199 + $0x58] sm:%s192]
                %224 = vst [vmem:[%s200 + $0x2c] sm:%s192] %v223
                %v225 = vld [vmem:[%s199 + $0x60] sm:%s192]
                %226 = vst [vmem:[%s200 + $0x30] sm:%s192] %v225
                %v227 = vld [vmem:[%s199 + $0x68] sm:%s192]
                %228 = vst [vmem:[%s200 + $0x34] sm:%s192] %v227
                %v229 = vld [vmem:[%s199 + $0x70] sm:%s192]
                %230 = vst [vmem:[%s200 + $0x38] sm:%s192] %v229
                %v231 = vld [vmem:[%s199 + $0x78] sm:%s192]
                %232 = vst [vmem:[%s200 + $0x3c] sm:%s192] %v231
              $region41: #{discriminator_forward.17} parent=35 // loop_footer
                %s198 = sadd.s32 1, %s194
              $region42: #{discriminator_forward.17} parent=35 // loop_footer_branch
                %193 = sbr.rel target = $region38
              $region43: #{discriminator_forward.17} parent=35 // loop_exit
                _
            $region36: #{discriminator_forward.17} parent=27 // pred_fallthru
              _
          $region28: #{discriminator_forward.17} parent=23 // pred_fallthru
            _
          %285 = vnop
        $region24: #{discriminator_forward.17} parent=19 // pred_fallthru
          _
      $region20: #{discriminator_forward.17} parent=5 // pred_fallthru
        _
      %p286 = scmp.le.s32.totalorder 1, %s11
      %p287 = scmp.lt.s32.totalorder %s11, 5
      %p288 = pnand %p286, %p287
      %p289 = pneg %p288
      // Predicated region
      $region62: #{discriminator_forward.17} parent=5 // pred_check
        _
      $region63: #{discriminator_forward.17} parent=5 // pred_check_branch
        %291 = sbr.rel (%p288) target = $region65
      $region64: #{discriminator_forward.17} parent=5 // pred_region
        %s292 = ssub.s32 %s11, 1
        %s293 = sand.u32 %s38, 1
        %s294 = sand.u32 %s38, 1
        %s295 = smul.addr %s294, 64
        %s296 = scalar_lea.vmem [#allocation2], %s295
        // Predicated region
        $region66: #{discriminator_forward.17} parent=64 // pred_check
          %p297 = pneg %p51
        $region67: #{discriminator_forward.17} parent=64 // pred_check_branch
          %299 = sbr.rel (%p297) target = $region69
        $region68: #{discriminator_forward.17} parent=64 // pred_region
          _
        $region69: #{discriminator_forward.17} parent=64 // pred_fallthru
          _
        %s300 = sand.u32 %s38, 1
        %s301 = sand.u32 %s38, 1
        %s302 = smul.addr %s301, 64
        %s303 = scalar_lea.vmem [#allocation2], %s302
        %p304 = pneg %p51
        %p305 = pneg %p48
        %p306 = pneg %p72
        %p307 = pneg %p69
        %p308 = pneg %p100
        %p309 = pneg %p97
        %s310 = sand.u32 %s87, 1
        %s311 = sand.u32 %s87, 1
        %s312 = smul.addr %s311, 16
        %s313 = scalar_lea.vmem [#allocation3], %s312
        %p314 = pneg %p126
        %p315 = pneg %p123
        %p316 = scmp.lt.s32.totalorder %s20, 1
        %s317 = scalar_select %p316, %s20, 1
        %s318 = smul.addr %s317, 2
        %s319 = smul.addr %s318, 8
        %s320 = scalar_lea.vmem %s3, %s319
        %p321 = pneg %p152
        %p322 = pneg %p149
        %p323 = scmp.lt.s32.totalorder %s20, 1
        %s324 = scalar_select %p323, %s20, 1
        %s325 = smul.addr %s324, 2
        %s326 = smul.addr %s325, 8
        %s327 = scalar_lea.vmem %s4, %s326
        %p328 = scmp.lt.s32.totalorder %s20, 1
        %s329 = scalar_select %p328, %s20, 1
        %s330 = smul.addr %s329, 2
        %s331 = smul.addr %s330, 8
        %s332 = scalar_lea.vmem %s3, %s331
        %p333 = scmp.lt.s32.totalorder %s20, 1
        %s334 = scalar_select %p333, %s20, 1
        %s335 = smul.addr %s334, 2
        %s336 = smul.addr %s335, 8
        %s337 = scalar_lea.vmem %s4, %s336
        %p339 = scmp.eq.s32.totalorder %s21, 0
        // Predicated region
        $region70: #{discriminator_forward.17} parent=64 // pred_check
          %p340 = pneg %p339
        $region71: #{discriminator_forward.17} parent=64 // pred_check_branch
          %342 = sbr.rel (%p340) target = $region73
        $region72: #{discriminator_forward.17} parent=64 // pred_region
          %vm343 = vcmask 7168
          %344 = vst.msk [vmem:[%s332] sm:$0xff] %vm343, 0.0
          %345 = vst.msk [vmem:[%s332 + $0x8] sm:$0xff] %vm343, 0.0
          %346 = vst.msk [vmem:[%s337] sm:$0xff] %vm343, 0.0
          %347 = vst.msk [vmem:[%s337 + $0x8] sm:$0xff] %vm343, 0.0
        $region73: #{discriminator_forward.17} parent=64 // pred_fallthru
          _
        %v348 = vld [vmem:[%s1] sm:$0xf]
        %v349 = vld [vmem:[%s1 + $0x4] sm:$0xf]
        %v350 = vld [vmem:[%s296] sm:$0xf]
        %v351 = vld [vmem:[%s296 + $0x4] sm:$0xf]
        %v352 = vld [vmem:[%s296 + $0x8] sm:$0xf]
        %v353 = vld [vmem:[%s296 + $0xc] sm:$0xf]
        %v354 = vld [vmem:[%s296 + $0x10] sm:$0xf]
        %v355 = vld [vmem:[%s296 + $0x14] sm:$0xf]
        %v356 = vld [vmem:[%s296 + $0x18] sm:$0xf]
        %v357 = vld [vmem:[%s296 + $0x1c] sm:$0xf]
        %v358 = vld [vmem:[%s296 + $0x20] sm:$0xf]
        %v359 = vld [vmem:[%s296 + $0x24] sm:$0xf]
        %v360 = vld [vmem:[%s296 + $0x28] sm:$0xf]
        %v361 = vld [vmem:[%s296 + $0x2c] sm:$0xf]
        %v362 = vld [vmem:[%s296 + $0x30] sm:$0xf]
        %v363 = vld [vmem:[%s296 + $0x34] sm:$0xf]
        %v364 = vld [vmem:[%s296 + $0x38] sm:$0xf]
        %v365 = vld [vmem:[%s296 + $0x3c] sm:$0xf]
        %v368 = vunpack.c.l.b16 %v348
        %v369 = vunpack.c.l.b16 %v349
        %v370 = vpack.c.b16 %v369, %v368
        %v388 = vunpack.c.l.b16 %v350
        %v389 = vunpack.c.l.b16 %v351
        %v390 = vunpack.c.l.b16 %v352
        %v391 = vunpack.c.l.b16 %v353
        %v392 = vunpack.c.l.b16 %v354
        %v393 = vunpack.c.l.b16 %v355
        %v394 = vunpack.c.l.b16 %v356
        %v395 = vunpack.c.l.b16 %v357
        %v396 = vunpack.c.l.b16 %v358
        %v397 = vunpack.c.l.b16 %v359
        %v398 = vunpack.c.l.b16 %v360
        %v399 = vunpack.c.l.b16 %v361
        %v400 = vunpack.c.l.b16 %v362
        %v401 = vunpack.c.l.b16 %v363
        %v402 = vunpack.c.l.b16 %v364
        %v403 = vunpack.c.l.b16 %v365
        %v404 = vpack.c.b16 %v389, %v388
        %v405 = vpack.c.b16 %v391, %v390
        %v406 = vpack.c.b16 %v393, %v392
        %v407 = vpack.c.b16 %v395, %v394
        %v408 = vpack.c.b16 %v397, %v396
        %v409 = vpack.c.b16 %v399, %v398
        %v410 = vpack.c.b16 %v401, %v400
        %v411 = vpack.c.b16 %v403, %v402
        %420 = vmatprep.subr.bf16.mxu0 0
        %421 = vmatpush1.bf16.msra.mxu0 %v411
        %422 = vmatprep.subr.bf16.mxu0 0
        %423 = vmatpush1.bf16.msra.mxu0 %v410
        %424 = vmatprep.subr.bf16.mxu0 0
        %425 = vmatpush1.bf16.msra.mxu0 %v409
        %426 = vmatprep.subr.bf16.mxu0 0
        %427 = vmatpush1.bf16.msra.mxu0 %v408
        %428 = vmatprep.subr.bf16.mxu0 0
        %429 = vmatpush1.bf16.msra.mxu0 %v407
        %430 = vmatprep.subr.bf16.mxu0 0
        %431 = vmatpush1.bf16.msra.mxu0 %v406
        %432 = vmatprep.subr.bf16.mxu0 0
        %433 = vmatpush1.bf16.msra.mxu0 %v405
        %434 = vmatprep.subr.bf16.mxu0 0
        %435 = vmatpush1.bf16.msra.mxu0 %v404
        %436 = vmatprep.subr.bf16.mxu0 0
        %437 = vmatpush2.bf16.msra.mxu0 0
        %438 = vmatprep.subr.bf16.mxu0 0
        %439 = vmatpush2.bf16.msra.mxu0 0
        %440 = vmatprep.subr.bf16.mxu0 0
        %441 = vmatpush2.bf16.msra.mxu0 0
        %442 = vmatprep.subr.bf16.mxu0 0
        %443 = vmatpush2.bf16.msra.mxu0 0
        %444 = vmatprep.subr.bf16.mxu0 0
        %445 = vmatpush2.bf16.msra.mxu0 0
        %446 = vmatprep.subr.bf16.mxu0 0
        %447 = vmatpush2.bf16.msra.mxu0 0
        %448 = vmatprep.subr.bf16.mxu0 0
        %449 = vmatpush2.bf16.msra.mxu0 0
        %450 = vmatprep.subr.bf16.mxu0 0
        %451 = vmatpush2.bf16.msra.mxu0 0
        %452 = vmatprep.mubr.bf16.mxu0 0
        %453 = vmatmul.mubr.bf16.gmra.mxu0 %v370
        %v454 = vpop.f32.mrf.mxu0
        %v455 = vadd.f32 0.0, %v454
        %v456 = vpop.f32.mrf.mxu0
        %v457 = vpop.f32.mrf.mxu0
        %v458 = vadd.f32 0.0, %v457
        %v459 = vpop.f32.mrf.mxu0
        %460 = vdwg.mxu0
        %461 = vst [vmem:[%s313] sm:$0xff] %v455
        %462 = vst [vmem:[%s313 + $0x8] sm:$0xff] %v458
        %v463 = vld [vmem:[%s332] sm:$0xff]
        %v464 = vld [vmem:[%s332 + $0x8] sm:$0xff]
        %465 = vadd.xlane.f32.xlu0 %v455
        %v466 = vpop.xlane.xlu0 %465
        %467 = vadd.xlane.f32.xlu0 %v458
        %v468 = vpop.xlane.xlu0 %467
        %v469 = vadd.f32 %v463, %v466
        %v470 = vadd.f32 %v464, %v468
        %vm471 = vcmask 7168
        %472 = vst.msk [vmem:[%s332] sm:$0xff] %vm471, %v469
        %473 = vst.msk [vmem:[%s332 + $0x8] sm:$0xff] %vm471, %v470
        %v474 = vld [vmem:[%s337] sm:$0xff]
        %v475 = vld [vmem:[%s337 + $0x8] sm:$0xff]
        %v476 = vmul.f32 %v455, %v455
        %v477 = vmul.f32 %v458, %v458
        %478 = vadd.xlane.f32.xlu0 %v476
        %v479 = vpop.xlane.xlu0 %478
        %480 = vadd.xlane.f32.xlu0 %v477
        %v481 = vpop.xlane.xlu0 %480
        %v482 = vadd.f32 %v474, %v479
        %v483 = vadd.f32 %v475, %v481
        %484 = vst.msk [vmem:[%s337] sm:$0xff] %vm471, %v482
        %485 = vst.msk [vmem:[%s337 + $0x8] sm:$0xff] %vm471, %v483
        %s486 = sand.u32 %s87, 1
        %s487 = sand.u32 %s87, 1
        %s488 = smul.addr %s487, 16
        %s489 = scalar_lea.vmem [#allocation3], %s488
        %p490 = scmp.lt.s32.totalorder %s20, 1
        %s491 = scalar_select %p490, %s20, 1
        %s492 = smul.addr %s491, 2
        %s493 = smul.addr %s492, 8
        %s494 = scalar_lea.vmem %s3, %s493
        %p495 = scmp.lt.s32.totalorder %s20, 1
        %s496 = scalar_select %p495, %s20, 1
        %s497 = smul.addr %s496, 2
        %s498 = smul.addr %s497, 8
        %s499 = scalar_lea.vmem %s4, %s498
        // Predicated region
        $region74: #{discriminator_forward.17} parent=64 // pred_check
          %p500 = pneg %p97
        $region75: #{discriminator_forward.17} parent=64 // pred_check_branch
          %502 = sbr.rel (%p500) target = $region77
        $region76: #{discriminator_forward.17} parent=64 // pred_region
          %s503 = smul.addr %s20, 4
          %s504 = sadd.s32 %s21, %s503
          %s505 = smul.addr %s504, 8
          %s506 = scalar_lea.vmem %s2, %s505
          // Predicated region
          $region78: #{discriminator_forward.17} parent=76 // pred_check
            _
          $region79: #{discriminator_forward.17} parent=76 // pred_check_branch
            %508 = sbr.rel (0) target = $region81
          $region80: #{discriminator_forward.17} parent=76 // pred_region
            // Predicated region
            $region82: #{discriminator_forward.17} parent=80 // pred_check
              _
            $region83: #{discriminator_forward.17} parent=80 // pred_check_branch
              %510 = sbr.rel (0) target = $region85
            $region84: #{discriminator_forward.17} parent=80 // pred_region
              // Predicated region
              $region97: #{discriminator_forward.17} parent=84 // pred_check
                _
              $region98: #{discriminator_forward.17} parent=84 // pred_check_branch
                %528 = sbr.rel (0) target = $region100
              $region99: #{discriminator_forward.17} parent=84 // pred_region
                loop: start=0, step=1, limit=1
                $region101: #{discriminator_forward.17} parent=99 // loop_pre_header
                  _
                $region102: #{discriminator_forward.17} parent=99 // loop_header
                  %s530 = sphi 0, %s534
                  %p531 = scmp.ge.s32.totalorder %s530, 1
                  %s535 = sphi %s489, %s489
                  %s536 = sphi %s506, %s506
                $region103: #{discriminator_forward.17} parent=99 // loop_header_branch
                  %533 = sbr.rel (%p531) target = $region107
                $region104: #{discriminator_forward.17} parent=99 // loop_body
                  %v537 = vld [vmem:[%s535] sm:$0xff]
                  %538 = vst [vmem:[%s536] sm:$0xff] %v537
                  %v539 = vld [vmem:[%s535 + $0x8] sm:$0xff]
                  %540 = vst [vmem:[%s536 + $0x10] sm:$0xff] %v539
                $region105: #{discriminator_forward.17} parent=99 // loop_footer
                  %s534 = sadd.s32 1, %s530
                $region106: #{discriminator_forward.17} parent=99 // loop_footer_branch
                  %529 = sbr.rel target = $region102
                $region107: #{discriminator_forward.17} parent=99 // loop_exit
                  _
              $region100: #{discriminator_forward.17} parent=84 // pred_fallthru
                _
              // Predicated region
              $region108: #{discriminator_forward.17} parent=84 // pred_check
                _
              $region109: #{discriminator_forward.17} parent=84 // pred_check_branch
                %542 = sbr.rel target = $region111
              $region110: #{discriminator_forward.17} parent=84 // pred_region
                _
              $region111: #{discriminator_forward.17} parent=84 // pred_fallthru
                _
            $region85: #{discriminator_forward.17} parent=80 // pred_fallthru
              _
            // Predicated region
            $region86: #{discriminator_forward.17} parent=80 // pred_check
              _
            $region87: #{discriminator_forward.17} parent=80 // pred_check_branch
              %512 = sbr.rel target = $region89
            $region88: #{discriminator_forward.17} parent=80 // pred_region
              %s514 = ssub.s32 256, 1
              loop: start=0, step=1, limit=1
              $region90: #{discriminator_forward.17} parent=88 // loop_pre_header
                _
              $region91: #{discriminator_forward.17} parent=88 // loop_header
                %s516 = sphi 0, %s520
                %p517 = scmp.ge.s32.totalorder %s516, 1
                %s521 = sphi %s489, %s489
                %s522 = sphi %s506, %s506
              $region92: #{discriminator_forward.17} parent=88 // loop_header_branch
                %519 = sbr.rel (%p517) target = $region96
              $region93: #{discriminator_forward.17} parent=88 // loop_body
                %v523 = vld [vmem:[%s521] sm:%s514]
                %524 = vst [vmem:[%s522] sm:%s514] %v523
                %v525 = vld [vmem:[%s521 + $0x8] sm:%s514]
                %526 = vst [vmem:[%s522 + $0x10] sm:%s514] %v525
              $region94: #{discriminator_forward.17} parent=88 // loop_footer
                %s520 = sadd.s32 1, %s516
              $region95: #{discriminator_forward.17} parent=88 // loop_footer_branch
                %515 = sbr.rel target = $region91
              $region96: #{discriminator_forward.17} parent=88 // loop_exit
                _
            $region89: #{discriminator_forward.17} parent=80 // pred_fallthru
              _
          $region81: #{discriminator_forward.17} parent=76 // pred_fallthru
            _
          %543 = vnop
        $region77: #{discriminator_forward.17} parent=64 // pred_fallthru
          _
        // Predicated region
        $region112: #{discriminator_forward.17} parent=64 // pred_check
          %p544 = pneg %p123
        $region113: #{discriminator_forward.17} parent=64 // pred_check_branch
          %546 = sbr.rel (%p544) target = $region115
        $region114: #{discriminator_forward.17} parent=64 // pred_region
          _
        $region115: #{discriminator_forward.17} parent=64 // pred_fallthru
          _
        // Predicated region
        $region116: #{discriminator_forward.17} parent=64 // pred_check
          %p547 = pneg %p149
        $region117: #{discriminator_forward.17} parent=64 // pred_check_branch
          %549 = sbr.rel (%p547) target = $region119
        $region118: #{discriminator_forward.17} parent=64 // pred_region
          _
        $region119: #{discriminator_forward.17} parent=64 // pred_fallthru
          _
      $region65: #{discriminator_forward.17} parent=5 // pred_fallthru
        _
      %p550 = scmp.le.s32.totalorder 2, %s11
      // Predicated region
      $region120: #{discriminator_forward.17} parent=5 // pred_check
        %p551 = pneg %p550
      $region121: #{discriminator_forward.17} parent=5 // pred_check_branch
        %553 = sbr.rel (%p551) target = $region123
      $region122: #{discriminator_forward.17} parent=5 // pred_region
        %s554 = ssub.s32 %s11, 2
        // Predicated region
        $region124: #{discriminator_forward.17} parent=122 // pred_check
          %p555 = pneg %p103
        $region125: #{discriminator_forward.17} parent=122 // pred_check_branch
          %557 = sbr.rel (%p555) target = $region127
        $region126: #{discriminator_forward.17} parent=122 // pred_region
          %s558 = sand.u32 %s88, 1
          %s559 = sand.u32 %s88, 1
          %s560 = smul.addr %s559, 16
          %s561 = scalar_lea.vmem [#allocation3], %s560
        $region127: #{discriminator_forward.17} parent=122 // pred_fallthru
          _
        // Predicated region
        $region128: #{discriminator_forward.17} parent=122 // pred_check
          %p562 = pneg %p129
        $region129: #{discriminator_forward.17} parent=122 // pred_check_branch
          %564 = sbr.rel (%p562) target = $region131
        $region130: #{discriminator_forward.17} parent=122 // pred_region
          %p565 = scmp.lt.s32.totalorder %s22, 1
          %s566 = scalar_select %p565, %s22, 1
          %s567 = smul.addr %s566, 2
          %s568 = smul.addr %s567, 8
          %s569 = scalar_lea.vmem %s3, %s568
        $region131: #{discriminator_forward.17} parent=122 // pred_fallthru
          _
        // Predicated region
        $region132: #{discriminator_forward.17} parent=122 // pred_check
          %p570 = pneg %p155
        $region133: #{discriminator_forward.17} parent=122 // pred_check_branch
          %572 = sbr.rel (%p570) target = $region135
        $region134: #{discriminator_forward.17} parent=122 // pred_region
          %p573 = scmp.lt.s32.totalorder %s22, 1
          %s574 = scalar_select %p573, %s22, 1
          %s575 = smul.addr %s574, 2
          %s576 = smul.addr %s575, 8
          %s577 = scalar_lea.vmem %s4, %s576
        $region135: #{discriminator_forward.17} parent=122 // pred_fallthru
          _
      $region123: #{discriminator_forward.17} parent=5 // pred_fallthru
        _
    $region6: #{discriminator_forward.17} parent=1 // loop_footer
      %s15 = sadd.s32 1, %s11
    $region7: #{discriminator_forward.17} parent=1 // loop_footer_branch
      %10 = sbr.rel target = $region3
    $region8: #{discriminator_forward.17} parent=1 // loop_exit
      _

// kernel: discriminator_forward.18
$region0: #{discriminator_forward.18}
  #allocation0 [shape = 'u32[]', space=smem, size = 0x4, offset = 0x4, fixed_abs, tag = 'smem constant byte address 0x4 - core index']
  #allocation1 [shape = 'u32[144,128]{1,0:T(1,128)}', space=vmem, size = 0x12000, scoped, tag = 'internal scratch']
  %s0 = inlined_call_operand.vmem [shape: f32[2,16,256], index: 0, kind: input, shape index: {}]
  %s1 = inlined_call_operand.vmem [shape: f32[2,16,1], index: 1, kind: input, shape index: {}]
  %s2 = inlined_call_operand.vmem [shape: f32[2,16,1], index: 2, kind: input, shape index: {}]
  %s3 = inlined_call_operand.vmem [shape: f32[2,16,256], index: 3, kind: output, shape index: {}]
  %s4 = sld [smem:[#allocation0]]
  $region117: #{discriminator_forward.18} parent=0
    _
  %s6 = ssub.s32 1, %s4
  %s7 = scalar_select 0, %s6, %s4
  $region1: #{discriminator_forward.18} parent=0
    #allocation2 [shape = 'u8[16384]{0}', space=vmem, size = 0x4000, scoped, tag = 'input window, operand 0']
    #allocation3 [shape = 'u8[16384]{0}', space=vmem, size = 0x4000, scoped, tag = 'output window, operand 0']
    loop: start=0, step=1, limit=6
    $region2: #{discriminator_forward.18} parent=1 // loop_pre_header
      _
    $region3: #{discriminator_forward.18} parent=1 // loop_header
      %s9 = sphi 0, %s13
      %p10 = scmp.ge.s32.totalorder %s9, 6
      %s16 = sphi 0, %s28
      %s17 = sphi 0, %s24
      %s18 = sphi 0, %s16
      %s19 = sphi 0, %s17
      %s20 = sphi 0, %s18
      %s21 = sphi 0, %s19
      %s33 = sphi 0, %s35
      %s36 = sphi 0, %s33
      %s37 = sphi 0, %s36
      %s53 = sphi 0, %s37
      %s59 = sphi 0, %s61
      %s62 = sphi 0, %s59
      %s63 = sphi 0, %s62
      %s79 = sphi 0, %s63
      %s85 = sphi 0, %s87
      %s88 = sphi 0, %s85
      %s89 = sphi 0, %s88
      %s105 = sphi 0, %s89
      %s113 = sphi 0, %s115
      %s116 = sphi 0, %s113
      %s117 = sphi 0, %s116
      %s133 = sphi 0, %s117
    $region4: #{discriminator_forward.18} parent=1 // loop_header_branch
      %12 = sbr.rel (%p10) target = $region8
    $region5: #{discriminator_forward.18} parent=1 // loop_body
      %s14 = ssub.s32 %s9, 1
      %s15 = ssub.s32 %s9, 2
      %s22 = sadd.s32 1, %s17
      %p23 = scmp.ge.s32.totalorder %s22, 2
      %s24 = scalar_select %p23, 0, %s22
      %s25 = sadd.s32 1, %s16
      %s26 = scalar_select %p23, %s25, %s16
      %p27 = scmp.ge.s32.totalorder %s26, 2
      %s28 = scalar_select %p27, 0, %s26
      %s29 = ssub.s32 %s16, %s28
      %s30 = ssub.s32 %s17, %s24
      %s31 = sor.u32 %s29, %s30
      %p32 = scmp.eq.s32.totalorder %s31, 0
      %s34 = sadd.s32 %s33, 1
      %s35 = scalar_select %p32, %s33, %s34
      %p38 = pneg %p32
      %p39 = scmp.eq.s32.totalorder %s9, 3
      %p40 = por %p38, %p39
      %p41 = scmp.ne.s32.totalorder %s33, %s36
      %p42 = scmp.eq.s32.totalorder %s9, 0
      %p43 = por %p41, %p42
      %p44 = scmp.ne.s32.totalorder %s33, %s36
      %p45 = scmp.eq.s32.totalorder %s14, 3
      %p46 = por %p44, %p45
      %p47 = scmp.ne.s32.totalorder %s36, %s37
      %p48 = scmp.eq.s32.totalorder %s14, 0
      %p49 = por %p47, %p48
      %p50 = scmp.ne.s32.totalorder %s36, %s37
      %p51 = scmp.eq.s32.totalorder %s15, 3
      %p52 = por %p50, %p51
      %p54 = scmp.ne.s32.totalorder %s37, %s53
      %p55 = scmp.eq.s32.totalorder %s15, 0
      %p56 = por %p54, %p55
      %s57 = ssub.s32 %s16, %s28
      %p58 = scmp.eq.s32.totalorder %s57, 0
      %s60 = sadd.s32 %s59, 1
      %s61 = scalar_select %p58, %s59, %s60
      %p64 = pneg %p58
      %p65 = scmp.eq.s32.totalorder %s9, 3
      %p66 = por %p64, %p65
      %p67 = scmp.ne.s32.totalorder %s59, %s62
      %p68 = scmp.eq.s32.totalorder %s9, 0
      %p69 = por %p67, %p68
      %p70 = scmp.ne.s32.totalorder %s59, %s62
      %p71 = scmp.eq.s32.totalorder %s14, 3
      %p72 = por %p70, %p71
      %p73 = scmp.ne.s32.totalorder %s62, %s63
      %p74 = scmp.eq.s32.totalorder %s14, 0
      %p75 = por %p73, %p74
      %p76 = scmp.ne.s32.totalorder %s62, %s63
      %p77 = scmp.eq.s32.totalorder %s15, 3
      %p78 = por %p76, %p77
      %p80 = scmp.ne.s32.totalorder %s63, %s79
      %p81 = scmp.eq.s32.totalorder %s15, 0
      %p82 = por %p80, %p81
      %s83 = ssub.s32 %s16, %s28
      %p84 = scmp.eq.s32.totalorder %s83, 0
      %s86 = sadd.s32 %s85, 1
      %s87 = scalar_select %p84, %s85, %s86
      %p90 = pneg %p84
      %p91 = scmp.eq.s32.totalorder %s9, 3
      %p92 = por %p90, %p91
      %p93 = scmp.ne.s32.totalorder %s85, %s88
      %p94 = scmp.eq.s32.totalorder %s9, 0
      %p95 = por %p93, %p94
      %p96 = scmp.ne.s32.totalorder %s85, %s88
      %p97 = scmp.eq.s32.totalorder %s14, 3
      %p98 = por %p96, %p97
      %p99 = scmp.ne.s32.totalorder %s88, %s89
      %p100 = scmp.eq.s32.totalorder %s14, 0
      %p101 = por %p99, %p100
      %p102 = scmp.ne.s32.totalorder %s88, %s89
      %p103 = scmp.eq.s32.totalorder %s15, 3
      %p104 = por %p102, %p103
      %p106 = scmp.ne.s32.totalorder %s89, %s105
      %p107 = scmp.eq.s32.totalorder %s15, 0
      %p108 = por %p106, %p107
      %s109 = ssub.s32 %s16, %s28
      %s110 = ssub.s32 %s17, %s24
      %s111 = sor.u32 %s109, %s110
      %p112 = scmp.eq.s32.totalorder %s111, 0
      %s114 = sadd.s32 %s113, 1
      %s115 = scalar_select %p112, %s113, %s114
      %p118 = pneg %p112
      %p119 = scmp.eq.s32.totalorder %s9, 3
      %p120 = por %p118, %p119
      %p121 = scmp.ne.s32.totalorder %s113, %s116
      %p122 = scmp.eq.s32.totalorder %s9, 0
      %p123 = por %p121, %p122
      %p124 = scmp.ne.s32.totalorder %s113, %s116
      %p125 = scmp.eq.s32.totalorder %s14, 3
      %p126 = por %p124, %p125
      %p127 = scmp.ne.s32.totalorder %s116, %s117
      %p128 = scmp.eq.s32.totalorder %s14, 0
      %p129 = por %p127, %p128
      %p130 = scmp.ne.s32.totalorder %s116, %s117
      %p131 = scmp.eq.s32.totalorder %s15, 3
      %p132 = por %p130, %p131
      %p134 = scmp.ne.s32.totalorder %s117, %s133
      %p135 = scmp.eq.s32.totalorder %s15, 0
      %p136 = por %p134, %p135
      %p137 = scmp.le.s32.totalorder 1, %s9
      %p138 = scmp.lt.s32.totalorder %s9, 5
      %p139 = pnand %p137, %p138
      %p140 = pneg %p139
      // Predicated region
      $region9: #{discriminator_forward.18} parent=5 // pred_check
        _
      $region10: #{discriminator_forward.18} parent=5 // pred_check_branch
        %142 = sbr.rel (%p139) target = $region12
      $region11: #{discriminator_forward.18} parent=5 // pred_region
        %s143 = ssub.s32 %s9, 1
      $region12: #{discriminator_forward.18} parent=5 // pred_fallthru
        _
      %p144 = scmp.lt.s32.totalorder %s9, 4
      // Predicated region
      $region13: #{discriminator_forward.18} parent=5 // pred_check
        %p145 = pneg %p144
      $region14: #{discriminator_forward.18} parent=5 // pred_check_branch
        %147 = sbr.rel (%p145) target = $region16
      $region15: #{discriminator_forward.18} parent=5 // pred_region
        // Predicated region
        $region17: #{discriminator_forward.18} parent=15 // pred_check
          %p148 = pneg %p43
        $region18: #{discriminator_forward.18} parent=15 // pred_check_branch
          %150 = sbr.rel (%p148) target = $region20
        $region19: #{discriminator_forward.18} parent=15 // pred_region
          %s151 = sand.u32 %s33, 1
          %s152 = sand.u32 %s33, 1
          %s153 = smul.addr %s152, 16
          %s154 = scalar_lea.vmem [#allocation2], %s153
          %s155 = smul.addr %s16, 4
          %s156 = sadd.s32 %s17, %s155
          %s157 = smul.addr %s156, 8
          %s158 = scalar_lea.vmem %s0, %s157
          // Predicated region
          $region21: #{discriminator_forward.18} parent=19 // pred_check
            _
          $region22: #{discriminator_forward.18} parent=19 // pred_check_branch
            %160 = sbr.rel (0) target = $region24
          $region23: #{discriminator_forward.18} parent=19 // pred_region
            // Predicated region
            $region25: #{discriminator_forward.18} parent=23 // pred_check
              _
            $region26: #{discriminator_forward.18} parent=23 // pred_check_branch
              %162 = sbr.rel (0) target = $region28
            $region27: #{discriminator_forward.18} parent=23 // pred_region
              // Predicated region
              $region40: #{discriminator_forward.18} parent=27 // pred_check
                _
              $region41: #{discriminator_forward.18} parent=27 // pred_check_branch
                %180 = sbr.rel (0) target = $region43
              $region42: #{discriminator_forward.18} parent=27 // pred_region
                loop: start=0, step=1, limit=1
                $region44: #{discriminator_forward.18} parent=42 // loop_pre_header
                  _
                $region45: #{discriminator_forward.18} parent=42 // loop_header
                  %s182 = sphi 0, %s186
                  %p183 = scmp.ge.s32.totalorder %s182, 1
                  %s187 = sphi %s158, %s158
                  %s188 = sphi %s154, %s154
                $region46: #{discriminator_forward.18} parent=42 // loop_header_branch
                  %185 = sbr.rel (%p183) target = $region50
                $region47: #{discriminator_forward.18} parent=42 // loop_body
                  %v189 = vld [vmem:[%s187] sm:$0xff]
                  %190 = vst [vmem:[%s188] sm:$0xff] %v189
                  %v191 = vld [vmem:[%s187 + $0x10] sm:$0xff]
                  %192 = vst [vmem:[%s188 + $0x8] sm:$0xff] %v191
                $region48: #{discriminator_forward.18} parent=42 // loop_footer
                  %s186 = sadd.s32 1, %s182
                $region49: #{discriminator_forward.18} parent=42 // loop_footer_branch
                  %181 = sbr.rel target = $region45
                $region50: #{discriminator_forward.18} parent=42 // loop_exit
                  _
              $region43: #{discriminator_forward.18} parent=27 // pred_fallthru
                _
              // Predicated region
              $region51: #{discriminator_forward.18} parent=27 // pred_check
                _
              $region52: #{discriminator_forward.18} parent=27 // pred_check_branch
                %194 = sbr.rel target = $region54
              $region53: #{discriminator_forward.18} parent=27 // pred_region
                _
              $region54: #{discriminator_forward.18} parent=27 // pred_fallthru
                _
            $region28: #{discriminator_forward.18} parent=23 // pred_fallthru
              _
            // Predicated region
            $region29: #{discriminator_forward.18} parent=23 // pred_check
              _
            $region30: #{discriminator_forward.18} parent=23 // pred_check_branch
              %164 = sbr.rel target = $region32
            $region31: #{discriminator_forward.18} parent=23 // pred_region
              %s166 = ssub.s32 256, 1
              loop: start=0, step=1, limit=1
              $region33: #{discriminator_forward.18} parent=31 // loop_pre_header
                _
              $region34: #{discriminator_forward.18} parent=31 // loop_header
                %s168 = sphi 0, %s172
                %p169 = scmp.ge.s32.totalorder %s168, 1
                %s173 = sphi %s158, %s158
                %s174 = sphi %s154, %s154
              $region35: #{discriminator_forward.18} parent=31 // loop_header_branch
                %171 = sbr.rel (%p169) target = $region39
              $region36: #{discriminator_forward.18} parent=31 // loop_body
                %v175 = vld [vmem:[%s173] sm:%s166]
                %176 = vst [vmem:[%s174] sm:%s166] %v175
                %v177 = vld [vmem:[%s173 + $0x10] sm:%s166]
                %178 = vst [vmem:[%s174 + $0x8] sm:%s166] %v177
              $region37: #{discriminator_forward.18} parent=31 // loop_footer
                %s172 = sadd.s32 1, %s168
              $region38: #{discriminator_forward.18} parent=31 // loop_footer_branch
                %167 = sbr.rel target = $region34
              $region39: #{discriminator_forward.18} parent=31 // loop_exit
                _
            $region32: #{discriminator_forward.18} parent=23 // pred_fallthru
              _
          $region24: #{discriminator_forward.18} parent=19 // pred_fallthru
            _
          %195 = vnop
        $region20: #{discriminator_forward.18} parent=15 // pred_fallthru
          _
        // Predicated region
        $region55: #{discriminator_forward.18} parent=15 // pred_check
          %p196 = pneg %p69
        $region56: #{discriminator_forward.18} parent=15 // pred_check_branch
          %198 = sbr.rel (%p196) target = $region58
        $region57: #{discriminator_forward.18} parent=15 // pred_region
          %p199 = scmp.lt.s32.totalorder %s16, 1
          %s200 = scalar_select %p199, %s16, 1
          %s201 = smul.addr %s200, 2
          %s202 = smul.addr %s201, 8
          %s203 = scalar_lea.vmem %s1, %s202
        $region58: #{discriminator_forward.18} parent=15 // pred_fallthru
          _
        // Predicated region
        $region59: #{discriminator_forward.18} parent=15 // pred_check
          %p204 = pneg %p95
        $region60: #{discriminator_forward.18} parent=15 // pred_check_branch
          %206 = sbr.rel (%p204) target = $region62
        $region61: #{discriminator_forward.18} parent=15 // pred_region
          %p207 = scmp.lt.s32.totalorder %s16, 1
          %s208 = scalar_select %p207, %s16, 1
          %s209 = smul.addr %s208, 2
          %s210 = smul.addr %s209, 8
          %s211 = scalar_lea.vmem %s2, %s210
        $region62: #{discriminator_forward.18} parent=15 // pred_fallthru
          _
      $region16: #{discriminator_forward.18} parent=5 // pred_fallthru
        _
      %p212 = scmp.le.s32.totalorder 1, %s9
      %p213 = scmp.lt.s32.totalorder %s9, 5
      %p214 = pnand %p212, %p213
      %p215 = pneg %p214
      // Predicated region
      $region63: #{discriminator_forward.18} parent=5 // pred_check
        _
      $region64: #{discriminator_forward.18} parent=5 // pred_check_branch
        %217 = sbr.rel (%p214) target = $region66
      $region65: #{discriminator_forward.18} parent=5 // pred_region
        %s218 = ssub.s32 %s9, 1
        %s219 = sand.u32 %s36, 1
        %s220 = sand.u32 %s36, 1
        %s221 = smul.addr %s220, 16
        %s222 = scalar_lea.vmem [#allocation2], %s221
        // Predicated region
        $region67: #{discriminator_forward.18} parent=65 // pred_check
          %p223 = pneg %p49
        $region68: #{discriminator_forward.18} parent=65 // pred_check_branch
          %225 = sbr.rel (%p223) target = $region70
        $region69: #{discriminator_forward.18} parent=65 // pred_region
          _
        $region70: #{discriminator_forward.18} parent=65 // pred_fallthru
          _
        %s226 = sand.u32 %s36, 1
        %s227 = sand.u32 %s36, 1
        %s228 = smul.addr %s227, 16
        %s229 = scalar_lea.vmem [#allocation2], %s228
        %p230 = pneg %p49
        %p231 = pneg %p46
        %p232 = scmp.lt.s32.totalorder %s18, 1
        %s233 = scalar_select %p232, %s18, 1
        %s234 = smul.addr %s233, 2
        %s235 = smul.addr %s234, 8
        %s236 = scalar_lea.vmem %s1, %s235
        %p237 = pneg %p75
        %p238 = pneg %p72
        %p239 = scmp.lt.s32.totalorder %s18, 1
        %s240 = scalar_select %p239, %s18, 1
        %s241 = smul.addr %s240, 2
        %s242 = smul.addr %s241, 8
        %s243 = scalar_lea.vmem %s2, %s242
        %p244 = pneg %p101
        %p245 = pneg %p98
        %p246 = pneg %p129
        %p247 = pneg %p126
        %s248 = sand.u32 %s116, 1
        %s249 = sand.u32 %s116, 1
        %s250 = smul.addr %s249, 16
        %s251 = scalar_lea.vmem [#allocation3], %s250
        %p252 = scmp.lt.s32.totalorder %s18, 1
        %s253 = scalar_select %p252, %s18, 1
        %s254 = smul.addr %s253, 2
        %s255 = smul.addr %s254, 8
        %s256 = scalar_lea.vmem %s1, %s255
        %p257 = scmp.lt.s32.totalorder %s18, 1
        %s258 = scalar_select %p257, %s18, 1
        %s259 = smul.addr %s258, 2
        %s260 = smul.addr %s259, 8
        %s261 = scalar_lea.vmem %s2, %s260
        %v262 = vld [vmem:[%s222] sm:$0xff]
        %v263 = vld [vmem:[%s222 + $0x8] sm:$0xff]
        %v264 = vld [vmem:[%s256] sm:$0xff]
        %v265 = vld [vmem:[%s256 + $0x8] sm:$0xff]
        %267 = vset.pattern.permute.xlu0 0
        %268 = vperm.xlu0 %267, %v264
        %v269 = vpop.permute.xlu0 %268
        %272 = vset.pattern.permute.xlu0 0
        %273 = vperm.xlu0 %272, %v265
        %v274 = vpop.permute.xlu0 %273
        %v276 = vmul.f32 %v262, %v269
        %v277 = vmul.f32 %v263, %v274
        %v278 = vld [vmem:[%s261] sm:$0xff]
        %v279 = vld [vmem:[%s261 + $0x8] sm:$0xff]
        %281 = vset.pattern.permute.xlu0 0
        %282 = vperm.xlu0 %281, %v278
        %v283 = vpop.permute.xlu0 %282
        %286 = vset.pattern.permute.xlu0 0
        %287 = vperm.xlu0 %286, %v279
        %v288 = vpop.permute.xlu0 %287
        %v290 = vadd.f32 %v276, %v283
        %v291 = vadd.f32 %v277, %v288
        %292 = vst [vmem:[%s251] sm:$0xff] %v290
        %293 = vst [vmem:[%s251 + $0x8] sm:$0xff] %v291
        %s294 = sand.u32 %s116, 1
        %s295 = sand.u32 %s116, 1
        %s296 = smul.addr %s295, 16
        %s297 = scalar_lea.vmem [#allocation3], %s296
        // Predicated region
        $region71: #{discriminator_forward.18} parent=65 // pred_check
          %p298 = pneg %p126
        $region72: #{discriminator_forward.18} parent=65 // pred_check_branch
          %300 = sbr.rel (%p298) target = $region74
        $region73: #{discriminator_forward.18} parent=65 // pred_region
          %s301 = smul.addr %s18, 4
          %s302 = sadd.s32 %s19, %s301
          %s303 = smul.addr %s302, 8
          %s304 = scalar_lea.vmem %s3, %s303
          // Predicated region
          $region75: #{discriminator_forward.18} parent=73 // pred_check
            _
          $region76: #{discriminator_forward.18} parent=73 // pred_check_branch
            %306 = sbr.rel (0) target = $region78
          $region77: #{discriminator_forward.18} parent=73 // pred_region
            // Predicated region
            $region79: #{discriminator_forward.18} parent=77 // pred_check
              _
            $region80: #{discriminator_forward.18} parent=77 // pred_check_branch
              %308 = sbr.rel (0) target = $region82
            $region81: #{discriminator_forward.18} parent=77 // pred_region
              // Predicated region
              $region94: #{discriminator_forward.18} parent=81 // pred_check
                _
              $region95: #{discriminator_forward.18} parent=81 // pred_check_branch
                %326 = sbr.rel (0) target = $region97
              $region96: #{discriminator_forward.18} parent=81 // pred_region
                loop: start=0, step=1, limit=1
                $region98: #{discriminator_forward.18} parent=96 // loop_pre_header
                  _
                $region99: #{discriminator_forward.18} parent=96 // loop_header
                  %s328 = sphi 0, %s332
                  %p329 = scmp.ge.s32.totalorder %s328, 1
                  %s333 = sphi %s297, %s297
                  %s334 = sphi %s304, %s304
                $region100: #{discriminator_forward.18} parent=96 // loop_header_branch
                  %331 = sbr.rel (%p329) target = $region104
                $region101: #{discriminator_forward.18} parent=96 // loop_body
                  %v335 = vld [vmem:[%s333] sm:$0xff]
                  %336 = vst [vmem:[%s334] sm:$0xff] %v335
                  %v337 = vld [vmem:[%s333 + $0x8] sm:$0xff]
                  %338 = vst [vmem:[%s334 + $0x10] sm:$0xff] %v337
                $region102: #{discriminator_forward.18} parent=96 // loop_footer
                  %s332 = sadd.s32 1, %s328
                $region103: #{discriminator_forward.18} parent=96 // loop_footer_branch
                  %327 = sbr.rel target = $region99
                $region104: #{discriminator_forward.18} parent=96 // loop_exit
                  _
              $region97: #{discriminator_forward.18} parent=81 // pred_fallthru
                _
              // Predicated region
              $region105: #{discriminator_forward.18} parent=81 // pred_check
                _
              $region106: #{discriminator_forward.18} parent=81 // pred_check_branch
                %340 = sbr.rel target = $region108
              $region107: #{discriminator_forward.18} parent=81 // pred_region
                _
              $region108: #{discriminator_forward.18} parent=81 // pred_fallthru
                _
            $region82: #{discriminator_forward.18} parent=77 // pred_fallthru
              _
            // Predicated region
            $region83: #{discriminator_forward.18} parent=77 // pred_check
              _
            $region84: #{discriminator_forward.18} parent=77 // pred_check_branch
              %310 = sbr.rel target = $region86
            $region85: #{discriminator_forward.18} parent=77 // pred_region
              %s312 = ssub.s32 256, 1
              loop: start=0, step=1, limit=1
              $region87: #{discriminator_forward.18} parent=85 // loop_pre_header
                _
              $region88: #{discriminator_forward.18} parent=85 // loop_header
                %s314 = sphi 0, %s318
                %p315 = scmp.ge.s32.totalorder %s314, 1
                %s319 = sphi %s297, %s297
                %s320 = sphi %s304, %s304
              $region89: #{discriminator_forward.18} parent=85 // loop_header_branch
                %317 = sbr.rel (%p315) target = $region93
              $region90: #{discriminator_forward.18} parent=85 // loop_body
                %v321 = vld [vmem:[%s319] sm:%s312]
                %322 = vst [vmem:[%s320] sm:%s312] %v321
                %v323 = vld [vmem:[%s319 + $0x8] sm:%s312]
                %324 = vst [vmem:[%s320 + $0x10] sm:%s312] %v323
              $region91: #{discriminator_forward.18} parent=85 // loop_footer
                %s318 = sadd.s32 1, %s314
              $region92: #{discriminator_forward.18} parent=85 // loop_footer_branch
                %313 = sbr.rel target = $region88
              $region93: #{discriminator_forward.18} parent=85 // loop_exit
                _
            $region86: #{discriminator_forward.18} parent=77 // pred_fallthru
              _
          $region78: #{discriminator_forward.18} parent=73 // pred_fallthru
            _
          %341 = vnop
        $region74: #{discriminator_forward.18} parent=65 // pred_fallthru
          _
      $region66: #{discriminator_forward.18} parent=5 // pred_fallthru
        _
      %p342 = scmp.le.s32.totalorder 2, %s9
      // Predicated region
      $region109: #{discriminator_forward.18} parent=5 // pred_check
        %p343 = pneg %p342
      $region110: #{discriminator_forward.18} parent=5 // pred_check_branch
        %345 = sbr.rel (%p343) target = $region112
      $region111: #{discriminator_forward.18} parent=5 // pred_region
        %s346 = ssub.s32 %s9, 2
        // Predicated region
        $region113: #{discriminator_forward.18} parent=111 // pred_check
          %p347 = pneg %p132
        $region114: #{discriminator_forward.18} parent=111 // pred_check_branch
          %349 = sbr.rel (%p347) target = $region116
        $region115: #{discriminator_forward.18} parent=111 // pred_region
          %s350 = sand.u32 %s117, 1
          %s351 = sand.u32 %s117, 1
          %s352 = smul.addr %s351, 16
          %s353 = scalar_lea.vmem [#allocation3], %s352
        $region116: #{discriminator_forward.18} parent=111 // pred_fallthru
          _
      $region112: #{discriminator_forward.18} parent=5 // pred_fallthru
        _
    $region6: #{discriminator_forward.18} parent=1 // loop_footer
      %s13 = sadd.s32 1, %s9
    $region7: #{discriminator_forward.18} parent=1 // loop_footer_branch
      %8 = sbr.rel target = $region3
    $region8: #{discriminator_forward.18} parent=1 // loop_exit
      _

// kernel: discriminator_forward.19
$region0: #{discriminator_forward.19}
  #allocation0 [shape = 'u32[]', space=smem, size = 0x4, offset = 0x4, fixed_abs, tag = 'smem constant byte address 0x4 - core index']
  #allocation1 [shape = 'u32[144,128]{1,0:T(1,128)}', space=vmem, size = 0x12000, scoped, tag = 'internal scratch']
  %s0 = inlined_call_operand.vmem [shape: bf16[2,256,128], index: 0, kind: input, shape index: {}]
  %s1 = inlined_call_operand.vmem [shape: bf16[32,256], index: 1, kind: input, shape index: {}]
  %s2 = inlined_call_operand.vmem [shape: f32[2,32,128], index: 2, kind: output, shape index: {0}]
  %s3 = inlined_call_operand.vmem [shape: f32[2,32,1], index: 3, kind: output, shape index: {1}]
  %s4 = inlined_call_operand.vmem [shape: f32[2,32,1], index: 4, kind: output, shape index: {2}]
  %5 = xla_tuple %s2, %s3, %s4
  %s6 = sld [smem:[#allocation0]]
  $region61: #{discriminator_forward.19} parent=0
    _
  %s8 = ssub.s32 1, %s6
  %s9 = scalar_select 0, %s8, %s6
  loop: start=0, step=1, limit=4
  $region2: #{discriminator_forward.19} parent=0 // loop_pre_header
    _
  $region3: #{discriminator_forward.19} parent=0 // loop_header
    %s11 = sphi 0, %s15
    %p12 = scmp.ge.s32.totalorder %s11, 4
    %s18 = sphi 0, %s30
    %s19 = sphi 0, %s26
    %s20 = sphi 0, %s18
    %s21 = sphi 0, %s19
    %s22 = sphi 0, %s20
    %s23 = sphi 0, %s21
    %s35 = sphi 0, %s37
    %s38 = sphi 0, %s35
    %s39 = sphi 0, %s38
    %s55 = sphi 0, %s39
    %s59 = sphi 0, %s59
    %s61 = sphi 0, %s59
    %s62 = sphi 0, %s61
    %s76 = sphi 0, %s62
    %s84 = sphi 0, %s86
    %s87 = sphi 0, %s84
    %s88 = sphi 0, %s87
    %s104 = sphi 0, %s88
    %s110 = sphi 0, %s112
    %s113 = sphi 0, %s110
    %s114 = sphi 0, %s113
    %s130 = sphi 0, %s114
    %s136 = sphi 0, %s138
    %s139 = sphi 0, %s136
    %s140 = sphi 0, %s139
    %s156 = sphi 0, %s140
  $region4: #{discriminator_forward.19} parent=0 // loop_header_branch
    %14 = sbr.rel (%p12) target = $region8
  $region5: #{discriminator_forward.19} parent=0 // loop_body
    %s16 = ssub.s32 %s11, 1
    %s17 = ssub.s32 %s11, 2
    %s24 = sadd.s32 1, %s19
    %p25 = scmp.ge.s32.totalorder %s24, 1
    %s26 = scalar_select %p25, 0, %s24
    %s27 = sadd.s32 1, %s18
    %s28 = scalar_select %p25, %s27, %s18
    %p29 = scmp.ge.s32.totalorder %s28, 2
    %s30 = scalar_select %p29, 0, %s28
    %s31 = ssub.s32 %s18, %s30
    %s32 = ssub.s32 %s19, %s26
    %s33 = sor.u32 %s31, %s32
    %p34 = scmp.eq.s32.totalorder %s33, 0
    %s36 = sadd.s32 %s35, 1
    %s37 = scalar_select %p34, %s35, %s36
    %p40 = pneg %p34
    %p41 = scmp.eq.s32.totalorder %s11, 1
    %p42 = por %p40, %p41
    %p43 = scmp.ne.s32.totalorder %s35, %s38
    %p44 = scmp.eq.s32.totalorder %s11, 0
    %p45 = por %p43, %p44
    %p46 = scmp.ne.s32.totalorder %s35, %s38
    %p47 = scmp.eq.s32.totalorder %s16, 1
    %p48 = por %p46, %p47
    %p49 = scmp.ne.s32.totalorder %s38, %s39
    %p50 = scmp.eq.s32.totalorder %s16, 0
    %p51 = por %p49, %p50
    %p52 = scmp.ne.s32.totalorder %s38, %s39
    %p53 = scmp.eq.s32.totalorder %s17, 1
    %p54 = por %p52, %p53
    %p56 = scmp.ne.s32.totalorder %s39, %s55
    %p57 = scmp.eq.s32.totalorder %s17, 0
    %p58 = por %p56, %p57
    %s60 = sadd.s32 %s59, 1
    %p63 = scmp.eq.s32.totalorder %s11, 1
    %p64 = scmp.ne.s32.totalorder %s59, %s61
    %p65 = scmp.eq.s32.totalorder %s11, 0
    %p66 = por %p64, %p65
    %p67 = scmp.ne.s32.totalorder %s59, %s61
    %p68 = scmp.eq.s32.totalorder %s16, 1
    %p69 = por %p67, %p68
    %p70 = scmp.ne.s32.totalorder %s61, %s62
    %p71 = scmp.eq.s32.totalorder %s16, 0
    %p72 = por %p70, %p71
    %p73 = scmp.ne.s32.totalorder %s61, %s62
    %p74 = scmp.eq.s32.totalorder %s17, 1
    %p75 = por %p73, %p74
    %p77 = scmp.ne.s32.totalorder %s62, %s76
    %p78 = scmp.eq.s32.totalorder %s17, 0
    %p79 = por %p77, %p78
    %s80 = ssub.s32 %s18, %s30
    %s81 = ssub.s32 %s19, %s26
    %s82 = sor.u32 %s80, %s81
    %p83 = scmp.eq.s32.totalorder %s82, 0
    %s85 = sadd.s32 %s84, 1
    %s86 = scalar_select %p83, %s84, %s85
    %p89 = pneg %p83
    %p90 = scmp.eq.s32.totalorder %s11, 1
    %p91 = por %p89, %p90
    %p92 = scmp.ne.s32.totalorder %s84, %s87
    %p93 = scmp.eq.s32.totalorder %s11, 0
    %p94 = por %p92, %p93
    %p95 = scmp.ne.s32.totalorder %s84, %s87
    %p96 = scmp.eq.s32.totalorder %s16, 1
    %p97 = por %p95, %p96
    %p98 = scmp.ne.s32.totalorder %s87, %s88
    %p99 = scmp.eq.s32.totalorder %s16, 0
    %p100 = por %p98, %p99
    %p101 = scmp.ne.s32.totalorder %s87, %s88
    %p102 = scmp.eq.s32.totalorder %s17, 1
    %p103 = por %p101, %p102
    %p105 = scmp.ne.s32.totalorder %s88, %s104
    %p106 = scmp.eq.s32.totalorder %s17, 0
    %p107 = por %p105, %p106
    %s108 = ssub.s32 %s18, %s30
    %p109 = scmp.eq.s32.totalorder %s108, 0
    %s111 = sadd.s32 %s110, 1
    %s112 = scalar_select %p109, %s110, %s111
    %p115 = pneg %p109
    %p116 = scmp.eq.s32.totalorder %s11, 1
    %p117 = por %p115, %p116
    %p118 = scmp.ne.s32.totalorder %s110, %s113
    %p119 = scmp.eq.s32.totalorder %s11, 0
    %p120 = por %p118, %p119
    %p121 = scmp.ne.s32.totalorder %s110, %s113
    %p122 = scmp.eq.s32.totalorder %s16, 1
    %p123 = por %p121, %p122
    %p124 = scmp.ne.s32.totalorder %s113, %s114
    %p125 = scmp.eq.s32.totalorder %s16, 0
    %p126 = por %p124, %p125
    %p127 = scmp.ne.s32.totalorder %s113, %s114
    %p128 = scmp.eq.s32.totalorder %s17, 1
    %p129 = por %p127, %p128
    %p131 = scmp.ne.s32.totalorder %s114, %s130
    %p132 = scmp.eq.s32.totalorder %s17, 0
    %p133 = por %p131, %p132
    %s134 = ssub.s32 %s18, %s30
    %p135 = scmp.eq.s32.totalorder %s134, 0
    %s137 = sadd.s32 %s136, 1
    %s138 = scalar_select %p135, %s136, %s137
    %p141 = pneg %p135
    %p142 = scmp.eq.s32.totalorder %s11, 1
    %p143 = por %p141, %p142
    %p144 = scmp.ne.s32.totalorder %s136, %s139
    %p145 = scmp.eq.s32.totalorder %s11, 0
    %p146 = por %p144, %p145
    %p147 = scmp.ne.s32.totalorder %s136, %s139
    %p148 = scmp.eq.s32.totalorder %s16, 1
    %p149 = por %p147, %p148
    %p150 = scmp.ne.s32.totalorder %s139, %s140
    %p151 = scmp.eq.s32.totalorder %s16, 0
    %p152 = por %p150, %p151
    %p153 = scmp.ne.s32.totalorder %s139, %s140
    %p154 = scmp.eq.s32.totalorder %s17, 1
    %p155 = por %p153, %p154
    %p157 = scmp.ne.s32.totalorder %s140, %s156
    %p158 = scmp.eq.s32.totalorder %s17, 0
    %p159 = por %p157, %p158
    %p160 = scmp.le.s32.totalorder 1, %s11
    %p161 = scmp.lt.s32.totalorder %s11, 3
    %p162 = pnand %p160, %p161
    %p163 = pneg %p162
    // Predicated region
    $region9: #{discriminator_forward.19} parent=5 // pred_check
      _
    $region10: #{discriminator_forward.19} parent=5 // pred_check_branch
      %165 = sbr.rel (%p162) target = $region12
    $region11: #{discriminator_forward.19} parent=5 // pred_region
      %s166 = ssub.s32 %s11, 1
      // Predicated region
      $region13: #{discriminator_forward.19} parent=11 // pred_check
        %p167 = pneg %p72
      $region14: #{discriminator_forward.19} parent=11 // pred_check_branch
        %169 = sbr.rel (%p167) target = $region16
      $region15: #{discriminator_forward.19} parent=11 // pred_region
        _
      $region16: #{discriminator_forward.19} parent=11 // pred_fallthru
        _
    $region12: #{discriminator_forward.19} parent=5 // pred_fallthru
      _
    %p170 = scmp.lt.s32.totalorder %s11, 2
    // Predicated region
    $region17: #{discriminator_forward.19} parent=5 // pred_check
      %p171 = pneg %p170
    $region18: #{discriminator_forward.19} parent=5 // pred_check_branch
      %173 = sbr.rel (%p171) target = $region20
    $region19: #{discriminator_forward.19} parent=5 // pred_region
      // Predicated region
      $region21: #{discriminator_forward.19} parent=19 // pred_check
        %p174 = pneg %p45
      $region22: #{discriminator_forward.19} parent=19 // pred_check_branch
        %176 = sbr.rel (%p174) target = $region24
      $region23: #{discriminator_forward.19} parent=19 // pred_region
        %p177 = scmp.lt.s32.totalorder %s18, 1
        %s178 = scalar_select %p177, %s18, 1
        %p179 = scmp.lt.s32.totalorder %s19, 0
        %s180 = scalar_select %p179, %s19, 0
        %s181 = smul.addr %s178, 32
        %s182 = sadd.s32 %s180, %s181
        %s183 = smul.addr %s182, 4
        %s184 = scalar_lea.vmem %s0, %s183
      $region24: #{discriminator_forward.19} parent=19 // pred_fallthru
        _
    $region20: #{discriminator_forward.19} parent=5 // pred_fallthru
      _
    %p185 = scmp.le.s32.totalorder 1, %s11
    %p186 = scmp.lt.s32.totalorder %s11, 3
    %p187 = pnand %p185, %p186
    %p188 = pneg %p187
    // Predicated region
    $region25: #{discriminator_forward.19} parent=5 // pred_check
      _
    $region26: #{discriminator_forward.19} parent=5 // pred_check_branch
      %190 = sbr.rel (%p187) target = $region28
    $region27: #{discriminator_forward.19} parent=5 // pred_region
      %s191 = ssub.s32 %s11, 1
      %p192 = scmp.lt.s32.totalorder %s20, 1
      %s193 = scalar_select %p192, %s20, 1
      %p194 = scmp.lt.s32.totalorder %s21, 0
      %s195 = scalar_select %p194, %s21, 0
      %s196 = smul.addr %s193, 32
      %s197 = sadd.s32 %s195, %s196
      %s198 = smul.addr %s197, 4
      %s199 = scalar_lea.vmem %s0, %s198
      %p200 = pneg %p51
      %p201 = pneg %p48
      %p202 = pneg %p72
      %p203 = pneg %p69
      %p204 = pneg %p100
      %p205 = pneg %p97
      %p206 = scmp.lt.s32.totalorder %s20, 1
      %s207 = scalar_select %p206, %s20, 1
      %p208 = scmp.lt.s32.totalorder %s21, 0
      %s209 = scalar_select %p208, %s21, 0
      %s210 = smul.addr %s207, 4
      %s211 = sadd.s32 %s209, %s210
      %s212 = smul.addr %s211, 8
      %s213 = scalar_lea.vmem %s2, %s212
      %p214 = pneg %p126
      %p215 = pneg %p123
      %p216 = scmp.lt.s32.totalorder %s20, 1
      %s217 = scalar_select %p216, %s20, 1
      %s218 = smul.addr %s217, 4
      %s219 = smul.addr %s218, 8
      %s220 = scalar_lea.vmem %s3, %s219
      %p221 = pneg %p152
      %p222 = pneg %p149
      %p223 = scmp.lt.s32.totalorder %s20, 1
      %s224 = scalar_select %p223, %s20, 1
      %s225 = smul.addr %s224, 4
      %s226 = smul.addr %s225, 8
      %s227 = scalar_lea.vmem %s4, %s226
      %p228 = scmp.lt.s32.totalorder %s20, 1
      %s229 = scalar_select %p228, %s20, 1
      %p230 = scmp.lt.s32.totalorder %s21, 0
      %s231 = scalar_select %p230, %s21, 0
      %s232 = smul.addr %s229, 32
      %s233 = sadd.s32 %s231, %s232
      %s234 = smul.addr %s233, 4
      %s235 = scalar_lea.vmem %s0, %s234
      %p236 = scmp.lt.s32.totalorder %s20, 1
      %s237 = scalar_select %p236, %s20, 1
      %p238 = scmp.lt.s32.totalorder %s21, 0
      %s239 = scalar_select %p238, %s21, 0
      %s240 = smul.addr %s237, 4
      %s241 = sadd.s32 %s239, %s240
      %s242 = smul.addr %s241, 8
      %s243 = scalar_lea.vmem %s2, %s242
      %p244 = scmp.lt.s32.totalorder %s20, 1
      %s245 = scalar_select %p244, %s20, 1
      %s246 = smul.addr %s245, 4
      %s247 = smul.addr %s246, 8
      %s248 = scalar_lea.vmem %s3, %s247
      %p249 = scmp.lt.s32.totalorder %s20, 1
      %s250 = scalar_select %p249, %s20, 1
      %s251 = smul.addr %s250, 4
      %s252 = smul.addr %s251, 8
      %s253 = scalar_lea.vmem %s4, %s252
      %p255 = scmp.eq.s32.totalorder %s21, 0
      // Predicated region
      $region29: #{discriminator_forward.19} parent=27 // pred_check
        %p256 = pneg %p255
      $region30: #{discriminator_forward.19} parent=27 // pred_check_branch
        %258 = sbr.rel (%p256) target = $region32
      $region31: #{discriminator_forward.19} parent=27 // pred_region
        %vm259 = vcmask 7168
        %260 = vst.msk [vmem:[%s248] sm:$0xff] %vm259, 0.0
        %261 = vst.msk [vmem:[%s248 + $0x8] sm:$0xff] %vm259, 0.0
        %262 = vst.msk [vmem:[%s248 + $0x10] sm:$0xff] %vm259, 0.0
        %263 = vst.msk [vmem:[%s248 + $0x18] sm:$0xff] %vm259, 0.0
        %264 = vst.msk [vmem:[%s253] sm:$0xff] %vm259, 0.0
        %265 = vst.msk [vmem:[%s253 + $0x8] sm:$0xff] %vm259, 0.0
        %266 = vst.msk [vmem:[%s253 + $0x10] sm:$0xff] %vm259, 0.0
        %267 = vst.msk [vmem:[%s253 + $0x18] sm:$0xff] %vm259, 0.0
      $region32: #{discriminator_forward.19} parent=27 // pred_fallthru
        _
      %v268 = vld [vmem:[%s1] sm:$0xff]
      %v269 = vld [vmem:[%s1 + $0x8] sm:$0xff]
      %v270 = vld [vmem:[%s1 + $0x10] sm:$0xff]
      %v271 = vld [vmem:[%s1 + $0x18] sm:$0xff]
      %v272 = vld [vmem:[%s235] sm:$0xf]
      %v273 = vld [vmem:[%s235 + $0x4] sm:$0xf]
      %v274 = vld [vmem:[%s235 + $0x8] sm:$0xf]
      %v275 = vld [vmem:[%s235 + $0xc] sm:$0xf]
      %v276 = vld [vmem:[%s235 + $0x10] sm:$0xf]
      %v277 = vld [vmem:[%s235 + $0x14] sm:$0xf]
      %v278 = vld [vmem:[%s235 + $0x18] sm:$0xf]
      %v279 = vld [vmem:[%s235 + $0x1c] sm:$0xf]
      %v280 = vld [vmem:[%s235 + $0x20] sm:$0xf]
      %v281 = vld [vmem:[%s235 + $0x24] sm:$0xf]
      %v282 = vld [vmem:[%s235 + $0x28] sm:$0xf]
      %v283 = vld [vmem:[%s235 + $0x2c] sm:$0xf]
      %v284 = vld [vmem:[%s235 + $0x30] sm:$0xf]
      %v285 = vld [vmem:[%s235 + $0x34] sm:$0xf]
      %v286 = vld [vmem:[%s235 + $0x38] sm:$0xf]
      %v287 = vld [vmem:[%s235 + $0x3c] sm:$0xf]
      %v288 = vld [vmem:[%s235 + $0x40] sm:$0xf]
      %v289 = vld [vmem:[%s235 + $0x44] sm:$0xf]
      %v290 = vld [vmem:[%s235 + $0x48] sm:$0xf]
      %v291 = vld [vmem:[%s235 + $0x4c] sm:$0xf]
      %v292 = vld [vmem:[%s235 + $0x50] sm:$0xf]
      %v293 = vld [vmem:[%s235 + $0x54] sm:$0xf]
      %v294 = vld [vmem:[%s235 + $0x58] sm:$0xf]
      %v295 = vld [vmem:[%s235 + $0x5c] sm:$0xf]
      %v296 = vld [vmem:[%s235 + $0x60] sm:$0xf]
      %v297 = vld [vmem:[%s235 + $0x64] sm:$0xf]
      %v298 = vld [vmem:[%s235 + $0x68] sm:$0xf]
      %v299 = vld [vmem:[%s235 + $0x6c] sm:$0xf]
      %v300 = vld [vmem:[%s235 + $0x70] sm:$0xf]
      %v301 = vld [vmem:[%s235 + $0x74] sm:$0xf]
      %v302 = vld [vmem:[%s235 + $0x78] sm:$0xf]
      %v303 = vld [vmem:[%s235 + $0x7c] sm:$0xf]
      %v308 = vunpack.c.l.b16 %v268
      %v309 = vunpack.c.h.b16 %v268
      %v310 = vunpack.c.l.b16 %v269
      %v311 = vunpack.c.h.b16 %v269
      %v312 = vunpack.c.l.b16 %v270
      %v313 = vunpack.c.h.b16 %v270
      %v314 = vunpack.c.l.b16 %v271
      %v315 = vunpack.c.h.b16 %v271
      %v316 = vpack.c.b16 %v310, %v308
      %v317 = vpack.c.b16 %v311, %v309
      %v318 = vpack.c.b16 %v314, %v312
      %v319 = vpack.c.b16 %v315, %v313
      %v356 = vunpack.c.l.b16 %v272
      %v357 = vunpack.c.l.b16 %v273
      %v358 = vunpack.c.l.b16 %v274
      %v359 = vunpack.c.l.b16 %v275
      %v360 = vunpack.c.l.b16 %v276
      %v361 = vunpack.c.l.b16 %v277
      %v362 = vunpack.c.l.b16 %v278
      %v363 = vunpack.c.l.b16 %v279
      %v364 = vunpack.c.l.b16 %v280
      %v365 = vunpack.c.l.b16 %v281
      %v366 = vunpack.c.l.b16 %v282
      %v367 = vunpack.c.l.b16 %v283
      %v368 = vunpack.c.l.b16 %v284
      %v369 = vunpack.c.l.b16 %v285
      %v370 = vunpack.c.l.b16 %v286
      %v371 = vunpack.c.l.b16 %v287
      %v372 = vunpack.c.l.b16 %v288
      %v373 = vunpack.c.l.b16 %v289
      %v374 = vunpack.c.l.b16 %v290
      %v375 = vunpack.c.l.b16 %v291
      %v376 = vunpack.c.l.b16 %v292
      %v377 = vunpack.c.l.b16 %v293
      %v378 = vunpack.c.l.b16 %v294
      %v379 = vunpack.c.l.b16 %v295
      %v380 = vunpack.c.l.b16 %v296
      %v381 = vunpack.c.l.b16 %v297
      %v382 = vunpack.c.l.b16 %v298
      %v383 = vunpack.c.l.b16 %v299
      %v384 = vunpack.c.l.b16 %v300
      %v385 = vunpack.c.l.b16 %v301
      %v386 = vunpack.c.l.b16 %v302
      %v387 = vunpack.c.l.b16 %v303
      %v388 = vpack.c.b16 %v357, %v356
      %v389 = vpack.c.b16 %v359, %v358
      %v390 = vpack.c.b16 %v361, %v360
      %v391 = vpack.c.b16 %v363, %v362
      %v392 = vpack.c.b16 %v365, %v364
      %v393 = vpack.c.b16 %v367, %v366
      %v394 = vpack.c.b16 %v369, %v368
      %v395 = vpack.c.b16 %v371, %v370
      %v396 = vpack.c.b16 %v373, %v372
      %v397 = vpack.c.b16 %v375, %v374
      %v398 = vpack.c.b16 %v377, %v376
      %v399 = vpack.c.b16 %v379, %v378
      %v400 = vpack.c.b16 %v381, %v380
      %v401 = vpack.c.b16 %v383, %v382
      %v402 = vpack.c.b16 %v385, %v384
      %v403 = vpack.c.b16 %v387, %v386
      %420 = vmatprep.subr.bf16.mxu0 0
      %421 = vmatpush1.bf16.msra.mxu0 %v395
      %422 = vmatprep.subr.bf16.mxu0 0
      %423 = vmatpush1.bf16.msra.mxu0 %v394
      %424 = vmatprep.subr.bf16.mxu0 0
      %425 = vmatpush1.bf16.msra.mxu0 %v393
      %426 = vmatprep.subr.bf16.mxu0 0
      %427 = vmatpush1.bf16.msra.mxu0 %v392
      %428 = vmatprep.subr.bf16.mxu0 0
      %429 = vmatpush1.bf16.msra.mxu0 %v391
      %430 = vmatprep.subr.bf16.mxu0 0
      %431 = vmatpush1.bf16.msra.mxu0 %v390
      %432 = vmatprep.subr.bf16.mxu0 0
      %433 = vmatpush1.bf16.msra.mxu0 %v389
      %434 = vmatprep.subr.bf16.mxu0 0
      %435 = vmatpush1.bf16.msra.mxu0 %v388
      %436 = vmatprep.subr.bf16.mxu0 0
      %437 = vmatpush2.bf16.msra.mxu0 %v403
      %438 = vmatprep.subr.bf16.mxu0 0
      %439 = vmatpush2.bf16.msra.mxu0 %v402
      %440 = vmatprep.subr.bf16.mxu0 0
      %441 = vmatpush2.bf16.msra.mxu0 %v401
      %442 = vmatprep.subr.bf16.mxu0 0
      %443 = vmatpush2.bf16.msra.mxu0 %v400
      %444 = vmatprep.subr.bf16.mxu0 0
      %445 = vmatpush2.bf16.msra.mxu0 %v399
      %446 = vmatprep.subr.bf16.mxu0 0
      %447 = vmatpush2.bf16.msra.mxu0 %v398
      %448 = vmatprep.subr.bf16.mxu0 0
      %449 = vmatpush2.bf16.msra.mxu0 %v397
      %450 = vmatprep.subr.bf16.mxu0 0
      %451 = vmatpush2.bf16.msra.mxu0 %v396
      %452 = vmatprep.mubr.bf16.mxu0 %v317
      %453 = vmatmul.mubr.bf16.gmra.mxu0 %v316
      %v454 = vpop.f32.mrf.mxu0
      %v455 = vadd.f32 0.0, %v454
      %v456 = vpop.f32.mrf.mxu0
      %v457 = vpop.f32.mrf.mxu0
      %v458 = vadd.f32 0.0, %v457
      %v459 = vpop.f32.mrf.mxu0
      %460 = vmatprep.mubr.bf16.mxu0 %v319
      %461 = vmatmul.mubr.bf16.gmra.mxu0 %v318
      %v462 = vpop.f32.mrf.mxu0
      %v463 = vadd.f32 0.0, %v462
      %v464 = vpop.f32.mrf.mxu0
      %v465 = vpop.f32.mrf.mxu0
      %v466 = vadd.f32 0.0, %v465
      %v467 = vpop.f32.mrf.mxu0
      %468 = vdwg.mxu0
      %469 = vst [vmem:[%s243] sm:$0xff] %v455
      %470 = vst [vmem:[%s243 + $0x8] sm:$0xff] %v458
      %471 = vst [vmem:[%s243 + $0x10] sm:$0xff] %v463
      %472 = vst [vmem:[%s243 + $0x18] sm:$0xff] %v466
      %v473 = vld [vmem:[%s248] sm:$0xff]
      %v474 = vld [vmem:[%s248 + $0x8] sm:$0xff]
      %v475 = vld [vmem:[%s248 + $0x10] sm:$0xff]
      %v476 = vld [vmem:[%s248 + $0x18] sm:$0xff]
      %477 = vadd.xlane.f32.xlu0 %v455
      %v478 = vpop.xlane.xlu0 %477
      %479 = vadd.xlane.f32.xlu0 %v458
      %v480 = vpop.xlane.xlu0 %479
      %481 = vadd.xlane.f32.xlu0 %v463
      %v482 = vpop.xlane.xlu0 %481
      %483 = vadd.xlane.f32.xlu0 %v466
      %v484 = vpop.xlane.xlu0 %483
      %v485 = vadd.f32 %v473, %v478
      %v486 = vadd.f32 %v474, %v480
      %v487 = vadd.f32 %v475, %v482
      %v488 = vadd.f32 %v476, %v484
      %vm489 = vcmask 7168
      %490 = vst.msk [vmem:[%s248] sm:$0xff] %vm489, %v485
      %491 = vst.msk [vmem:[%s248 + $0x8] sm:$0xff] %vm489, %v486
      %492 = vst.msk [vmem:[%s248 + $0x10] sm:$0xff] %vm489, %v487
      %493 = vst.msk [vmem:[%s248 + $0x18] sm:$0xff] %vm489, %v488
      %v494 = vld [vmem:[%s253] sm:$0xff]
      %v495 = vld [vmem:[%s253 + $0x8] sm:$0xff]
      %v496 = vld [vmem:[%s253 + $0x10] sm:$0xff]
      %v497 = vld [vmem:[%s253 + $0x18] sm:$0xff]
      %v498 = vmul.f32 %v455, %v455
      %v499 = vmul.f32 %v458, %v458
      %v500 = vmul.f32 %v463, %v463
      %v501 = vmul.f32 %v466, %v466
      %502 = vadd.xlane.f32.xlu0 %v498
      %v503 = vpop.xlane.xlu0 %502
      %504 = vadd.xlane.f32.xlu0 %v499
      %v505 = vpop.xlane.xlu0 %504
      %506 = vadd.xlane.f32.xlu0 %v500
      %v507 = vpop.xlane.xlu0 %506
      %508 = vadd.xlane.f32.xlu0 %v501
      %v509 = vpop.xlane.xlu0 %508
      %v510 = vadd.f32 %v494, %v503
      %v511 = vadd.f32 %v495, %v505
      %v512 = vadd.f32 %v496, %v507
      %v513 = vadd.f32 %v497, %v509
      %514 = vst.msk [vmem:[%s253] sm:$0xff] %vm489, %v510
      %515 = vst.msk [vmem:[%s253 + $0x8] sm:$0xff] %vm489, %v511
      %516 = vst.msk [vmem:[%s253 + $0x10] sm:$0xff] %vm489, %v512
      %517 = vst.msk [vmem:[%s253 + $0x18] sm:$0xff] %vm489, %v513
      %p518 = scmp.lt.s32.totalorder %s20, 1
      %s519 = scalar_select %p518, %s20, 1
      %p520 = scmp.lt.s32.totalorder %s21, 0
      %s521 = scalar_select %p520, %s21, 0
      %s522 = smul.addr %s519, 4
      %s523 = sadd.s32 %s521, %s522
      %s524 = smul.addr %s523, 8
      %s525 = scalar_lea.vmem %s2, %s524
      %p526 = scmp.lt.s32.totalorder %s20, 1
      %s527 = scalar_select %p526, %s20, 1
      %s528 = smul.addr %s527, 4
      %s529 = smul.addr %s528, 8
      %s530 = scalar_lea.vmem %s3, %s529
      %p531 = scmp.lt.s32.totalorder %s20, 1
      %s532 = scalar_select %p531, %s20, 1
      %s533 = smul.addr %s532, 4
      %s534 = smul.addr %s533, 8
      %s535 = scalar_lea.vmem %s4, %s534
      // Predicated region
      $region33: #{discriminator_forward.19} parent=27 // pred_check
        %p536 = pneg %p97
      $region34: #{discriminator_forward.19} parent=27 // pred_check_branch
        %538 = sbr.rel (%p536) target = $region36
      $region35: #{discriminator_forward.19} parent=27 // pred_region
        _
      $region36: #{discriminator_forward.19} parent=27 // pred_fallthru
        _
      // Predicated region
      $region37: #{discriminator_forward.19} parent=27 // pred_check
        %p539 = pneg %p123
      $region38: #{discriminator_forward.19} parent=27 // pred_check_branch
        %541 = sbr.rel (%p539) target = $region40
      $region39: #{discriminator_forward.19} parent=27 // pred_region
        _
      $region40: #{discriminator_forward.19} parent=27 // pred_fallthru
        _
      // Predicated region
      $region41: #{discriminator_forward.19} parent=27 // pred_check
        %p542 = pneg %p149
      $region42: #{discriminator_forward.19} parent=27 // pred_check_branch
        %544 = sbr.rel (%p542) target = $region44
      $region43: #{discriminator_forward.19} parent=27 // pred_region
        _
      $region44: #{discriminator_forward.19} parent=27 // pred_fallthru
        _
    $region28: #{discriminator_forward.19} parent=5 // pred_fallthru
      _
    %p545 = scmp.le.s32.totalorder 2, %s11
    // Predicated region
    $region45: #{discriminator_forward.19} parent=5 // pred_check
      %p546 = pneg %p545
    $region46: #{discriminator_forward.19} parent=5 // pred_check_branch
      %548 = sbr.rel (%p546) target = $region48
    $region47: #{discriminator_forward.19} parent=5 // pred_region
      %s549 = ssub.s32 %s11, 2
      // Predicated region
      $region49: #{discriminator_forward.19} parent=47 // pred_check
        %p550 = pneg %p103
      $region50: #{discriminator_forward.19} parent=47 // pred_check_branch
        %552 = sbr.rel (%p550) target = $region52
      $region51: #{discriminator_forward.19} parent=47 // pred_region
        %p553 = scmp.lt.s32.totalorder %s22, 1
        %s554 = scalar_select %p553, %s22, 1
        %p555 = scmp.lt.s32.totalorder %s23, 0
        %s556 = scalar_select %p555, %s23, 0
        %s557 = smul.addr %s554, 4
        %s558 = sadd.s32 %s556, %s557
        %s559 = smul.addr %s558, 8
        %s560 = scalar_lea.vmem %s2, %s559
      $region52: #{discriminator_forward.19} parent=47 // pred_fallthru
        _
      // Predicated region
      $region53: #{discriminator_forward.19} parent=47 // pred_check
        %p561 = pneg %p129
      $region54: #{discriminator_forward.19} parent=47 // pred_check_branch
        %563 = sbr.rel (%p561) target = $region56
      $region55: #{discriminator_forward.19} parent=47 // pred_region
        %p564 = scmp.lt.s32.totalorder %s22, 1
        %s565 = scalar_select %p564, %s22, 1
        %s566 = smul.addr %s565, 4
        %s567 = smul.addr %s566, 8
        %s568 = scalar_lea.vmem %s3, %s567
      $region56: #{discriminator_forward.19} parent=47 // pred_fallthru
        _
      // Predicated region
      $region57: #{discriminator_forward.19} parent=47 // pred_check
        %p569 = pneg %p155
      $region58: #{discriminator_forward.19} parent=47 // pred_check_branch
        %571 = sbr.rel (%p569) target = $region60
      $region59: #{discriminator_forward.19} parent=47 // pred_region
        %p572 = scmp.lt.s32.totalorder %s22, 1
        %s573 = scalar_select %p572, %s22, 1
        %s574 = smul.addr %s573, 4
        %s575 = smul.addr %s574, 8
        %s576 = scalar_lea.vmem %s4, %s575
      $region60: #{discriminator_forward.19} parent=47 // pred_fallthru
        _
    $region48: #{discriminator_forward.19} parent=5 // pred_fallthru
      _
  $region6: #{discriminator_forward.19} parent=0 // loop_footer
    %s15 = sadd.s32 1, %s11
  $region7: #{discriminator_forward.19} parent=0 // loop_footer_branch
    %10 = sbr.rel target = $region3
  $region8: #{discriminator_forward.19} parent=0 // loop_exit
    _

// kernel: discriminator_forward.20
$region0: #{discriminator_forward.20}
  #allocation0 [shape = 'u32[]', space=smem, size = 0x4, offset = 0x4, fixed_abs, tag = 'smem constant byte address 0x4 - core index']
  #allocation1 [shape = 'u32[144,128]{1,0:T(1,128)}', space=vmem, size = 0x12000, scoped, tag = 'internal scratch']
  %s0 = inlined_call_operand.vmem [shape: f32[2,32,128], index: 0, kind: input, shape index: {}]
  %s1 = inlined_call_operand.vmem [shape: f32[2,32,1], index: 1, kind: input, shape index: {}]
  %s2 = inlined_call_operand.vmem [shape: f32[2,32,1], index: 2, kind: input, shape index: {}]
  %s3 = inlined_call_operand.vmem [shape: f32[2,32,128], index: 3, kind: output, shape index: {}]
  %s4 = sld [smem:[#allocation0]]
  $region45: #{discriminator_forward.20} parent=0
    _
  %s6 = ssub.s32 1, %s4
  %s7 = scalar_select 0, %s6, %s4
  loop: start=0, step=1, limit=4
  $region2: #{discriminator_forward.20} parent=0 // loop_pre_header
    _
  $region3: #{discriminator_forward.20} parent=0 // loop_header
    %s9 = sphi 0, %s13
    %p10 = scmp.ge.s32.totalorder %s9, 4
    %s16 = sphi 0, %s28
    %s17 = sphi 0, %s24
    %s18 = sphi 0, %s16
    %s19 = sphi 0, %s17
    %s20 = sphi 0, %s18
    %s21 = sphi 0, %s19
    %s33 = sphi 0, %s35
    %s36 = sphi 0, %s33
    %s37 = sphi 0, %s36
    %s53 = sphi 0, %s37
    %s59 = sphi 0, %s61
    %s62 = sphi 0, %s59
    %s63 = sphi 0, %s62
    %s79 = sphi 0, %s63
    %s85 = sphi 0, %s87
    %s88 = sphi 0, %s85
    %s89 = sphi 0, %s88
    %s105 = sphi 0, %s89
    %s113 = sphi 0, %s115
    %s116 = sphi 0, %s113
    %s117 = sphi 0, %s116
    %s133 = sphi 0, %s117
  $region4: #{discriminator_forward.20} parent=0 // loop_header_branch
    %12 = sbr.rel (%p10) target = $region8
  $region5: #{discriminator_forward.20} parent=0 // loop_body
    %s14 = ssub.s32 %s9, 1
    %s15 = ssub.s32 %s9, 2
    %s22 = sadd.s32 1, %s17
    %p23 = scmp.ge.s32.totalorder %s22, 1
    %s24 = scalar_select %p23, 0, %s22
    %s25 = sadd.s32 1, %s16
    %s26 = scalar_select %p23, %s25, %s16
    %p27 = scmp.ge.s32.totalorder %s26, 2
    %s28 = scalar_select %p27, 0, %s26
    %s29 = ssub.s32 %s16, %s28
    %s30 = ssub.s32 %s17, %s24
    %s31 = sor.u32 %s29, %s30
    %p32 = scmp.eq.s32.totalorder %s31, 0
    %s34 = sadd.s32 %s33, 1
    %s35 = scalar_select %p32, %s33, %s34
    %p38 = pneg %p32
    %p39 = scmp.eq.s32.totalorder %s9, 1
    %p40 = por %p38, %p39
    %p41 = scmp.ne.s32.totalorder %s33, %s36
    %p42 = scmp.eq.s32.totalorder %s9, 0
    %p43 = por %p41, %p42
    %p44 = scmp.ne.s32.totalorder %s33, %s36
    %p45 = scmp.eq.s32.totalorder %s14, 1
    %p46 = por %p44, %p45
    %p47 = scmp.ne.s32.totalorder %s36, %s37
    %p48 = scmp.eq.s32.totalorder %s14, 0
    %p49 = por %p47, %p48
    %p50 = scmp.ne.s32.totalorder %s36, %s37
    %p51 = scmp.eq.s32.totalorder %s15, 1
    %p52 = por %p50, %p51
    %p54 = scmp.ne.s32.totalorder %s37, %s53
    %p55 = scmp.eq.s32.totalorder %s15, 0
    %p56 = por %p54, %p55
    %s57 = ssub.s32 %s16, %s28
    %p58 = scmp.eq.s32.totalorder %s57, 0
    %s60 = sadd.s32 %s59, 1
    %s61 = scalar_select %p58, %s59, %s60
    %p64 = pneg %p58
    %p65 = scmp.eq.s32.totalorder %s9, 1
    %p66 = por %p64, %p65
    %p67 = scmp.ne.s32.totalorder %s59, %s62
    %p68 = scmp.eq.s32.totalorder %s9, 0
    %p69 = por %p67, %p68
    %p70 = scmp.ne.s32.totalorder %s59, %s62
    %p71 = scmp.eq.s32.totalorder %s14, 1
    %p72 = por %p70, %p71
    %p73 = scmp.ne.s32.totalorder %s62, %s63
    %p74 = scmp.eq.s32.totalorder %s14, 0
    %p75 = por %p73, %p74
    %p76 = scmp.ne.s32.totalorder %s62, %s63
    %p77 = scmp.eq.s32.totalorder %s15, 1
    %p78 = por %p76, %p77
    %p80 = scmp.ne.s32.totalorder %s63, %s79
    %p81 = scmp.eq.s32.totalorder %s15, 0
    %p82 = por %p80, %p81
    %s83 = ssub.s32 %s16, %s28
    %p84 = scmp.eq.s32.totalorder %s83, 0
    %s86 = sadd.s32 %s85, 1
    %s87 = scalar_select %p84, %s85, %s86
    %p90 = pneg %p84
    %p91 = scmp.eq.s32.totalorder %s9, 1
    %p92 = por %p90, %p91
    %p93 = scmp.ne.s32.totalorder %s85, %s88
    %p94 = scmp.eq.s32.totalorder %s9, 0
    %p95 = por %p93, %p94
    %p96 = scmp.ne.s32.totalorder %s85, %s88
    %p97 = scmp.eq.s32.totalorder %s14, 1
    %p98 = por %p96, %p97
    %p99 = scmp.ne.s32.totalorder %s88, %s89
    %p100 = scmp.eq.s32.totalorder %s14, 0
    %p101 = por %p99, %p100
    %p102 = scmp.ne.s32.totalorder %s88, %s89
    %p103 = scmp.eq.s32.totalorder %s15, 1
    %p104 = por %p102, %p103
    %p106 = scmp.ne.s32.totalorder %s89, %s105
    %p107 = scmp.eq.s32.totalorder %s15, 0
    %p108 = por %p106, %p107
    %s109 = ssub.s32 %s16, %s28
    %s110 = ssub.s32 %s17, %s24
    %s111 = sor.u32 %s109, %s110
    %p112 = scmp.eq.s32.totalorder %s111, 0
    %s114 = sadd.s32 %s113, 1
    %s115 = scalar_select %p112, %s113, %s114
    %p118 = pneg %p112
    %p119 = scmp.eq.s32.totalorder %s9, 1
    %p120 = por %p118, %p119
    %p121 = scmp.ne.s32.totalorder %s113, %s116
    %p122 = scmp.eq.s32.totalorder %s9, 0
    %p123 = por %p121, %p122
    %p124 = scmp.ne.s32.totalorder %s113, %s116
    %p125 = scmp.eq.s32.totalorder %s14, 1
    %p126 = por %p124, %p125
    %p127 = scmp.ne.s32.totalorder %s116, %s117
    %p128 = scmp.eq.s32.totalorder %s14, 0
    %p129 = por %p127, %p128
    %p130 = scmp.ne.s32.totalorder %s116, %s117
    %p131 = scmp.eq.s32.totalorder %s15, 1
    %p132 = por %p130, %p131
    %p134 = scmp.ne.s32.totalorder %s117, %s133
    %p135 = scmp.eq.s32.totalorder %s15, 0
    %p136 = por %p134, %p135
    %p137 = scmp.le.s32.totalorder 1, %s9
    %p138 = scmp.lt.s32.totalorder %s9, 3
    %p139 = pnand %p137, %p138
    %p140 = pneg %p139
    // Predicated region
    $region9: #{discriminator_forward.20} parent=5 // pred_check
      _
    $region10: #{discriminator_forward.20} parent=5 // pred_check_branch
      %142 = sbr.rel (%p139) target = $region12
    $region11: #{discriminator_forward.20} parent=5 // pred_region
      %s143 = ssub.s32 %s9, 1
    $region12: #{discriminator_forward.20} parent=5 // pred_fallthru
      _
    %p144 = scmp.lt.s32.totalorder %s9, 2
    // Predicated region
    $region13: #{discriminator_forward.20} parent=5 // pred_check
      %p145 = pneg %p144
    $region14: #{discriminator_forward.20} parent=5 // pred_check_branch
      %147 = sbr.rel (%p145) target = $region16
    $region15: #{discriminator_forward.20} parent=5 // pred_region
      // Predicated region
      $region17: #{discriminator_forward.20} parent=15 // pred_check
        %p148 = pneg %p43
      $region18: #{discriminator_forward.20} parent=15 // pred_check_branch
        %150 = sbr.rel (%p148) target = $region20
      $region19: #{discriminator_forward.20} parent=15 // pred_region
        %p151 = scmp.lt.s32.totalorder %s16, 1
        %s152 = scalar_select %p151, %s16, 1
        %p153 = scmp.lt.s32.totalorder %s17, 0
        %s154 = scalar_select %p153, %s17, 0
        %s155 = smul.addr %s152, 4
        %s156 = sadd.s32 %s154, %s155
        %s157 = smul.addr %s156, 8
        %s158 = scalar_lea.vmem %s0, %s157
      $region20: #{discriminator_forward.20} parent=15 // pred_fallthru
        _
      // Predicated region
      $region21: #{discriminator_forward.20} parent=15 // pred_check
        %p159 = pneg %p69
      $region22: #{discriminator_forward.20} parent=15 // pred_check_branch
        %161 = sbr.rel (%p159) target = $region24
      $region23: #{discriminator_forward.20} parent=15 // pred_region
        %p162 = scmp.lt.s32.totalorder %s16, 1
        %s163 = scalar_select %p162, %s16, 1
        %s164 = smul.addr %s163, 4
        %s165 = smul.addr %s164, 8
        %s166 = scalar_lea.vmem %s1, %s165
      $region24: #{discriminator_forward.20} parent=15 // pred_fallthru
        _
      // Predicated region
      $region25: #{discriminator_forward.20} parent=15 // pred_check
        %p167 = pneg %p95
      $region26: #{discriminator_forward.20} parent=15 // pred_check_branch
        %169 = sbr.rel (%p167) target = $region28
      $region27: #{discriminator_forward.20} parent=15 // pred_region
        %p170 = scmp.lt.s32.totalorder %s16, 1
        %s171 = scalar_select %p170, %s16, 1
        %s172 = smul.addr %s171, 4
        %s173 = smul.addr %s172, 8
        %s174 = scalar_lea.vmem %s2, %s173
      $region28: #{discriminator_forward.20} parent=15 // pred_fallthru
        _
    $region16: #{discriminator_forward.20} parent=5 // pred_fallthru
      _
    %p175 = scmp.le.s32.totalorder 1, %s9
    %p176 = scmp.lt.s32.totalorder %s9, 3
    %p177 = pnand %p175, %p176
    %p178 = pneg %p177
    // Predicated region
    $region29: #{discriminator_forward.20} parent=5 // pred_check
      _
    $region30: #{discriminator_forward.20} parent=5 // pred_check_branch
      %180 = sbr.rel (%p177) target = $region32
    $region31: #{discriminator_forward.20} parent=5 // pred_region
      %s181 = ssub.s32 %s9, 1
      %p182 = scmp.lt.s32.totalorder %s18, 1
      %s183 = scalar_select %p182, %s18, 1
      %p184 = scmp.lt.s32.totalorder %s19, 0
      %s185 = scalar_select %p184, %s19, 0
      %s186 = smul.addr %s183, 4
      %s187 = sadd.s32 %s185, %s186
      %s188 = smul.addr %s187, 8
      %s189 = scalar_lea.vmem %s0, %s188
      %p190 = pneg %p49
      %p191 = pneg %p46
      %p192 = scmp.lt.s32.totalorder %s18, 1
      %s193 = scalar_select %p192, %s18, 1
      %s194 = smul.addr %s193, 4
      %s195 = smul.addr %s194, 8
      %s196 = scalar_lea.vmem %s1, %s195
      %p197 = pneg %p75
      %p198 = pneg %p72
      %p199 = scmp.lt.s32.totalorder %s18, 1
      %s200 = scalar_select %p199, %s18, 1
      %s201 = smul.addr %s200, 4
      %s202 = smul.addr %s201, 8
      %s203 = scalar_lea.vmem %s2, %s202
      %p204 = pneg %p101
      %p205 = pneg %p98
      %p206 = pneg %p129
      %p207 = pneg %p126
      %p208 = scmp.lt.s32.totalorder %s18, 1
      %s209 = scalar_select %p208, %s18, 1
      %p210 = scmp.lt.s32.totalorder %s19, 0
      %s211 = scalar_select %p210, %s19, 0
      %s212 = smul.addr %s209, 4
      %s213 = sadd.s32 %s211, %s212
      %s214 = smul.addr %s213, 8
      %s215 = scalar_lea.vmem %s3, %s214
      %p216 = scmp.lt.s32.totalorder %s18, 1
      %s217 = scalar_select %p216, %s18, 1
      %p218 = scmp.lt.s32.totalorder %s19, 0
      %s219 = scalar_select %p218, %s19, 0
      %s220 = smul.addr %s217, 4
      %s221 = sadd.s32 %s219, %s220
      %s222 = smul.addr %s221, 8
      %s223 = scalar_lea.vmem %s0, %s222
      %p224 = scmp.lt.s32.totalorder %s18, 1
      %s225 = scalar_select %p224, %s18, 1
      %s226 = smul.addr %s225, 4
      %s227 = smul.addr %s226, 8
      %s228 = scalar_lea.vmem %s1, %s227
      %p229 = scmp.lt.s32.totalorder %s18, 1
      %s230 = scalar_select %p229, %s18, 1
      %s231 = smul.addr %s230, 4
      %s232 = smul.addr %s231, 8
      %s233 = scalar_lea.vmem %s2, %s232
      %p234 = scmp.lt.s32.totalorder %s18, 1
      %s235 = scalar_select %p234, %s18, 1
      %p236 = scmp.lt.s32.totalorder %s19, 0
      %s237 = scalar_select %p236, %s19, 0
      %s238 = smul.addr %s235, 4
      %s239 = sadd.s32 %s237, %s238
      %s240 = smul.addr %s239, 8
      %s241 = scalar_lea.vmem %s3, %s240
      %v242 = vld [vmem:[%s223] sm:$0xff]
      %v243 = vld [vmem:[%s223 + $0x8] sm:$0xff]
      %v244 = vld [vmem:[%s223 + $0x10] sm:$0xff]
      %v245 = vld [vmem:[%s223 + $0x18] sm:$0xff]
      %v246 = vld [vmem:[%s228] sm:$0xff]
      %v247 = vld [vmem:[%s228 + $0x8] sm:$0xff]
      %v248 = vld [vmem:[%s228 + $0x10] sm:$0xff]
      %v249 = vld [vmem:[%s228 + $0x18] sm:$0xff]
      %251 = vset.pattern.permute.xlu0 0
      %252 = vperm.xlu0 %251, %v246
      %v253 = vpop.permute.xlu0 %252
      %256 = vset.pattern.permute.xlu0 0
      %257 = vperm.xlu0 %256, %v247
      %v258 = vpop.permute.xlu0 %257
      %261 = vset.pattern.permute.xlu0 0
      %262 = vperm.xlu0 %261, %v248
      %v263 = vpop.permute.xlu0 %262
      %266 = vset.pattern.permute.xlu0 0
      %267 = vperm.xlu0 %266, %v249
      %v268 = vpop.permute.xlu0 %267
      %v270 = vmul.f32 %v242, %v253
      %v271 = vmul.f32 %v243, %v258
      %v272 = vmul.f32 %v244, %v263
      %v273 = vmul.f32 %v245, %v268
      %v274 = vld [vmem:[%s233] sm:$0xff]
      %v275 = vld [vmem:[%s233 + $0x8] sm:$0xff]
      %v276 = vld [vmem:[%s233 + $0x10] sm:$0xff]
      %v277 = vld [vmem:[%s233 + $0x18] sm:$0xff]
      %279 = vset.pattern.permute.xlu0 0
      %280 = vperm.xlu0 %279, %v274
      %v281 = vpop.permute.xlu0 %280
      %284 = vset.pattern.permute.xlu0 0
      %285 = vperm.xlu0 %284, %v275
      %v286 = vpop.permute.xlu0 %285
      %289 = vset.pattern.permute.xlu0 0
      %290 = vperm.xlu0 %289, %v276
      %v291 = vpop.permute.xlu0 %290
      %294 = vset.pattern.permute.xlu0 0
      %295 = vperm.xlu0 %294, %v277
      %v296 = vpop.permute.xlu0 %295
      %v298 = vadd.f32 %v270, %v281
      %v299 = vadd.f32 %v271, %v286
      %v300 = vadd.f32 %v272, %v291
      %v301 = vadd.f32 %v273, %v296
      %302 = vst [vmem:[%s241] sm:$0xff] %v298
      %303 = vst [vmem:[%s241 + $0x8] sm:$0xff] %v299
      %304 = vst [vmem:[%s241 + $0x10] sm:$0xff] %v300
      %305 = vst [vmem:[%s241 + $0x18] sm:$0xff] %v301
      %p306 = scmp.lt.s32.totalorder %s18, 1
      %s307 = scalar_select %p306, %s18, 1
      %p308 = scmp.lt.s32.totalorder %s19, 0
      %s309 = scalar_select %p308, %s19, 0
      %s310 = smul.addr %s307, 4
      %s311 = sadd.s32 %s309, %s310
      %s312 = smul.addr %s311, 8
      %s313 = scalar_lea.vmem %s3, %s312
      // Predicated region
      $region33: #{discriminator_forward.20} parent=31 // pred_check
        %p314 = pneg %p126
      $region34: #{discriminator_forward.20} parent=31 // pred_check_branch
        %316 = sbr.rel (%p314) target = $region36
      $region35: #{discriminator_forward.20} parent=31 // pred_region
        _
      $region36: #{discriminator_forward.20} parent=31 // pred_fallthru
        _
    $region32: #{discriminator_forward.20} parent=5 // pred_fallthru
      _
    %p317 = scmp.le.s32.totalorder 2, %s9
    // Predicated region
    $region37: #{discriminator_forward.20} parent=5 // pred_check
      %p318 = pneg %p317
    $region38: #{discriminator_forward.20} parent=5 // pred_check_branch
      %320 = sbr.rel (%p318) target = $region40
    $region39: #{discriminator_forward.20} parent=5 // pred_region
      %s321 = ssub.s32 %s9, 2
      // Predicated region
      $region41: #{discriminator_forward.20} parent=39 // pred_check
        %p322 = pneg %p132
      $region42: #{discriminator_forward.20} parent=39 // pred_check_branch
        %324 = sbr.rel (%p322) target = $region44
      $region43: #{discriminator_forward.20} parent=39 // pred_region
        %p325 = scmp.lt.s32.totalorder %s20, 1
        %s326 = scalar_select %p325, %s20, 1
        %p327 = scmp.lt.s32.totalorder %s21, 0
        %s328 = scalar_select %p327, %s21, 0
        %s329 = smul.addr %s326, 4
        %s330 = sadd.s32 %s328, %s329
        %s331 = smul.addr %s330, 8
        %s332 = scalar_lea.vmem %s3, %s331
      $region44: #{discriminator_forward.20} parent=39 // pred_fallthru
        _
    $region40: #{discriminator_forward.20} parent=5 // pred_fallthru
      _
  $region6: #{discriminator_forward.20} parent=0 // loop_footer
    %s13 = sadd.s32 1, %s9
  $region7: #{discriminator_forward.20} parent=0 // loop_footer_branch
    %8 = sbr.rel target = $region3
  $region8: #{discriminator_forward.20} parent=0 // loop_exit
    _

// kernel: discriminator_forward.21
$region0: #{discriminator_forward.21}
  #allocation0 [shape = 'u32[]', space=smem, size = 0x4, offset = 0x4, fixed_abs, tag = 'smem constant byte address 0x4 - core index']
  #allocation1 [shape = 'u32[144,128]{1,0:T(1,128)}', space=vmem, size = 0x12000, scoped, tag = 'internal scratch']
  %s0 = inlined_call_operand.vmem [shape: bf16[2,512,128], index: 0, kind: input, shape index: {}]
  %s1 = inlined_call_operand.vmem [shape: bf16[64,512], index: 1, kind: input, shape index: {}]
  %s2 = inlined_call_operand.vmem [shape: f32[2,64,128], index: 2, kind: output, shape index: {0}]
  %s3 = inlined_call_operand.vmem [shape: f32[2,64,1], index: 3, kind: output, shape index: {1}]
  %s4 = inlined_call_operand.vmem [shape: f32[2,64,1], index: 4, kind: output, shape index: {2}]
  %5 = xla_tuple %s2, %s3, %s4
  %s6 = sld [smem:[#allocation0]]
  $region61: #{discriminator_forward.21} parent=0
    _
  %s8 = ssub.s32 1, %s6
  %s9 = scalar_select 0, %s8, %s6
  loop: start=0, step=1, limit=4
  $region2: #{discriminator_forward.21} parent=0 // loop_pre_header
    _
  $region3: #{discriminator_forward.21} parent=0 // loop_header
    %s11 = sphi 0, %s15
    %p12 = scmp.ge.s32.totalorder %s11, 4
    %s18 = sphi 0, %s30
    %s19 = sphi 0, %s26
    %s20 = sphi 0, %s18
    %s21 = sphi 0, %s19
    %s22 = sphi 0, %s20
    %s23 = sphi 0, %s21
    %s35 = sphi 0, %s37
    %s38 = sphi 0, %s35
    %s39 = sphi 0, %s38
    %s55 = sphi 0, %s39
    %s59 = sphi 0, %s59
    %s61 = sphi 0, %s59
    %s62 = sphi 0, %s61
    %s76 = sphi 0, %s62
    %s84 = sphi 0, %s86
    %s87 = sphi 0, %s84
    %s88 = sphi 0, %s87
    %s104 = sphi 0, %s88
    %s110 = sphi 0, %s112
    %s113 = sphi 0, %s110
    %s114 = sphi 0, %s113
    %s130 = sphi 0, %s114
    %s136 = sphi 0, %s138
    %s139 = sphi 0, %s136
    %s140 = sphi 0, %s139
    %s156 = sphi 0, %s140
  $region4: #{discriminator_forward.21} parent=0 // loop_header_branch
    %14 = sbr.rel (%p12) target = $region8
  $region5: #{discriminator_forward.21} parent=0 // loop_body
    %s16 = ssub.s32 %s11, 1
    %s17 = ssub.s32 %s11, 2
    %s24 = sadd.s32 1, %s19
    %p25 = scmp.ge.s32.totalorder %s24, 1
    %s26 = scalar_select %p25, 0, %s24
    %s27 = sadd.s32 1, %s18
    %s28 = scalar_select %p25, %s27, %s18
    %p29 = scmp.ge.s32.totalorder %s28, 2
    %s30 = scalar_select %p29, 0, %s28
    %s31 = ssub.s32 %s18, %s30
    %s32 = ssub.s32 %s19, %s26
    %s33 = sor.u32 %s31, %s32
    %p34 = scmp.eq.s32.totalorder %s33, 0
    %s36 = sadd.s32 %s35, 1
    %s37 = scalar_select %p34, %s35, %s36
    %p40 = pneg %p34
    %p41 = scmp.eq.s32.totalorder %s11, 1
    %p42 = por %p40, %p41
    %p43 = scmp.ne.s32.totalorder %s35, %s38
    %p44 = scmp.eq.s32.totalorder %s11, 0
    %p45 = por %p43, %p44
    %p46 = scmp.ne.s32.totalorder %s35, %s38
    %p47 = scmp.eq.s32.totalorder %s16, 1
    %p48 = por %p46, %p47
    %p49 = scmp.ne.s32.totalorder %s38, %s39
    %p50 = scmp.eq.s32.totalorder %s16, 0
    %p51 = por %p49, %p50
    %p52 = scmp.ne.s32.totalorder %s38, %s39
    %p53 = scmp.eq.s32.totalorder %s17, 1
    %p54 = por %p52, %p53
    %p56 = scmp.ne.s32.totalorder %s39, %s55
    %p57 = scmp.eq.s32.totalorder %s17, 0
    %p58 = por %p56, %p57
    %s60 = sadd.s32 %s59, 1
    %p63 = scmp.eq.s32.totalorder %s11, 1
    %p64 = scmp.ne.s32.totalorder %s59, %s61
    %p65 = scmp.eq.s32.totalorder %s11, 0
    %p66 = por %p64, %p65
    %p67 = scmp.ne.s32.totalorder %s59, %s61
    %p68 = scmp.eq.s32.totalorder %s16, 1
    %p69 = por %p67, %p68
    %p70 = scmp.ne.s32.totalorder %s61, %s62
    %p71 = scmp.eq.s32.totalorder %s16, 0
    %p72 = por %p70, %p71
    %p73 = scmp.ne.s32.totalorder %s61, %s62
    %p74 = scmp.eq.s32.totalorder %s17, 1
    %p75 = por %p73, %p74
    %p77 = scmp.ne.s32.totalorder %s62, %s76
    %p78 = scmp.eq.s32.totalorder %s17, 0
    %p79 = por %p77, %p78
    %s80 = ssub.s32 %s18, %s30
    %s81 = ssub.s32 %s19, %s26
    %s82 = sor.u32 %s80, %s81
    %p83 = scmp.eq.s32.totalorder %s82, 0
    %s85 = sadd.s32 %s84, 1
    %s86 = scalar_select %p83, %s84, %s85
    %p89 = pneg %p83
    %p90 = scmp.eq.s32.totalorder %s11, 1
    %p91 = por %p89, %p90
    %p92 = scmp.ne.s32.totalorder %s84, %s87
    %p93 = scmp.eq.s32.totalorder %s11, 0
    %p94 = por %p92, %p93
    %p95 = scmp.ne.s32.totalorder %s84, %s87
    %p96 = scmp.eq.s32.totalorder %s16, 1
    %p97 = por %p95, %p96
    %p98 = scmp.ne.s32.totalorder %s87, %s88
    %p99 = scmp.eq.s32.totalorder %s16, 0
    %p100 = por %p98, %p99
    %p101 = scmp.ne.s32.totalorder %s87, %s88
    %p102 = scmp.eq.s32.totalorder %s17, 1
    %p103 = por %p101, %p102
    %p105 = scmp.ne.s32.totalorder %s88, %s104
    %p106 = scmp.eq.s32.totalorder %s17, 0
    %p107 = por %p105, %p106
    %s108 = ssub.s32 %s18, %s30
    %p109 = scmp.eq.s32.totalorder %s108, 0
    %s111 = sadd.s32 %s110, 1
    %s112 = scalar_select %p109, %s110, %s111
    %p115 = pneg %p109
    %p116 = scmp.eq.s32.totalorder %s11, 1
    %p117 = por %p115, %p116
    %p118 = scmp.ne.s32.totalorder %s110, %s113
    %p119 = scmp.eq.s32.totalorder %s11, 0
    %p120 = por %p118, %p119
    %p121 = scmp.ne.s32.totalorder %s110, %s113
    %p122 = scmp.eq.s32.totalorder %s16, 1
    %p123 = por %p121, %p122
    %p124 = scmp.ne.s32.totalorder %s113, %s114
    %p125 = scmp.eq.s32.totalorder %s16, 0
    %p126 = por %p124, %p125
    %p127 = scmp.ne.s32.totalorder %s113, %s114
    %p128 = scmp.eq.s32.totalorder %s17, 1
    %p129 = por %p127, %p128
    %p131 = scmp.ne.s32.totalorder %s114, %s130
    %p132 = scmp.eq.s32.totalorder %s17, 0
    %p133 = por %p131, %p132
    %s134 = ssub.s32 %s18, %s30
    %p135 = scmp.eq.s32.totalorder %s134, 0
    %s137 = sadd.s32 %s136, 1
    %s138 = scalar_select %p135, %s136, %s137
    %p141 = pneg %p135
    %p142 = scmp.eq.s32.totalorder %s11, 1
    %p143 = por %p141, %p142
    %p144 = scmp.ne.s32.totalorder %s136, %s139
    %p145 = scmp.eq.s32.totalorder %s11, 0
    %p146 = por %p144, %p145
    %p147 = scmp.ne.s32.totalorder %s136, %s139
    %p148 = scmp.eq.s32.totalorder %s16, 1
    %p149 = por %p147, %p148
    %p150 = scmp.ne.s32.totalorder %s139, %s140
    %p151 = scmp.eq.s32.totalorder %s16, 0
    %p152 = por %p150, %p151
    %p153 = scmp.ne.s32.totalorder %s139, %s140
    %p154 = scmp.eq.s32.totalorder %s17, 1
    %p155 = por %p153, %p154
    %p157 = scmp.ne.s32.totalorder %s140, %s156
    %p158 = scmp.eq.s32.totalorder %s17, 0
    %p159 = por %p157, %p158
    %p160 = scmp.le.s32.totalorder 1, %s11
    %p161 = scmp.lt.s32.totalorder %s11, 3
    %p162 = pnand %p160, %p161
    %p163 = pneg %p162
    // Predicated region
    $region9: #{discriminator_forward.21} parent=5 // pred_check
      _
    $region10: #{discriminator_forward.21} parent=5 // pred_check_branch
      %165 = sbr.rel (%p162) target = $region12
    $region11: #{discriminator_forward.21} parent=5 // pred_region
      %s166 = ssub.s32 %s11, 1
      // Predicated region
      $region13: #{discriminator_forward.21} parent=11 // pred_check
        %p167 = pneg %p72
      $region14: #{discriminator_forward.21} parent=11 // pred_check_branch
        %169 = sbr.rel (%p167) target = $region16
      $region15: #{discriminator_forward.21} parent=11 // pred_region
        _
      $region16: #{discriminator_forward.21} parent=11 // pred_fallthru
        _
    $region12: #{discriminator_forward.21} parent=5 // pred_fallthru
      _
    %p170 = scmp.lt.s32.totalorder %s11, 2
    // Predicated region
    $region17: #{discriminator_forward.21} parent=5 // pred_check
      %p171 = pneg %p170
    $region18: #{discriminator_forward.21} parent=5 // pred_check_branch
      %173 = sbr.rel (%p171) target = $region20
    $region19: #{discriminator_forward.21} parent=5 // pred_region
      // Predicated region
      $region21: #{discriminator_forward.21} parent=19 // pred_check
        %p174 = pneg %p45
      $region22: #{discriminator_forward.21} parent=19 // pred_check_branch
        %176 = sbr.rel (%p174) target = $region24
      $region23: #{discriminator_forward.21} parent=19 // pred_region
        %p177 = scmp.lt.s32.totalorder %s18, 1
        %s178 = scalar_select %p177, %s18, 1
        %p179 = scmp.lt.s32.totalorder %s19, 0
        %s180 = scalar_select %p179, %s19, 0
        %s181 = smul.addr %s178, 64
        %s182 = sadd.s32 %s180, %s181
        %s183 = smul.addr %s182, 4
        %s184 = scalar_lea.vmem %s0, %s183
      $region24: #{discriminator_forward.21} parent=19 // pred_fallthru
        _
    $region20: #{discriminator_forward.21} parent=5 // pred_fallthru
      _
    %p185 = scmp.le.s32.totalorder 1, %s11
    %p186 = scmp.lt.s32.totalorder %s11, 3
    %p187 = pnand %p185, %p186
    %p188 = pneg %p187
    // Predicated region
    $region25: #{discriminator_forward.21} parent=5 // pred_check
      _
    $region26: #{discriminator_forward.21} parent=5 // pred_check_branch
      %190 = sbr.rel (%p187) target = $region28
    $region27: #{discriminator_forward.21} parent=5 // pred_region
      %s191 = ssub.s32 %s11, 1
      %p192 = scmp.lt.s32.totalorder %s20, 1
      %s193 = scalar_select %p192, %s20, 1
      %p194 = scmp.lt.s32.totalorder %s21, 0
      %s195 = scalar_select %p194, %s21, 0
      %s196 = smul.addr %s193, 64
      %s197 = sadd.s32 %s195, %s196
      %s198 = smul.addr %s197, 4
      %s199 = scalar_lea.vmem %s0, %s198
      %p200 = pneg %p51
      %p201 = pneg %p48
      %p202 = pneg %p72
      %p203 = pneg %p69
      %p204 = pneg %p100
      %p205 = pneg %p97
      %p206 = scmp.lt.s32.totalorder %s20, 1
      %s207 = scalar_select %p206, %s20, 1
      %p208 = scmp.lt.s32.totalorder %s21, 0
      %s209 = scalar_select %p208, %s21, 0
      %s210 = smul.addr %s207, 8
      %s211 = sadd.s32 %s209, %s210
      %s212 = smul.addr %s211, 8
      %s213 = scalar_lea.vmem %s2, %s212
      %p214 = pneg %p126
      %p215 = pneg %p123
      %p216 = scmp.lt.s32.totalorder %s20, 1
      %s217 = scalar_select %p216, %s20, 1
      %s218 = smul.addr %s217, 8
      %s219 = smul.addr %s218, 8
      %s220 = scalar_lea.vmem %s3, %s219
      %p221 = pneg %p152
      %p222 = pneg %p149
      %p223 = scmp.lt.s32.totalorder %s20, 1
      %s224 = scalar_select %p223, %s20, 1
      %s225 = smul.addr %s224, 8
      %s226 = smul.addr %s225, 8
      %s227 = scalar_lea.vmem %s4, %s226
      %p228 = scmp.lt.s32.totalorder %s20, 1
      %s229 = scalar_select %p228, %s20, 1
      %p230 = scmp.lt.s32.totalorder %s21, 0
      %s231 = scalar_select %p230, %s21, 0
      %s232 = smul.addr %s229, 64
      %s233 = sadd.s32 %s231, %s232
      %s234 = smul.addr %s233, 4
      %s235 = scalar_lea.vmem %s0, %s234
      %p236 = scmp.lt.s32.totalorder %s20, 1
      %s237 = scalar_select %p236, %s20, 1
      %p238 = scmp.lt.s32.totalorder %s21, 0
      %s239 = scalar_select %p238, %s21, 0
      %s240 = smul.addr %s237, 8
      %s241 = sadd.s32 %s239, %s240
      %s242 = smul.addr %s241, 8
      %s243 = scalar_lea.vmem %s2, %s242
      %p244 = scmp.lt.s32.totalorder %s20, 1
      %s245 = scalar_select %p244, %s20, 1
      %s246 = smul.addr %s245, 8
      %s247 = smul.addr %s246, 8
      %s248 = scalar_lea.vmem %s3, %s247
      %p249 = scmp.lt.s32.totalorder %s20, 1
      %s250 = scalar_select %p249, %s20, 1
      %s251 = smul.addr %s250, 8
      %s252 = smul.addr %s251, 8
      %s253 = scalar_lea.vmem %s4, %s252
      %p255 = scmp.eq.s32.totalorder %s21, 0
      // Predicated region
      $region29: #{discriminator_forward.21} parent=27 // pred_check
        %p256 = pneg %p255
      $region30: #{discriminator_forward.21} parent=27 // pred_check_branch
        %258 = sbr.rel (%p256) target = $region32
      $region31: #{discriminator_forward.21} parent=27 // pred_region
        %vm259 = vcmask 7168
        %260 = vst.msk [vmem:[%s248] sm:$0xff] %vm259, 0.0
        %261 = vst.msk [vmem:[%s248 + $0x8] sm:$0xff] %vm259, 0.0
        %262 = vst.msk [vmem:[%s248 + $0x10] sm:$0xff] %vm259, 0.0
        %263 = vst.msk [vmem:[%s248 + $0x18] sm:$0xff] %vm259, 0.0
        %264 = vst.msk [vmem:[%s248 + $0x20] sm:$0xff] %vm259, 0.0
        %265 = vst.msk [vmem:[%s248 + $0x28] sm:$0xff] %vm259, 0.0
        %266 = vst.msk [vmem:[%s248 + $0x30] sm:$0xff] %vm259, 0.0
        %267 = vst.msk [vmem:[%s248 + $0x38] sm:$0xff] %vm259, 0.0
        %268 = vst.msk [vmem:[%s253] sm:$0xff] %vm259, 0.0
        %269 = vst.msk [vmem:[%s253 + $0x8] sm:$0xff] %vm259, 0.0
        %270 = vst.msk [vmem:[%s253 + $0x10] sm:$0xff] %vm259, 0.0
        %271 = vst.msk [vmem:[%s253 + $0x18] sm:$0xff] %vm259, 0.0
        %272 = vst.msk [vmem:[%s253 + $0x20] sm:$0xff] %vm259, 0.0
        %273 = vst.msk [vmem:[%s253 + $0x28] sm:$0xff] %vm259, 0.0
        %274 = vst.msk [vmem:[%s253 + $0x30] sm:$0xff] %vm259, 0.0
        %275 = vst.msk [vmem:[%s253 + $0x38] sm:$0xff] %vm259, 0.0
      $region32: #{discriminator_forward.21} parent=27 // pred_fallthru
        _
      %v276 = vld [vmem:[%s1] sm:$0xff]
      %v277 = vld [vmem:[%s1 + $0x8] sm:$0xff]
      %v278 = vld [vmem:[%s1 + $0x10] sm:$0xff]
      %v279 = vld [vmem:[%s1 + $0x18] sm:$0xff]
      %v280 = vld [vmem:[%s1 + $0x20] sm:$0xff]
      %v281 = vld [vmem:[%s1 + $0x28] sm:$0xff]
      %v282 = vld [vmem:[%s1 + $0x30] sm:$0xff]
      %v283 = vld [vmem:[%s1 + $0x38] sm:$0xff]
      %v284 = vld [vmem:[%s1 + $0x40] sm:$0xff]
      %v285 = vld [vmem:[%s1 + $0x48] sm:$0xff]
      %v286 = vld [vmem:[%s1 + $0x50] sm:$0xff]
      %v287 = vld [vmem:[%s1 + $0x58] sm:$0xff]
      %v288 = vld [vmem:[%s1 + $0x60] sm:$0xff]
      %v289 = vld [vmem:[%s1 + $0x68] sm:$0xff]
      %v290 = vld [vmem:[%s1 + $0x70] sm:$0xff]
      %v291 = vld [vmem:[%s1 + $0x78] sm:$0xff]
      %v292 = vld [vmem:[%s235] sm:$0xf]
      %v293 = vld [vmem:[%s235 + $0x4] sm:$0xf]
      %v294 = vld [vmem:[%s235 + $0x8] sm:$0xf]
      %v295 = vld [vmem:[%s235 + $0xc] sm:$0xf]
      %v296 = vld [vmem:[%s235 + $0x10] sm:$0xf]
      %v297 = vld [vmem:[%s235 + $0x14] sm:$0xf]
      %v298 = vld [vmem:[%s235 + $0x18] sm:$0xf]
      %v299 = vld [vmem:[%s235 + $0x1c] sm:$0xf]
      %v300 = vld [vmem:[%s235 + $0x20] sm:$0xf]
      %v301 = vld [vmem:[%s235 + $0x24] sm:$0xf]
      %v302 = vld [vmem:[%s235 + $0x28] sm:$0xf]
      %v303 = vld [vmem:[%s235 + $0x2c] sm:$0xf]
      %v304 = vld [vmem:[%s235 + $0x30] sm:$0xf]
      %v305 = vld [vmem:[%s235 + $0x34] sm:$0xf]
      %v306 = vld [vmem:[%s235 + $0x38] sm:$0xf]
      %v307 = vld [vmem:[%s235 + $0x3c] sm:$0xf]
      %v308 = vld [vmem:[%s235 + $0x40] sm:$0xf]
      %v309 = vld [vmem:[%s235 + $0x44] sm:$0xf]
      %v310 = vld [vmem:[%s235 + $0x48] sm:$0xf]
      %v311 = vld [vmem:[%s235 + $0x4c] sm:$0xf]
      %v312 = vld [vmem:[%s235 + $0x50] sm:$0xf]
      %v313 = vld [vmem:[%s235 + $0x54] sm:$0xf]
      %v314 = vld [vmem:[%s235 + $0x58] sm:$0xf]
      %v315 = vld [vmem:[%s235 + $0x5c] sm:$0xf]
      %v316 = vld [vmem:[%s235 + $0x60] sm:$0xf]
      %v317 = vld [vmem:[%s235 + $0x64] sm:$0xf]
      %v318 = vld [vmem:[%s235 + $0x68] sm:$0xf]
      %v319 = vld [vmem:[%s235 + $0x6c] sm:$0xf]
      %v320 = vld [vmem:[%s235 + $0x70] sm:$0xf]
      %v321 = vld [vmem:[%s235 + $0x74] sm:$0xf]
      %v322 = vld [vmem:[%s235 + $0x78] sm:$0xf]
      %v323 = vld [vmem:[%s235 + $0x7c] sm:$0xf]
      %v324 = vld [vmem:[%s235 + $0x80] sm:$0xf]
      %v325 = vld [vmem:[%s235 + $0x84] sm:$0xf]
      %v326 = vld [vmem:[%s235 + $0x88] sm:$0xf]
      %v327 = vld [vmem:[%s235 + $0x8c] sm:$0xf]
      %v328 = vld [vmem:[%s235 + $0x90] sm:$0xf]
      %v329 = vld [vmem:[%s235 + $0x94] sm:$0xf]
      %v330 = vld [vmem:[%s235 + $0x98] sm:$0xf]
      %v331 = vld [vmem:[%s235 + $0x9c] sm:$0xf]
      %v332 = vld [vmem:[%s235 + $0xa0] sm:$0xf]
      %v333 = vld [vmem:[%s235 + $0xa4] sm:$0xf]
      %v334 = vld [vmem:[%s235 + $0xa8] sm:$0xf]
      %v335 = vld [vmem:[%s235 + $0xac] sm:$0xf]
      %v336 = vld [vmem:[%s235 + $0xb0] sm:$0xf]
      %v337 = vld [vmem:[%s235 + $0xb4] sm:$0xf]
      %v338 = vld [vmem:[%s235 + $0xb8] sm:$0xf]
      %v339 = vld [vmem:[%s235 + $0xbc] sm:$0xf]
      %v340 = vld [vmem:[%s235 + $0xc0] sm:$0xf]
      %v341 = vld [vmem:[%s235 + $0xc4] sm:$0xf]
      %v342 = vld [vmem:[%s235 + $0xc8] sm:$0xf]
      %v343 = vld [vmem:[%s235 + $0xcc] sm:$0xf]
      %v344 = vld [vmem:[%s235 + $0xd0] sm:$0xf]
      %v345 = vld [vmem:[%s235 + $0xd4] sm:$0xf]
      %v346 = vld [vmem:[%s235 + $0xd8] sm:$0xf]
      %v347 = vld [vmem:[%s235 + $0xdc] sm:$0xf]
      %v348 = vld [vmem:[%s235 + $0xe0] sm:$0xf]
      %v349 = vld [vmem:[%s235 + $0xe4] sm:$0xf]
      %v350 = vld [vmem:[%s235 + $0xe8] sm:$0xf]
      %v351 = vld [vmem:[%s235 + $0xec] sm:$0xf]
      %v352 = vld [vmem:[%s235 + $0xf0] sm:$0xf]
      %v353 = vld [vmem:[%s235 + $0xf4] sm:$0xf]
      %v354 = vld [vmem:[%s235 + $0xf8] sm:$0xf]
      %v355 = vld [vmem:[%s235 + $0xfc] sm:$0xf]
      %v372 = vunpack.c.l.b16 %v276
      %v373 = vunpack.c.h.b16 %v276
      %v374 = vunpack.c.l.b16 %v277
      %v375 = vunpack.c.h.b16 %v277
      %v376 = vunpack.c.l.b16 %v278
      %v377 = vunpack.c.h.b16 %v278
      %v378 = vunpack.c.l.b16 %v279
      %v379 = vunpack.c.h.b16 %v279
      %v380 = vunpack.c.l.b16 %v280
      %v381 = vunpack.c.h.b16 %v280
      %v382 = vunpack.c.l.b16 %v281
      %v383 = vunpack.c.h.b16 %v281
      %v384 = vunpack.c.l.b16 %v282
      %v385 = vunpack.c.h.b16 %v282
      %v386 = vunpack.c.l.b16 %v283
      %v387 = vunpack.c.h.b16 %v283
      %v388 = vunpack.c.l.b16 %v284
      %v389 = vunpack.c.h.b16 %v284
      %v390 = vunpack.c.l.b16 %v285
      %v391 = vunpack.c.h.b16 %v285
      %v392 = vunpack.c.l.b16 %v286
      %v393 = vunpack.c.h.b16 %v286
      %v394 = vunpack.c.l.b16 %v287
      %v395 = vunpack.c.h.b16 %v287
      %v396 = vunpack.c.l.b16 %v288
      %v397 = vunpack.c.h.b16 %v288
      %v398 = vunpack.c.l.b16 %v289
      %v399 = vunpack.c.h.b16 %v289
      %v400 = vunpack.c.l.b16 %v290
      %v401 = vunpack.c.h.b16 %v290
      %v402 = vunpack.c.l.b16 %v291
      %v403 = vunpack.c.h.b16 %v291
      %v404 = vpack.c.b16 %v376, %v372
      %v405 = vpack.c.b16 %v377, %v373
      %v406 = vpack.c.b16 %v378, %v374
      %v407 = vpack.c.b16 %v379, %v375
      %v408 = vpack.c.b16 %v384, %v380
      %v409 = vpack.c.b16 %v385, %v381
      %v410 = vpack.c.b16 %v386, %v382
      %v411 = vpack.c.b16 %v387, %v383
      %v412 = vpack.c.b16 %v392, %v388
      %v413 = vpack.c.b16 %v393, %v389
      %v414 = vpack.c.b16 %v394, %v390
      %v415 = vpack.c.b16 %v395, %v391
      %v416 = vpack.c.b16 %v400, %v396
      %v417 = vpack.c.b16 %v401, %v397
      %v418 = vpack.c.b16 %v402, %v398
      %v419 = vpack.c.b16 %v403, %v399
      %v500 = vunpack.c.l.b16 %v292
      %v501 = vunpack.c.l.b16 %v293
      %v502 = vunpack.c.l.b16 %v294
      %v503 = vunpack.c.l.b16 %v295
      %v504 = vunpack.c.l.b16 %v296
      %v505 = vunpack.c.l.b16 %v297
      %v506 = vunpack.c.l.b16 %v298
      %v507 = vunpack.c.l.b16 %v299
      %v508 = vunpack.c.l.b16 %v300
      %v509 = vunpack.c.l.b16 %v301
      %v510 = vunpack.c.l.b16 %v302
      %v511 = vunpack.c.l.b16 %v303
      %v512 = vunpack.c.l.b16 %v304
      %v513 = vunpack.c.l.b16 %v305
      %v514 = vunpack.c.l.b16 %v306
      %v515 = vunpack.c.l.b16 %v307
      %v516 = vunpack.c.l.b16 %v308
      %v517 = vunpack.c.l.b16 %v309
      %v518 = vunpack.c.l.b16 %v310
      %v519 = vunpack.c.l.b16 %v311
      %v520 = vunpack.c.l.b16 %v312
      %v521 = vunpack.c.l.b16 %v313
      %v522 = vunpack.c.l.b16 %v314
      %v523 = vunpack.c.l.b16 %v315
      %v524 = vunpack.c.l.b16 %v316
      %v525 = vunpack.c.l.b16 %v317
      %v526 = vunpack.c.l.b16 %v318
      %v527 = vunpack.c.l.b16 %v319
      %v528 = vunpack.c.l.b16 %v320
      %v529 = vunpack.c.l.b16 %v321
      %v530 = vunpack.c.l.b16 %v322
      %v531 = vunpack.c.l.b16 %v323
      %v532 = vunpack.c.l.b16 %v324
      %v533 = vunpack.c.l.b16 %v325
      %v534 = vunpack.c.l.b16 %v326
      %v535 = vunpack.c.l.b16 %v327
      %v536 = vunpack.c.l.b16 %v328
      %v537 = vunpack.c.l.b16 %v329
      %v538 = vunpack.c.l.b16 %v330
      %v539 = vunpack.c.l.b16 %v331
      %v540 = vunpack.c.l.b16 %v332
      %v541 = vunpack.c.l.b16 %v333
      %v542 = vunpack.c.l.b16 %v334
      %v543 = vunpack.c.l.b16 %v335
      %v544 = vunpack.c.l.b16 %v336
      %v545 = vunpack.c.l.b16 %v337
      %v546 = vunpack.c.l.b16 %v338
      %v547 = vunpack.c.l.b16 %v339
      %v548 = vunpack.c.l.b16 %v340
      %v549 = vunpack.c.l.b16 %v341
      %v550 = vunpack.c.l.b16 %v342
      %v551 = vunpack.c.l.b16 %v343
      %v552 = vunpack.c.l.b16 %v344
      %v553 = vunpack.c.l.b16 %v345
      %v554 = vunpack.c.l.b16 %v346
      %v555 = vunpack.c.l.b16 %v347
      %v556 = vunpack.c.l.b16 %v348
      %v557 = vunpack.c.l.b16 %v349
      %v558 = vunpack.c.l.b16 %v350
      %v559 = vunpack.c.l.b16 %v351
      %v560 = vunpack.c.l.b16 %v352
      %v561 = vunpack.c.l.b16 %v353
      %v562 = vunpack.c.l.b16 %v354
      %v563 = vunpack.c.l.b16 %v355
      %v564 = vpack.c.b16 %v501, %v500
      %v565 = vpack.c.b16 %v503, %v502
      %v566 = vpack.c.b16 %v505, %v504
      %v567 = vpack.c.b16 %v507, %v506
      %v568 = vpack.c.b16 %v509, %v508
      %v569 = vpack.c.b16 %v511, %v510
      %v570 = vpack.c.b16 %v513, %v512
      %v571 = vpack.c.b16 %v515, %v514
      %v572 = vpack.c.b16 %v517, %v516
      %v573 = vpack.c.b16 %v519, %v518
      %v574 = vpack.c.b16 %v521, %v520
      %v575 = vpack.c.b16 %v523, %v522
      %v576 = vpack.c.b16 %v525, %v524
      %v577 = vpack.c.b16 %v527, %v526
      %v578 = vpack.c.b16 %v529, %v528
      %v579 = vpack.c.b16 %v531, %v530
      %v580 = vpack.c.b16 %v533, %v532
      %v581 = vpack.c.b16 %v535, %v534
      %v582 = vpack.c.b16 %v537, %v536
      %v583 = vpack.c.b16 %v539, %v538
      %v584 = vpack.c.b16 %v541, %v540
      %v585 = vpack.c.b16 %v543, %v542
      %v586 = vpack.c.b16 %v545, %v544
      %v587 = vpack.c.b16 %v547, %v546
      %v588 = vpack.c.b16 %v549, %v548
      %v589 = vpack.c.b16 %v551, %v550
      %v590 = vpack.c.b16 %v553, %v552
      %v591 = vpack.c.b16 %v555, %v554
      %v592 = vpack.c.b16 %v557, %v556
      %v593 = vpack.c.b16 %v559, %v558
      %v594 = vpack.c.b16 %v561, %v560
      %v595 = vpack.c.b16 %v563, %v562
      %628 = vmatprep.subr.bf16.mxu0 0
      %629 = vmatpush1.bf16.msra.mxu0 %v571
      %630 = vmatprep.subr.bf16.mxu0 0
      %631 = vmatpush1.bf16.msra.mxu0 %v570
      %632 = vmatprep.subr.bf16.mxu0 0
      %633 = vmatpush1.bf16.msra.mxu0 %v569
      %634 = vmatprep.subr.bf16.mxu0 0
      %635 = vmatpush1.bf16.msra.mxu0 %v568
      %636 = vmatprep.subr.bf16.mxu0 0
      %637 = vmatpush1.bf16.msra.mxu0 %v567
      %638 = vmatprep.subr.bf16.mxu0 0
      %639 = vmatpush1.bf16.msra.mxu0 %v566
      %640 = vmatprep.subr.bf16.mxu0 0
      %641 = vmatpush1.bf16.msra.mxu0 %v565
      %642 = vmatprep.subr.bf16.mxu0 0
      %643 = vmatpush1.bf16.msra.mxu0 %v564
      %644 = vmatprep.subr.bf16.mxu0 0
      %645 = vmatpush2.bf16.msra.mxu0 %v579
      %646 = vmatprep.subr.bf16.mxu0 0
      %647 = vmatpush2.bf16.msra.mxu0 %v578
      %648 = vmatprep.subr.bf16.mxu0 0
      %649 = vmatpush2.bf16.msra.mxu0 %v577
      %650 = vmatprep.subr.bf16.mxu0 0
      %651 = vmatpush2.bf16.msra.mxu0 %v576
      %652 = vmatprep.subr.bf16.mxu0 0
      %653 = vmatpush2.bf16.msra.mxu0 %v575
      %654 = vmatprep.subr.bf16.mxu0 0
      %655 = vmatpush2.bf16.msra.mxu0 %v574
      %656 = vmatprep.subr.bf16.mxu0 0
      %657 = vmatpush2.bf16.msra.mxu0 %v573
      %658 = vmatprep.subr.bf16.mxu0 0
      %659 = vmatpush2.bf16.msra.mxu0 %v572
      %660 = vmatprep.mubr.bf16.mxu0 %v405
      %661 = vmatmul.mubr.bf16.gmra.mxu0 %v404
      %v662 = vpop.f32.mrf.mxu0
      %v663 = vadd.f32 0.0, %v662
      %v664 = vpop.f32.mrf.mxu0
      %v665 = vpop.f32.mrf.mxu0
      %v666 = vadd.f32 0.0, %v665
      %v667 = vpop.f32.mrf.mxu0
      %668 = vmatprep.mubr.bf16.mxu0 %v409
      %669 = vmatmul.mubr.bf16.gmra.mxu0 %v408
      %v670 = vpop.f32.mrf.mxu0
      %v671 = vadd.f32 0.0, %v670
      %v672 = vpop.f32.mrf.mxu0
      %v673 = vpop.f32.mrf.mxu0
      %v674 = vadd.f32 0.0, %v673
      %v675 = vpop.f32.mrf.mxu0
      %676 = vmatprep.mubr.bf16.mxu0 %v413
      %677 = vmatmul.mubr.bf16.gmra.mxu0 %v412
      %v678 = vpop.f32.mrf.mxu0
      %v679 = vadd.f32 0.0, %v678
      %v680 = vpop.f32.mrf.mxu0
      %v681 = vpop.f32.mrf.mxu0
      %v682 = vadd.f32 0.0, %v681
      %v683 = vpop.f32.mrf.mxu0
      %684 = vmatprep.mubr.bf16.mxu0 %v417
      %685 = vmatmul.mubr.bf16.gmra.mxu0 %v416
      %v686 = vpop.f32.mrf.mxu0
      %v687 = vadd.f32 0.0, %v686
      %v688 = vpop.f32.mrf.mxu0
      %v689 = vpop.f32.mrf.mxu0
      %v690 = vadd.f32 0.0, %v689
      %v691 = vpop.f32.mrf.mxu0
      %692 = vdwg.mxu0
      %693 = vmatprep.subr.bf16.mxu0 0
      %694 = vmatpush1.bf16.msra.mxu0 %v587
      %695 = vmatprep.subr.bf16.mxu0 0
      %696 = vmatpush1.bf16.msra.mxu0 %v586
      %697 = vmatprep.subr.bf16.mxu0 0
      %698 = vmatpush1.bf16.msra.mxu0 %v585
      %699 = vmatprep.subr.bf16.mxu0 0
      %700 = vmatpush1.bf16.msra.mxu0 %v584
      %701 = vmatprep.subr.bf16.mxu0 0
      %702 = vmatpush1.bf16.msra.mxu0 %v583
      %703 = vmatprep.subr.bf16.mxu0 0
      %704 = vmatpush1.bf16.msra.mxu0 %v582
      %705 = vmatprep.subr.bf16.mxu0 0
      %706 = vmatpush1.bf16.msra.mxu0 %v581
      %707 = vmatprep.subr.bf16.mxu0 0
      %708 = vmatpush1.bf16.msra.mxu0 %v580
      %709 = vmatprep.subr.bf16.mxu0 0
      %710 = vmatpush2.bf16.msra.mxu0 %v595
      %711 = vmatprep.subr.bf16.mxu0 0
      %712 = vmatpush2.bf16.msra.mxu0 %v594
      %713 = vmatprep.subr.bf16.mxu0 0
      %714 = vmatpush2.bf16.msra.mxu0 %v593
      %715 = vmatprep.subr.bf16.mxu0 0
      %716 = vmatpush2.bf16.msra.mxu0 %v592
      %717 = vmatprep.subr.bf16.mxu0 0
      %718 = vmatpush2.bf16.msra.mxu0 %v591
      %719 = vmatprep.subr.bf16.mxu0 0
      %720 = vmatpush2.bf16.msra.mxu0 %v590
      %721 = vmatprep.subr.bf16.mxu0 0
      %722 = vmatpush2.bf16.msra.mxu0 %v589
      %723 = vmatprep.subr.bf16.mxu0 0
      %724 = vmatpush2.bf16.msra.mxu0 %v588
      %725 = vmatprep.mubr.bf16.mxu0 %v407
      %726 = vmatmul.mubr.bf16.gmra.mxu0 %v406
      %v727 = vpop.f32.mrf.mxu0
      %v728 = vadd.f32 %v663, %v727
      %v729 = vpop.f32.mrf.mxu0
      %v730 = vpop.f32.mrf.mxu0
      %v731 = vadd.f32 %v666, %v730
      %v732 = vpop.f32.mrf.mxu0
      %733 = vmatprep.mubr.bf16.mxu0 %v411
      %734 = vmatmul.mubr.bf16.gmra.mxu0 %v410
      %v735 = vpop.f32.mrf.mxu0
      %v736 = vadd.f32 %v671, %v735
      %v737 = vpop.f32.mrf.mxu0
      %v738 = vpop.f32.mrf.mxu0
      %v739 = vadd.f32 %v674, %v738
      %v740 = vpop.f32.mrf.mxu0
      %741 = vmatprep.mubr.bf16.mxu0 %v415
      %742 = vmatmul.mubr.bf16.gmra.mxu0 %v414
      %v743 = vpop.f32.mrf.mxu0
      %v744 = vadd.f32 %v679, %v743
      %v745 = vpop.f32.mrf.mxu0
      %v746 = vpop.f32.mrf.mxu0
      %v747 = vadd.f32 %v682, %v746
      %v748 = vpop.f32.mrf.mxu0
      %749 = vmatprep.mubr.bf16.mxu0 %v419
      %750 = vmatmul.mubr.bf16.gmra.mxu0 %v418
      %v751 = vpop.f32.mrf.mxu0
      %v752 = vadd.f32 %v687, %v751
      %v753 = vpop.f32.mrf.mxu0
      %v754 = vpop.f32.mrf.mxu0
      %v755 = vadd.f32 %v690, %v754
      %v756 = vpop.f32.mrf.mxu0
      %757 = vdwg.mxu0
      %758 = vst [vmem:[%s243] sm:$0xff] %v728
      %759 = vst [vmem:[%s243 + $0x8] sm:$0xff] %v731
      %760 = vst [vmem:[%s243 + $0x10] sm:$0xff] %v736
      %761 = vst [vmem:[%s243 + $0x18] sm:$0xff] %v739
      %762 = vst [vmem:[%s243 + $0x20] sm:$0xff] %v744
      %763 = vst [vmem:[%s243 + $0x28] sm:$0xff] %v747
      %764 = vst [vmem:[%s243 + $0x30] sm:$0xff] %v752
      %765 = vst [vmem:[%s243 + $0x38] sm:$0xff] %v755
      %v766 = vld [vmem:[%s248] sm:$0xff]
      %v767 = vld [vmem:[%s248 + $0x8] sm:$0xff]
      %v768 = vld [vmem:[%s248 + $0x10] sm:$0xff]
      %v769 = vld [vmem:[%s248 + $0x18] sm:$0xff]
      %v770 = vld [vmem:[%s248 + $0x20] sm:$0xff]
      %v771 = vld [vmem:[%s248 + $0x28] sm:$0xff]
      %v772 = vld [vmem:[%s248 + $0x30] sm:$0xff]
      %v773 = vld [vmem:[%s248 + $0x38] sm:$0xff]
      %774 = vadd.xlane.f32.xlu0 %v728
      %v775 = vpop.xlane.xlu0 %774
      %776 = vadd.xlane.f32.xlu0 %v731
      %v777 = vpop.xlane.xlu0 %776
      %778 = vadd.xlane.f32.xlu0 %v736
      %v779 = vpop.xlane.xlu0 %778
      %780 = vadd.xlane.f32.xlu0 %v739
      %v781 = vpop.xlane.xlu0 %780
      %782 = vadd.xlane.f32.xlu0 %v744
      %v783 = vpop.xlane.xlu0 %782
      %784 = vadd.xlane.f32.xlu0 %v747
      %v785 = vpop.xlane.xlu0 %784
      %786 = vadd.xlane.f32.xlu0 %v752
      %v787 = vpop.xlane.xlu0 %786
      %788 = vadd.xlane.f32.xlu0 %v755
      %v789 = vpop.xlane.xlu0 %788
      %v790 = vadd.f32 %v766, %v775
      %v791 = vadd.f32 %v767, %v777
      %v792 = vadd.f32 %v768, %v779
      %v793 = vadd.f32 %v769, %v781
      %v794 = vadd.f32 %v770, %v783
      %v795 = vadd.f32 %v771, %v785
      %v796 = vadd.f32 %v772, %v787
      %v797 = vadd.f32 %v773, %v789
      %vm798 = vcmask 7168
      %799 = vst.msk [vmem:[%s248] sm:$0xff] %vm798, %v790
      %800 = vst.msk [vmem:[%s248 + $0x8] sm:$0xff] %vm798, %v791
      %801 = vst.msk [vmem:[%s248 + $0x10] sm:$0xff] %vm798, %v792
      %802 = vst.msk [vmem:[%s248 + $0x18] sm:$0xff] %vm798, %v793
      %803 = vst.msk [vmem:[%s248 + $0x20] sm:$0xff] %vm798, %v794
      %804 = vst.msk [vmem:[%s248 + $0x28] sm:$0xff] %vm798, %v795
      %805 = vst.msk [vmem:[%s248 + $0x30] sm:$0xff] %vm798, %v796
      %806 = vst.msk [vmem:[%s248 + $0x38] sm:$0xff] %vm798, %v797
      %v807 = vld [vmem:[%s253] sm:$0xff]
      %v808 = vld [vmem:[%s253 + $0x8] sm:$0xff]
      %v809 = vld [vmem:[%s253 + $0x10] sm:$0xff]
      %v810 = vld [vmem:[%s253 + $0x18] sm:$0xff]
      %v811 = vld [vmem:[%s253 + $0x20] sm:$0xff]
      %v812 = vld [vmem:[%s253 + $0x28] sm:$0xff]
      %v813 = vld [vmem:[%s253 + $0x30] sm:$0xff]
      %v814 = vld [vmem:[%s253 + $0x38] sm:$0xff]
      %v815 = vmul.f32 %v728, %v728
      %v816 = vmul.f32 %v731, %v731
      %v817 = vmul.f32 %v736, %v736
      %v818 = vmul.f32 %v739, %v739
      %v819 = vmul.f32 %v744, %v744
      %v820 = vmul.f32 %v747, %v747
      %v821 = vmul.f32 %v752, %v752
      %v822 = vmul.f32 %v755, %v755
      %823 = vadd.xlane.f32.xlu0 %v815
      %v824 = vpop.xlane.xlu0 %823
      %825 = vadd.xlane.f32.xlu0 %v816
      %v826 = vpop.xlane.xlu0 %825
      %827 = vadd.xlane.f32.xlu0 %v817
      %v828 = vpop.xlane.xlu0 %827
      %829 = vadd.xlane.f32.xlu0 %v818
      %v830 = vpop.xlane.xlu0 %829
      %831 = vadd.xlane.f32.xlu0 %v819
      %v832 = vpop.xlane.xlu0 %831
      %833 = vadd.xlane.f32.xlu0 %v820
      %v834 = vpop.xlane.xlu0 %833
      %835 = vadd.xlane.f32.xlu0 %v821
      %v836 = vpop.xlane.xlu0 %835
      %837 = vadd.xlane.f32.xlu0 %v822
      %v838 = vpop.xlane.xlu0 %837
      %v839 = vadd.f32 %v807, %v824
      %v840 = vadd.f32 %v808, %v826
      %v841 = vadd.f32 %v809, %v828
      %v842 = vadd.f32 %v810, %v830
      %v843 = vadd.f32 %v811, %v832
      %v844 = vadd.f32 %v812, %v834
      %v845 = vadd.f32 %v813, %v836
      %v846 = vadd.f32 %v814, %v838
      %847 = vst.msk [vmem:[%s253] sm:$0xff] %vm798, %v839
      %848 = vst.msk [vmem:[%s253 + $0x8] sm:$0xff] %vm798, %v840
      %849 = vst.msk [vmem:[%s253 + $0x10] sm:$0xff] %vm798, %v841
      %850 = vst.msk [vmem:[%s253 + $0x18] sm:$0xff] %vm798, %v842
      %851 = vst.msk [vmem:[%s253 + $0x20] sm:$0xff] %vm798, %v843
      %852 = vst.msk [vmem:[%s253 + $0x28] sm:$0xff] %vm798, %v844
      %853 = vst.msk [vmem:[%s253 + $0x30] sm:$0xff] %vm798, %v845
      %854 = vst.msk [vmem:[%s253 + $0x38] sm:$0xff] %vm798, %v846
      %p855 = scmp.lt.s32.totalorder %s20, 1
      %s856 = scalar_select %p855, %s20, 1
      %p857 = scmp.lt.s32.totalorder %s21, 0
      %s858 = scalar_select %p857, %s21, 0
      %s859 = smul.addr %s856, 8
      %s860 = sadd.s32 %s858, %s859
      %s861 = smul.addr %s860, 8
      %s862 = scalar_lea.vmem %s2, %s861
      %p863 = scmp.lt.s32.totalorder %s20, 1
      %s864 = scalar_select %p863, %s20, 1
      %s865 = smul.addr %s864, 8
      %s866 = smul.addr %s865, 8
      %s867 = scalar_lea.vmem %s3, %s866
      %p868 = scmp.lt.s32.totalorder %s20, 1
      %s869 = scalar_select %p868, %s20, 1
      %s870 = smul.addr %s869, 8
      %s871 = smul.addr %s870, 8
      %s872 = scalar_lea.vmem %s4, %s871
      // Predicated region
      $region33: #{discriminator_forward.21} parent=27 // pred_check
        %p873 = pneg %p97
      $region34: #{discriminator_forward.21} parent=27 // pred_check_branch
        %875 = sbr.rel (%p873) target = $region36
      $region35: #{discriminator_forward.21} parent=27 // pred_region
        _
      $region36: #{discriminator_forward.21} parent=27 // pred_fallthru
        _
      // Predicated region
      $region37: #{discriminator_forward.21} parent=27 // pred_check
        %p876 = pneg %p123
      $region38: #{discriminator_forward.21} parent=27 // pred_check_branch
        %878 = sbr.rel (%p876) target = $region40
      $region39: #{discriminator_forward.21} parent=27 // pred_region
        _
      $region40: #{discriminator_forward.21} parent=27 // pred_fallthru
        _
      // Predicated region
      $region41: #{discriminator_forward.21} parent=27 // pred_check
        %p879 = pneg %p149
      $region42: #{discriminator_forward.21} parent=27 // pred_check_branch
        %881 = sbr.rel (%p879) target = $region44
      $region43: #{discriminator_forward.21} parent=27 // pred_region
        _
      $region44: #{discriminator_forward.21} parent=27 // pred_fallthru
        _
    $region28: #{discriminator_forward.21} parent=5 // pred_fallthru
      _
    %p882 = scmp.le.s32.totalorder 2, %s11
    // Predicated region
    $region45: #{discriminator_forward.21} parent=5 // pred_check
      %p883 = pneg %p882
    $region46: #{discriminator_forward.21} parent=5 // pred_check_branch
      %885 = sbr.rel (%p883) target = $region48
    $region47: #{discriminator_forward.21} parent=5 // pred_region
      %s886 = ssub.s32 %s11, 2
      // Predicated region
      $region49: #{discriminator_forward.21} parent=47 // pred_check
        %p887 = pneg %p103
      $region50: #{discriminator_forward.21} parent=47 // pred_check_branch
        %889 = sbr.rel (%p887) target = $region52
      $region51: #{discriminator_forward.21} parent=47 // pred_region
        %p890 = scmp.lt.s32.totalorder %s22, 1
        %s891 = scalar_select %p890, %s22, 1
        %p892 = scmp.lt.s32.totalorder %s23, 0
        %s893 = scalar_select %p892, %s23, 0
        %s894 = smul.addr %s891, 8
        %s895 = sadd.s32 %s893, %s894
        %s896 = smul.addr %s895, 8
        %s897 = scalar_lea.vmem %s2, %s896
      $region52: #{discriminator_forward.21} parent=47 // pred_fallthru
        _
      // Predicated region
      $region53: #{discriminator_forward.21} parent=47 // pred_check
        %p898 = pneg %p129
      $region54: #{discriminator_forward.21} parent=47 // pred_check_branch
        %900 = sbr.rel (%p898) target = $region56
      $region55: #{discriminator_forward.21} parent=47 // pred_region
        %p901 = scmp.lt.s32.totalorder %s22, 1
        %s902 = scalar_select %p901, %s22, 1
        %s903 = smul.addr %s902, 8
        %s904 = smul.addr %s903, 8
        %s905 = scalar_lea.vmem %s3, %s904
      $region56: #{discriminator_forward.21} parent=47 // pred_fallthru
        _
      // Predicated region
      $region57: #{discriminator_forward.21} parent=47 // pred_check
        %p906 = pneg %p155
      $region58: #{discriminator_forward.21} parent=47 // pred_check_branch
        %908 = sbr.rel (%p906) target = $region60
      $region59: #{discriminator_forward.21} parent=47 // pred_region
        %p909 = scmp.lt.s32.totalorder %s22, 1
        %s910 = scalar_select %p909, %s22, 1
        %s911 = smul.addr %s910, 8
        %s912 = smul.addr %s911, 8
        %s913 = scalar_lea.vmem %s4, %s912
      $region60: #{discriminator_forward.21} parent=47 // pred_fallthru
        _
    $region48: #{discriminator_forward.21} parent=5 // pred_fallthru
      _
  $region6: #{discriminator_forward.21} parent=0 // loop_footer
    %s15 = sadd.s32 1, %s11
  $region7: #{discriminator_forward.21} parent=0 // loop_footer_branch
    %10 = sbr.rel target = $region3
  $region8: #{discriminator_forward.21} parent=0 // loop_exit
    _

// kernel: discriminator_forward.22
$region0: #{discriminator_forward.22}
  #allocation0 [shape = 'u32[]', space=smem, size = 0x4, offset = 0x4, fixed_abs, tag = 'smem constant byte address 0x4 - core index']
  #allocation1 [shape = 'u32[144,128]{1,0:T(1,128)}', space=vmem, size = 0x12000, scoped, tag = 'internal scratch']
  %s0 = inlined_call_operand.vmem [shape: f32[2,64,128], index: 0, kind: input, shape index: {}]
  %s1 = inlined_call_operand.vmem [shape: f32[2,64,1], index: 1, kind: input, shape index: {}]
  %s2 = inlined_call_operand.vmem [shape: f32[2,64,1], index: 2, kind: input, shape index: {}]
  %s3 = inlined_call_operand.vmem [shape: f32[2,64,128], index: 3, kind: output, shape index: {}]
  %s4 = sld [smem:[#allocation0]]
  $region45: #{discriminator_forward.22} parent=0
    _
  %s6 = ssub.s32 1, %s4
  %s7 = scalar_select 0, %s6, %s4
  loop: start=0, step=1, limit=4
  $region2: #{discriminator_forward.22} parent=0 // loop_pre_header
    _
  $region3: #{discriminator_forward.22} parent=0 // loop_header
    %s9 = sphi 0, %s13
    %p10 = scmp.ge.s32.totalorder %s9, 4
    %s16 = sphi 0, %s28
    %s17 = sphi 0, %s24
    %s18 = sphi 0, %s16
    %s19 = sphi 0, %s17
    %s20 = sphi 0, %s18
    %s21 = sphi 0, %s19
    %s33 = sphi 0, %s35
    %s36 = sphi 0, %s33
    %s37 = sphi 0, %s36
    %s53 = sphi 0, %s37
    %s59 = sphi 0, %s61
    %s62 = sphi 0, %s59
    %s63 = sphi 0, %s62
    %s79 = sphi 0, %s63
    %s85 = sphi 0, %s87
    %s88 = sphi 0, %s85
    %s89 = sphi 0, %s88
    %s105 = sphi 0, %s89
    %s113 = sphi 0, %s115
    %s116 = sphi 0, %s113
    %s117 = sphi 0, %s116
    %s133 = sphi 0, %s117
  $region4: #{discriminator_forward.22} parent=0 // loop_header_branch
    %12 = sbr.rel (%p10) target = $region8
  $region5: #{discriminator_forward.22} parent=0 // loop_body
    %s14 = ssub.s32 %s9, 1
    %s15 = ssub.s32 %s9, 2
    %s22 = sadd.s32 1, %s17
    %p23 = scmp.ge.s32.totalorder %s22, 1
    %s24 = scalar_select %p23, 0, %s22
    %s25 = sadd.s32 1, %s16
    %s26 = scalar_select %p23, %s25, %s16
    %p27 = scmp.ge.s32.totalorder %s26, 2
    %s28 = scalar_select %p27, 0, %s26
    %s29 = ssub.s32 %s16, %s28
    %s30 = ssub.s32 %s17, %s24
    %s31 = sor.u32 %s29, %s30
    %p32 = scmp.eq.s32.totalorder %s31, 0
    %s34 = sadd.s32 %s33, 1
    %s35 = scalar_select %p32, %s33, %s34
    %p38 = pneg %p32
    %p39 = scmp.eq.s32.totalorder %s9, 1
    %p40 = por %p38, %p39
    %p41 = scmp.ne.s32.totalorder %s33, %s36
    %p42 = scmp.eq.s32.totalorder %s9, 0
    %p43 = por %p41, %p42
    %p44 = scmp.ne.s32.totalorder %s33, %s36
    %p45 = scmp.eq.s32.totalorder %s14, 1
    %p46 = por %p44, %p45
    %p47 = scmp.ne.s32.totalorder %s36, %s37
    %p48 = scmp.eq.s32.totalorder %s14, 0
    %p49 = por %p47, %p48
    %p50 = scmp.ne.s32.totalorder %s36, %s37
    %p51 = scmp.eq.s32.totalorder %s15, 1
    %p52 = por %p50, %p51
    %p54 = scmp.ne.s32.totalorder %s37, %s53
    %p55 = scmp.eq.s32.totalorder %s15, 0
    %p56 = por %p54, %p55
    %s57 = ssub.s32 %s16, %s28
    %p58 = scmp.eq.s32.totalorder %s57, 0
    %s60 = sadd.s32 %s59, 1
    %s61 = scalar_select %p58, %s59, %s60
    %p64 = pneg %p58
    %p65 = scmp.eq.s32.totalorder %s9, 1
    %p66 = por %p64, %p65
    %p67 = scmp.ne.s32.totalorder %s59, %s62
    %p68 = scmp.eq.s32.totalorder %s9, 0
    %p69 = por %p67, %p68
    %p70 = scmp.ne.s32.totalorder %s59, %s62
    %p71 = scmp.eq.s32.totalorder %s14, 1
    %p72 = por %p70, %p71
    %p73 = scmp.ne.s32.totalorder %s62, %s63
    %p74 = scmp.eq.s32.totalorder %s14, 0
    %p75 = por %p73, %p74
    %p76 = scmp.ne.s32.totalorder %s62, %s63
    %p77 = scmp.eq.s32.totalorder %s15, 1
    %p78 = por %p76, %p77
    %p80 = scmp.ne.s32.totalorder %s63, %s79
    %p81 = scmp.eq.s32.totalorder %s15, 0
    %p82 = por %p80, %p81
    %s83 = ssub.s32 %s16, %s28
    %p84 = scmp.eq.s32.totalorder %s83, 0
    %s86 = sadd.s32 %s85, 1
    %s87 = scalar_select %p84, %s85, %s86
    %p90 = pneg %p84
    %p91 = scmp.eq.s32.totalorder %s9, 1
    %p92 = por %p90, %p91
    %p93 = scmp.ne.s32.totalorder %s85, %s88
    %p94 = scmp.eq.s32.totalorder %s9, 0
    %p95 = por %p93, %p94
    %p96 = scmp.ne.s32.totalorder %s85, %s88
    %p97 = scmp.eq.s32.totalorder %s14, 1
    %p98 = por %p96, %p97
    %p99 = scmp.ne.s32.totalorder %s88, %s89
    %p100 = scmp.eq.s32.totalorder %s14, 0
    %p101 = por %p99, %p100
    %p102 = scmp.ne.s32.totalorder %s88, %s89
    %p103 = scmp.eq.s32.totalorder %s15, 1
    %p104 = por %p102, %p103
    %p106 = scmp.ne.s32.totalorder %s89, %s105
    %p107 = scmp.eq.s32.totalorder %s15, 0
    %p108 = por %p106, %p107
    %s109 = ssub.s32 %s16, %s28
    %s110 = ssub.s32 %s17, %s24
    %s111 = sor.u32 %s109, %s110
    %p112 = scmp.eq.s32.totalorder %s111, 0
    %s114 = sadd.s32 %s113, 1
    %s115 = scalar_select %p112, %s113, %s114
    %p118 = pneg %p112
    %p119 = scmp.eq.s32.totalorder %s9, 1
    %p120 = por %p118, %p119
    %p121 = scmp.ne.s32.totalorder %s113, %s116
    %p122 = scmp.eq.s32.totalorder %s9, 0
    %p123 = por %p121, %p122
    %p124 = scmp.ne.s32.totalorder %s113, %s116
    %p125 = scmp.eq.s32.totalorder %s14, 1
    %p126 = por %p124, %p125
    %p127 = scmp.ne.s32.totalorder %s116, %s117
    %p128 = scmp.eq.s32.totalorder %s14, 0
    %p129 = por %p127, %p128
    %p130 = scmp.ne.s32.totalorder %s116, %s117
    %p131 = scmp.eq.s32.totalorder %s15, 1
    %p132 = por %p130, %p131
    %p134 = scmp.ne.s32.totalorder %s117, %s133
    %p135 = scmp.eq.s32.totalorder %s15, 0
    %p136 = por %p134, %p135
    %p137 = scmp.le.s32.totalorder 1, %s9
    %p138 = scmp.lt.s32.totalorder %s9, 3
    %p139 = pnand %p137, %p138
    %p140 = pneg %p139
    // Predicated region
    $region9: #{discriminator_forward.22} parent=5 // pred_check
      _
    $region10: #{discriminator_forward.22} parent=5 // pred_check_branch
      %142 = sbr.rel (%p139) target = $region12
    $region11: #{discriminator_forward.22} parent=5 // pred_region
      %s143 = ssub.s32 %s9, 1
    $region12: #{discriminator_forward.22} parent=5 // pred_fallthru
      _
    %p144 = scmp.lt.s32.totalorder %s9, 2
    // Predicated region
    $region13: #{discriminator_forward.22} parent=5 // pred_check
      %p145 = pneg %p144
    $region14: #{discriminator_forward.22} parent=5 // pred_check_branch
      %147 = sbr.rel (%p145) target = $region16
    $region15: #{discriminator_forward.22} parent=5 // pred_region
      // Predicated region
      $region17: #{discriminator_forward.22} parent=15 // pred_check
        %p148 = pneg %p43
      $region18: #{discriminator_forward.22} parent=15 // pred_check_branch
        %150 = sbr.rel (%p148) target = $region20
      $region19: #{discriminator_forward.22} parent=15 // pred_region
        %p151 = scmp.lt.s32.totalorder %s16, 1
        %s152 = scalar_select %p151, %s16, 1
        %p153 = scmp.lt.s32.totalorder %s17, 0
        %s154 = scalar_select %p153, %s17, 0
        %s155 = smul.addr %s152, 8
        %s156 = sadd.s32 %s154, %s155
        %s157 = smul.addr %s156, 8
        %s158 = scalar_lea.vmem %s0, %s157
      $region20: #{discriminator_forward.22} parent=15 // pred_fallthru
        _
      // Predicated region
      $region21: #{discriminator_forward.22} parent=15 // pred_check
        %p159 = pneg %p69
      $region22: #{discriminator_forward.22} parent=15 // pred_check_branch
        %161 = sbr.rel (%p159) target = $region24
      $region23: #{discriminator_forward.22} parent=15 // pred_region
        %p162 = scmp.lt.s32.totalorder %s16, 1
        %s163 = scalar_select %p162, %s16, 1
        %s164 = smul.addr %s163, 8
        %s165 = smul.addr %s164, 8
        %s166 = scalar_lea.vmem %s1, %s165
      $region24: #{discriminator_forward.22} parent=15 // pred_fallthru
        _
      // Predicated region
      $region25: #{discriminator_forward.22} parent=15 // pred_check
        %p167 = pneg %p95
      $region26: #{discriminator_forward.22} parent=15 // pred_check_branch
        %169 = sbr.rel (%p167) target = $region28
      $region27: #{discriminator_forward.22} parent=15 // pred_region
        %p170 = scmp.lt.s32.totalorder %s16, 1
        %s171 = scalar_select %p170, %s16, 1
        %s172 = smul.addr %s171, 8
        %s173 = smul.addr %s172, 8
        %s174 = scalar_lea.vmem %s2, %s173
      $region28: #{discriminator_forward.22} parent=15 // pred_fallthru
        _
    $region16: #{discriminator_forward.22} parent=5 // pred_fallthru
      _
    %p175 = scmp.le.s32.totalorder 1, %s9
    %p176 = scmp.lt.s32.totalorder %s9, 3
    %p177 = pnand %p175, %p176
    %p178 = pneg %p177
    // Predicated region
    $region29: #{discriminator_forward.22} parent=5 // pred_check
      _
    $region30: #{discriminator_forward.22} parent=5 // pred_check_branch
      %180 = sbr.rel (%p177) target = $region32
    $region31: #{discriminator_forward.22} parent=5 // pred_region
      %s181 = ssub.s32 %s9, 1
      %p182 = scmp.lt.s32.totalorder %s18, 1
      %s183 = scalar_select %p182, %s18, 1
      %p184 = scmp.lt.s32.totalorder %s19, 0
      %s185 = scalar_select %p184, %s19, 0
      %s186 = smul.addr %s183, 8
      %s187 = sadd.s32 %s185, %s186
      %s188 = smul.addr %s187, 8
      %s189 = scalar_lea.vmem %s0, %s188
      %p190 = pneg %p49
      %p191 = pneg %p46
      %p192 = scmp.lt.s32.totalorder %s18, 1
      %s193 = scalar_select %p192, %s18, 1
      %s194 = smul.addr %s193, 8
      %s195 = smul.addr %s194, 8
      %s196 = scalar_lea.vmem %s1, %s195
      %p197 = pneg %p75
      %p198 = pneg %p72
      %p199 = scmp.lt.s32.totalorder %s18, 1
      %s200 = scalar_select %p199, %s18, 1
      %s201 = smul.addr %s200, 8
      %s202 = smul.addr %s201, 8
      %s203 = scalar_lea.vmem %s2, %s202
      %p204 = pneg %p101
      %p205 = pneg %p98
      %p206 = pneg %p129
      %p207 = pneg %p126
      %p208 = scmp.lt.s32.totalorder %s18, 1
      %s209 = scalar_select %p208, %s18, 1
      %p210 = scmp.lt.s32.totalorder %s19, 0
      %s211 = scalar_select %p210, %s19, 0
      %s212 = smul.addr %s209, 8
      %s213 = sadd.s32 %s211, %s212
      %s214 = smul.addr %s213, 8
      %s215 = scalar_lea.vmem %s3, %s214
      %p216 = scmp.lt.s32.totalorder %s18, 1
      %s217 = scalar_select %p216, %s18, 1
      %p218 = scmp.lt.s32.totalorder %s19, 0
      %s219 = scalar_select %p218, %s19, 0
      %s220 = smul.addr %s217, 8
      %s221 = sadd.s32 %s219, %s220
      %s222 = smul.addr %s221, 8
      %s223 = scalar_lea.vmem %s0, %s222
      %p224 = scmp.lt.s32.totalorder %s18, 1
      %s225 = scalar_select %p224, %s18, 1
      %s226 = smul.addr %s225, 8
      %s227 = smul.addr %s226, 8
      %s228 = scalar_lea.vmem %s1, %s227
      %p229 = scmp.lt.s32.totalorder %s18, 1
      %s230 = scalar_select %p229, %s18, 1
      %s231 = smul.addr %s230, 8
      %s232 = smul.addr %s231, 8
      %s233 = scalar_lea.vmem %s2, %s232
      %p234 = scmp.lt.s32.totalorder %s18, 1
      %s235 = scalar_select %p234, %s18, 1
      %p236 = scmp.lt.s32.totalorder %s19, 0
      %s237 = scalar_select %p236, %s19, 0
      %s238 = smul.addr %s235, 8
      %s239 = sadd.s32 %s237, %s238
      %s240 = smul.addr %s239, 8
      %s241 = scalar_lea.vmem %s3, %s240
      %v242 = vld [vmem:[%s223] sm:$0xff]
      %v243 = vld [vmem:[%s223 + $0x8] sm:$0xff]
      %v244 = vld [vmem:[%s223 + $0x10] sm:$0xff]
      %v245 = vld [vmem:[%s223 + $0x18] sm:$0xff]
      %v246 = vld [vmem:[%s223 + $0x20] sm:$0xff]
      %v247 = vld [vmem:[%s223 + $0x28] sm:$0xff]
      %v248 = vld [vmem:[%s223 + $0x30] sm:$0xff]
      %v249 = vld [vmem:[%s223 + $0x38] sm:$0xff]
      %v250 = vld [vmem:[%s228] sm:$0xff]
      %v251 = vld [vmem:[%s228 + $0x8] sm:$0xff]
      %v252 = vld [vmem:[%s228 + $0x10] sm:$0xff]
      %v253 = vld [vmem:[%s228 + $0x18] sm:$0xff]
      %v254 = vld [vmem:[%s228 + $0x20] sm:$0xff]
      %v255 = vld [vmem:[%s228 + $0x28] sm:$0xff]
      %v256 = vld [vmem:[%s228 + $0x30] sm:$0xff]
      %v257 = vld [vmem:[%s228 + $0x38] sm:$0xff]
      %259 = vset.pattern.permute.xlu0 0
      %260 = vperm.xlu0 %259, %v250
      %v261 = vpop.permute.xlu0 %260
      %264 = vset.pattern.permute.xlu0 0
      %265 = vperm.xlu0 %264, %v251
      %v266 = vpop.permute.xlu0 %265
      %269 = vset.pattern.permute.xlu0 0
      %270 = vperm.xlu0 %269, %v252
      %v271 = vpop.permute.xlu0 %270
      %274 = vset.pattern.permute.xlu0 0
      %275 = vperm.xlu0 %274, %v253
      %v276 = vpop.permute.xlu0 %275
      %279 = vset.pattern.permute.xlu0 0
      %280 = vperm.xlu0 %279, %v254
      %v281 = vpop.permute.xlu0 %280
      %284 = vset.pattern.permute.xlu0 0
      %285 = vperm.xlu0 %284, %v255
      %v286 = vpop.permute.xlu0 %285
      %289 = vset.pattern.permute.xlu0 0
      %290 = vperm.xlu0 %289, %v256
      %v291 = vpop.permute.xlu0 %290
      %294 = vset.pattern.permute.xlu0 0
      %295 = vperm.xlu0 %294, %v257
      %v296 = vpop.permute.xlu0 %295
      %v298 = vmul.f32 %v242, %v261
      %v299 = vmul.f32 %v243, %v266
      %v300 = vmul.f32 %v244, %v271
      %v301 = vmul.f32 %v245, %v276
      %v302 = vmul.f32 %v246, %v281
      %v303 = vmul.f32 %v247, %v286
      %v304 = vmul.f32 %v248, %v291
      %v305 = vmul.f32 %v249, %v296
      %v306 = vld [vmem:[%s233] sm:$0xff]
      %v307 = vld [vmem:[%s233 + $0x8] sm:$0xff]
      %v308 = vld [vmem:[%s233 + $0x10] sm:$0xff]
      %v309 = vld [vmem:[%s233 + $0x18] sm:$0xff]
      %v310 = vld [vmem:[%s233 + $0x20] sm:$0xff]
      %v311 = vld [vmem:[%s233 + $0x28] sm:$0xff]
      %v312 = vld [vmem:[%s233 + $0x30] sm:$0xff]
      %v313 = vld [vmem:[%s233 + $0x38] sm:$0xff]
      %315 = vset.pattern.permute.xlu0 0
      %316 = vperm.xlu0 %315, %v306
      %v317 = vpop.permute.xlu0 %316
      %320 = vset.pattern.permute.xlu0 0
      %321 = vperm.xlu0 %320, %v307
      %v322 = vpop.permute.xlu0 %321
      %325 = vset.pattern.permute.xlu0 0
      %326 = vperm.xlu0 %325, %v308
      %v327 = vpop.permute.xlu0 %326
      %330 = vset.pattern.permute.xlu0 0
      %331 = vperm.xlu0 %330, %v309
      %v332 = vpop.permute.xlu0 %331
      %335 = vset.pattern.permute.xlu0 0
      %336 = vperm.xlu0 %335, %v310
      %v337 = vpop.permute.xlu0 %336
      %340 = vset.pattern.permute.xlu0 0
      %341 = vperm.xlu0 %340, %v311
      %v342 = vpop.permute.xlu0 %341
      %345 = vset.pattern.permute.xlu0 0
      %346 = vperm.xlu0 %345, %v312
      %v347 = vpop.permute.xlu0 %346
      %350 = vset.pattern.permute.xlu0 0
      %351 = vperm.xlu0 %350, %v313
      %v352 = vpop.permute.xlu0 %351
      %v354 = vadd.f32 %v298, %v317
      %v355 = vadd.f32 %v299, %v322
      %v356 = vadd.f32 %v300, %v327
      %v357 = vadd.f32 %v301, %v332
      %v358 = vadd.f32 %v302, %v337
      %v359 = vadd.f32 %v303, %v342
      %v360 = vadd.f32 %v304, %v347
      %v361 = vadd.f32 %v305, %v352
      %362 = vst [vmem:[%s241] sm:$0xff] %v354
      %363 = vst [vmem:[%s241 + $0x8] sm:$0xff] %v355
      %364 = vst [vmem:[%s241 + $0x10] sm:$0xff] %v356
      %365 = vst [vmem:[%s241 + $0x18] sm:$0xff] %v357
      %366 = vst [vmem:[%s241 + $0x20] sm:$0xff] %v358
      %367 = vst [vmem:[%s241 + $0x28] sm:$0xff] %v359
      %368 = vst [vmem:[%s241 + $0x30] sm:$0xff] %v360
      %369 = vst [vmem:[%s241 + $0x38] sm:$0xff] %v361
      %p370 = scmp.lt.s32.totalorder %s18, 1
      %s371 = scalar_select %p370, %s18, 1
      %p372 = scmp.lt.s32.totalorder %s19, 0
      %s373 = scalar_select %p372, %s19, 0
      %s374 = smul.addr %s371, 8
      %s375 = sadd.s32 %s373, %s374
      %s376 = smul.addr %s375, 8
      %s377 = scalar_lea.vmem %s3, %s376
      // Predicated region
      $region33: #{discriminator_forward.22} parent=31 // pred_check
        %p378 = pneg %p126
      $region34: #{discriminator_forward.22} parent=31 // pred_check_branch
        %380 = sbr.rel (%p378) target = $region36
      $region35: #{discriminator_forward.22} parent=31 // pred_region
        _
      $region36: #{discriminator_forward.22} parent=31 // pred_fallthru
        _
    $region32: #{discriminator_forward.22} parent=5 // pred_fallthru
      _
    %p381 = scmp.le.s32.totalorder 2, %s9
    // Predicated region
    $region37: #{discriminator_forward.22} parent=5 // pred_check
      %p382 = pneg %p381
    $region38: #{discriminator_forward.22} parent=5 // pred_check_branch
      %384 = sbr.rel (%p382) target = $region40
    $region39: #{discriminator_forward.22} parent=5 // pred_region
      %s385 = ssub.s32 %s9, 2
      // Predicated region
      $region41: #{discriminator_forward.22} parent=39 // pred_check
        %p386 = pneg %p132
      $region42: #{discriminator_forward.22} parent=39 // pred_check_branch
        %388 = sbr.rel (%p386) target = $region44
      $region43: #{discriminator_forward.22} parent=39 // pred_region
        %p389 = scmp.lt.s32.totalorder %s20, 1
        %s390 = scalar_select %p389, %s20, 1
        %p391 = scmp.lt.s32.totalorder %s21, 0
        %s392 = scalar_select %p391, %s21, 0
        %s393 = smul.addr %s390, 8
        %s394 = sadd.s32 %s392, %s393
        %s395 = smul.addr %s394, 8
        %s396 = scalar_lea.vmem %s3, %s395
      $region44: #{discriminator_forward.22} parent=39 // pred_fallthru
        _
    $region40: #{discriminator_forward.22} parent=5 // pred_fallthru
      _
  $region6: #{discriminator_forward.22} parent=0 // loop_footer
    %s13 = sadd.s32 1, %s9
  $region7: #{discriminator_forward.22} parent=0 // loop_footer_branch
    %8 = sbr.rel target = $region3
  $region8: #{discriminator_forward.22} parent=0 // loop_exit
    _

// kernel: discriminator_forward.23
$region0: #{discriminator_forward.23}
  #allocation0 [shape = 'u32[]', space=smem, size = 0x4, offset = 0x4, fixed_abs, tag = 'smem constant byte address 0x4 - core index']
  #allocation1 [shape = 'u32[144,128]{1,0:T(1,128)}', space=vmem, size = 0x12000, scoped, tag = 'internal scratch']
  #allocation2 [shape = 'f32[1,1]{1,0:T(1,128)S(1)}', space=vmem, size = 0x200, scoped, tag = 'scoped memory for discriminator_forward.23']
  %s0 = inlined_call_operand.vmem [shape: bf16[2,1024,128], index: 0, kind: input, shape index: {}]
  %s1 = inlined_call_operand.vmem [shape: bf16[1,1024], index: 1, kind: input, shape index: {}]
  %s2 = inlined_call_operand.<no memory space> [shape: f32[1,1], index: 2, kind: input, shape index: {}]
  %s3 = inlined_call_operand.vmem [shape: f32[2,1,128], index: 3, kind: output, shape index: {}]
  %s4 = sld [smem:[#allocation0]]
  $region45: #{discriminator_forward.23} parent=0
    _
  %s6 = ssub.s32 1, %s4
  %s7 = scalar_select 0, %s6, %s4
  %v8 = vstv %s2
  %9 = vst [vmem:[#allocation2] sm:$0x1] %v8
  loop: start=0, step=1, limit=4
  $region2: #{discriminator_forward.23} parent=0 // loop_pre_header
    _
  $region3: #{discriminator_forward.23} parent=0 // loop_header
    %s11 = sphi 0, %s15
    %p12 = scmp.ge.s32.totalorder %s11, 4
    %s18 = sphi 0, %s30
    %s19 = sphi 0, %s26
    %s20 = sphi 0, %s18
    %s21 = sphi 0, %s19
    %s22 = sphi 0, %s20
    %s23 = sphi 0, %s21
    %s35 = sphi 0, %s37
    %s38 = sphi 0, %s35
    %s39 = sphi 0, %s38
    %s55 = sphi 0, %s39
    %s59 = sphi 0, %s59
    %s61 = sphi 0, %s59
    %s62 = sphi 0, %s61
    %s76 = sphi 0, %s62
    %s80 = sphi 0, %s80
    %s82 = sphi 0, %s80
    %s83 = sphi 0, %s82
    %s97 = sphi 0, %s83
    %s105 = sphi 0, %s107
    %s108 = sphi 0, %s105
    %s109 = sphi 0, %s108
    %s125 = sphi 0, %s109
  $region4: #{discriminator_forward.23} parent=0 // loop_header_branch
    %14 = sbr.rel (%p12) target = $region8
  $region5: #{discriminator_forward.23} parent=0 // loop_body
    %s16 = ssub.s32 %s11, 1
    %s17 = ssub.s32 %s11, 2
    %s24 = sadd.s32 1, %s19
    %p25 = scmp.ge.s32.totalorder %s24, 1
    %s26 = scalar_select %p25, 0, %s24
    %s27 = sadd.s32 1, %s18
    %s28 = scalar_select %p25, %s27, %s18
    %p29 = scmp.ge.s32.totalorder %s28, 2
    %s30 = scalar_select %p29, 0, %s28
    %s31 = ssub.s32 %s18, %s30
    %s32 = ssub.s32 %s19, %s26
    %s33 = sor.u32 %s31, %s32
    %p34 = scmp.eq.s32.totalorder %s33, 0
    %s36 = sadd.s32 %s35, 1
    %s37 = scalar_select %p34, %s35, %s36
    %p40 = pneg %p34
    %p41 = scmp.eq.s32.totalorder %s11, 1
    %p42 = por %p40, %p41
    %p43 = scmp.ne.s32.totalorder %s35, %s38
    %p44 = scmp.eq.s32.totalorder %s11, 0
    %p45 = por %p43, %p44
    %p46 = scmp.ne.s32.totalorder %s35, %s38
    %p47 = scmp.eq.s32.totalorder %s16, 1
    %p48 = por %p46, %p47
    %p49 = scmp.ne.s32.totalorder %s38, %s39
    %p50 = scmp.eq.s32.totalorder %s16, 0
    %p51 = por %p49, %p50
    %p52 = scmp.ne.s32.totalorder %s38, %s39
    %p53 = scmp.eq.s32.totalorder %s17, 1
    %p54 = por %p52, %p53
    %p56 = scmp.ne.s32.totalorder %s39, %s55
    %p57 = scmp.eq.s32.totalorder %s17, 0
    %p58 = por %p56, %p57
    %s60 = sadd.s32 %s59, 1
    %p63 = scmp.eq.s32.totalorder %s11, 1
    %p64 = scmp.ne.s32.totalorder %s59, %s61
    %p65 = scmp.eq.s32.totalorder %s11, 0
    %p66 = por %p64, %p65
    %p67 = scmp.ne.s32.totalorder %s59, %s61
    %p68 = scmp.eq.s32.totalorder %s16, 1
    %p69 = por %p67, %p68
    %p70 = scmp.ne.s32.totalorder %s61, %s62
    %p71 = scmp.eq.s32.totalorder %s16, 0
    %p72 = por %p70, %p71
    %p73 = scmp.ne.s32.totalorder %s61, %s62
    %p74 = scmp.eq.s32.totalorder %s17, 1
    %p75 = por %p73, %p74
    %p77 = scmp.ne.s32.totalorder %s62, %s76
    %p78 = scmp.eq.s32.totalorder %s17, 0
    %p79 = por %p77, %p78
    %s81 = sadd.s32 %s80, 1
    %p84 = scmp.eq.s32.totalorder %s11, 1
    %p85 = scmp.ne.s32.totalorder %s80, %s82
    %p86 = scmp.eq.s32.totalorder %s11, 0
    %p87 = por %p85, %p86
    %p88 = scmp.ne.s32.totalorder %s80, %s82
    %p89 = scmp.eq.s32.totalorder %s16, 1
    %p90 = por %p88, %p89
    %p91 = scmp.ne.s32.totalorder %s82, %s83
    %p92 = scmp.eq.s32.totalorder %s16, 0
    %p93 = por %p91, %p92
    %p94 = scmp.ne.s32.totalorder %s82, %s83
    %p95 = scmp.eq.s32.totalorder %s17, 1
    %p96 = por %p94, %p95
    %p98 = scmp.ne.s32.totalorder %s83, %s97
    %p99 = scmp.eq.s32.totalorder %s17, 0
    %p100 = por %p98, %p99
    %s101 = ssub.s32 %s18, %s30
    %s102 = ssub.s32 %s19, %s26
    %s103 = sor.u32 %s101, %s102
    %p104 = scmp.eq.s32.totalorder %s103, 0
    %s106 = sadd.s32 %s105, 1
    %s107 = scalar_select %p104, %s105, %s106
    %p110 = pneg %p104
    %p111 = scmp.eq.s32.totalorder %s11, 1
    %p112 = por %p110, %p111
    %p113 = scmp.ne.s32.totalorder %s105, %s108
    %p114 = scmp.eq.s32.totalorder %s11, 0
    %p115 = por %p113, %p114
    %p116 = scmp.ne.s32.totalorder %s105, %s108
    %p117 = scmp.eq.s32.totalorder %s16, 1
    %p118 = por %p116, %p117
    %p119 = scmp.ne.s32.totalorder %s108, %s109
    %p120 = scmp.eq.s32.totalorder %s16, 0
    %p121 = por %p119, %p120
    %p122 = scmp.ne.s32.totalorder %s108, %s109
    %p123 = scmp.eq.s32.totalorder %s17, 1
    %p124 = por %p122, %p123
    %p126 = scmp.ne.s32.totalorder %s109, %s125
    %p127 = scmp.eq.s32.totalorder %s17, 0
    %p128 = por %p126, %p127
    %p129 = scmp.le.s32.totalorder 1, %s11
    %p130 = scmp.lt.s32.totalorder %s11, 3
    %p131 = pnand %p129, %p130
    %p132 = pneg %p131
    // Predicated region
    $region9: #{discriminator_forward.23} parent=5 // pred_check
      _
    $region10: #{discriminator_forward.23} parent=5 // pred_check_branch
      %134 = sbr.rel (%p131) target = $region12
    $region11: #{discriminator_forward.23} parent=5 // pred_region
      %s135 = ssub.s32 %s11, 1
      // Predicated region
      $region13: #{discriminator_forward.23} parent=11 // pred_check
        %p136 = pneg %p72
      $region14: #{discriminator_forward.23} parent=11 // pred_check_branch
        %138 = sbr.rel (%p136) target = $region16
      $region15: #{discriminator_forward.23} parent=11 // pred_region
        _
      $region16: #{discriminator_forward.23} parent=11 // pred_fallthru
        _
      // Predicated region
      $region17: #{discriminator_forward.23} parent=11 // pred_check
        %p139 = pneg %p93
      $region18: #{discriminator_forward.23} parent=11 // pred_check_branch
        %141 = sbr.rel (%p139) target = $region20
      $region19: #{discriminator_forward.23} parent=11 // pred_region
        _
      $region20: #{discriminator_forward.23} parent=11 // pred_fallthru
        _
    $region12: #{discriminator_forward.23} parent=5 // pred_fallthru
      _
    %p142 = scmp.lt.s32.totalorder %s11, 2
    // Predicated region
    $region21: #{discriminator_forward.23} parent=5 // pred_check
      %p143 = pneg %p142
    $region22: #{discriminator_forward.23} parent=5 // pred_check_branch
      %145 = sbr.rel (%p143) target = $region24
    $region23: #{discriminator_forward.23} parent=5 // pred_region
      // Predicated region
      $region25: #{discriminator_forward.23} parent=23 // pred_check
        %p146 = pneg %p45
      $region26: #{discriminator_forward.23} parent=23 // pred_check_branch
        %148 = sbr.rel (%p146) target = $region28
      $region27: #{discriminator_forward.23} parent=23 // pred_region
        %p149 = scmp.lt.s32.totalorder %s18, 1
        %s150 = scalar_select %p149, %s18, 1
        %p151 = scmp.lt.s32.totalorder %s19, 0
        %s152 = scalar_select %p151, %s19, 0
        %s153 = smul.addr %s150, 128
        %s154 = sadd.s32 %s152, %s153
        %s155 = smul.addr %s154, 4
        %s156 = scalar_lea.vmem %s0, %s155
      $region28: #{discriminator_forward.23} parent=23 // pred_fallthru
        _
    $region24: #{discriminator_forward.23} parent=5 // pred_fallthru
      _
    %p157 = scmp.le.s32.totalorder 1, %s11
    %p158 = scmp.lt.s32.totalorder %s11, 3
    %p159 = pnand %p157, %p158
    %p160 = pneg %p159
    // Predicated region
    $region29: #{discriminator_forward.23} parent=5 // pred_check
      _
    $region30: #{discriminator_forward.23} parent=5 // pred_check_branch
      %162 = sbr.rel (%p159) target = $region32
    $region31: #{discriminator_forward.23} parent=5 // pred_region
      %s163 = ssub.s32 %s11, 1
      %p164 = scmp.lt.s32.totalorder %s20, 1
      %s165 = scalar_select %p164, %s20, 1
      %p166 = scmp.lt.s32.totalorder %s21, 0
      %s167 = scalar_select %p166, %s21, 0
      %s168 = smul.addr %s165, 128
      %s169 = sadd.s32 %s167, %s168
      %s170 = smul.addr %s169, 4
      %s171 = scalar_lea.vmem %s0, %s170
      %p172 = pneg %p51
      %p173 = pneg %p48
      %p174 = pneg %p72
      %p175 = pneg %p69
      %p176 = pneg %p93
      %p177 = pneg %p90
      %p178 = pneg %p121
      %p179 = pneg %p118
      %p180 = scmp.lt.s32.totalorder %s20, 1
      %s181 = scalar_select %p180, %s20, 1
      %p182 = scmp.lt.s32.totalorder %s21, 0
      %s183 = scalar_select %p182, %s21, 0
      %s184 = sadd.s32 %s183, %s181
      %s185 = scalar_lea.vmem %s3, %s184
      %p186 = scmp.lt.s32.totalorder %s20, 1
      %s187 = scalar_select %p186, %s20, 1
      %p188 = scmp.lt.s32.totalorder %s21, 0
      %s189 = scalar_select %p188, %s21, 0
      %s190 = smul.addr %s187, 128
      %s191 = sadd.s32 %s189, %s190
      %s192 = smul.addr %s191, 4
      %s193 = scalar_lea.vmem %s0, %s192
      %p194 = scmp.lt.s32.totalorder %s20, 1
      %s195 = scalar_select %p194, %s20, 1
      %p196 = scmp.lt.s32.totalorder %s21, 0
      %s197 = scalar_select %p196, %s21, 0
      %s198 = sadd.s32 %s197, %s195
      %s199 = scalar_lea.vmem %s3, %s198
      %v201 = vld [vmem:[%s1] sm:$0xff]
      %v202 = vld [vmem:[%s193] sm:$0xf]
      %v203 = vld [vmem:[%s193 + $0x4] sm:$0xf]
      %v204 = vld [vmem:[%s193 + $0x8] sm:$0xf]
      %v205 = vld [vmem:[%s193 + $0xc] sm:$0xf]
      %v206 = vld [vmem:[%s193 + $0x10] sm:$0xf]
      %v207 = vld [vmem:[%s193 + $0x14] sm:$0xf]
      %v208 = vld [vmem:[%s193 + $0x18] sm:$0xf]
      %v209 = vld [vmem:[%s193 + $0x1c] sm:$0xf]
      %v210 = vld [vmem:[%s193 + $0x20] sm:$0xf]
      %v211 = vld [vmem:[%s193 + $0x24] sm:$0xf]
      %v212 = vld [vmem:[%s193 + $0x28] sm:$0xf]
      %v213 = vld [vmem:[%s193 + $0x2c] sm:$0xf]
      %v214 = vld [vmem:[%s193 + $0x30] sm:$0xf]
      %v215 = vld [vmem:[%s193 + $0x34] sm:$0xf]
      %v216 = vld [vmem:[%s193 + $0x38] sm:$0xf]
      %v217 = vld [vmem:[%s193 + $0x3c] sm:$0xf]
      %v218 = vld [vmem:[%s193 + $0x40] sm:$0xf]
      %v219 = vld [vmem:[%s193 + $0x44] sm:$0xf]
      %v220 = vld [vmem:[%s193 + $0x48] sm:$0xf]
      %v221 = vld [vmem:[%s193 + $0x4c] sm:$0xf]
      %v222 = vld [vmem:[%s193 + $0x50] sm:$0xf]
      %v223 = vld [vmem:[%s193 + $0x54] sm:$0xf]
      %v224 = vld [vmem:[%s193 + $0x58] sm:$0xf]
      %v225 = vld [vmem:[%s193 + $0x5c] sm:$0xf]
      %v226 = vld [vmem:[%s193 + $0x60] sm:$0xf]
      %v227 = vld [vmem:[%s193 + $0x64] sm:$0xf]
      %v228 = vld [vmem:[%s193 + $0x68] sm:$0xf]
      %v229 = vld [vmem:[%s193 + $0x6c] sm:$0xf]
      %v230 = vld [vmem:[%s193 + $0x70] sm:$0xf]
      %v231 = vld [vmem:[%s193 + $0x74] sm:$0xf]
      %v232 = vld [vmem:[%s193 + $0x78] sm:$0xf]
      %v233 = vld [vmem:[%s193 + $0x7c] sm:$0xf]
      %v234 = vld [vmem:[%s193 + $0x80] sm:$0xf]
      %v235 = vld [vmem:[%s193 + $0x84] sm:$0xf]
      %v236 = vld [vmem:[%s193 + $0x88] sm:$0xf]
      %v237 = vld [vmem:[%s193 + $0x8c] sm:$0xf]
      %v238 = vld [vmem:[%s193 + $0x90] sm:$0xf]
      %v239 = vld [vmem:[%s193 + $0x94] sm:$0xf]
      %v240 = vld [vmem:[%s193 + $0x98] sm:$0xf]
      %v241 = vld [vmem:[%s193 + $0x9c] sm:$0xf]
      %v242 = vld [vmem:[%s193 + $0xa0] sm:$0xf]
      %v243 = vld [vmem:[%s193 + $0xa4] sm:$0xf]
      %v244 = vld [vmem:[%s193 + $0xa8] sm:$0xf]
      %v245 = vld [vmem:[%s193 + $0xac] sm:$0xf]
      %v246 = vld [vmem:[%s193 + $0xb0] sm:$0xf]
      %v247 = vld [vmem:[%s193 + $0xb4] sm:$0xf]
      %v248 = vld [vmem:[%s193 + $0xb8] sm:$0xf]
      %v249 = vld [vmem:[%s193 + $0xbc] sm:$0xf]
      %v250 = vld [vmem:[%s193 + $0xc0] sm:$0xf]
      %v251 = vld [vmem:[%s193 + $0xc4] sm:$0xf]
      %v252 = vld [vmem:[%s193 + $0xc8] sm:$0xf]
      %v253 = vld [vmem:[%s193 + $0xcc] sm:$0xf]
      %v254 = vld [vmem:[%s193 + $0xd0] sm:$0xf]
      %v255 = vld [vmem:[%s193 + $0xd4] sm:$0xf]
      %v256 = vld [vmem:[%s193 + $0xd8] sm:$0xf]
      %v257 = vld [vmem:[%s193 + $0xdc] sm:$0xf]
      %v258 = vld [vmem:[%s193 + $0xe0] sm:$0xf]
      %v259 = vld [vmem:[%s193 + $0xe4] sm:$0xf]
      %v260 = vld [vmem:[%s193 + $0xe8] sm:$0xf]
      %v261 = vld [vmem:[%s193 + $0xec] sm:$0xf]
      %v262 = vld [vmem:[%s193 + $0xf0] sm:$0xf]
      %v263 = vld [vmem:[%s193 + $0xf4] sm:$0xf]
      %v264 = vld [vmem:[%s193 + $0xf8] sm:$0xf]
      %v265 = vld [vmem:[%s193 + $0xfc] sm:$0xf]
      %v266 = vld [vmem:[%s193 + $0x100] sm:$0xf]
      %v267 = vld [vmem:[%s193 + $0x104] sm:$0xf]
      %v268 = vld [vmem:[%s193 + $0x108] sm:$0xf]
      %v269 = vld [vmem:[%s193 + $0x10c] sm:$0xf]
      %v270 = vld [vmem:[%s193 + $0x110] sm:$0xf]
      %v271 = vld [vmem:[%s193 + $0x114] sm:$0xf]
      %v272 = vld [vmem:[%s193 + $0x118] sm:$0xf]
      %v273 = vld [vmem:[%s193 + $0x11c] sm:$0xf]
      %v274 = vld [vmem:[%s193 + $0x120] sm:$0xf]
      %v275 = vld [vmem:[%s193 + $0x124] sm:$0xf]
      %v276 = vld [vmem:[%s193 + $0x128] sm:$0xf]
      %v277 = vld [vmem:[%s193 + $0x12c] sm:$0xf]
      %v278 = vld [vmem:[%s193 + $0x130] sm:$0xf]
      %v279 = vld [vmem:[%s193 + $0x134] sm:$0xf]
      %v280 = vld [vmem:[%s193 + $0x138] sm:$0xf]
      %v281 = vld [vmem:[%s193 + $0x13c] sm:$0xf]
      %v282 = vld [vmem:[%s193 + $0x140] sm:$0xf]
      %v283 = vld [vmem:[%s193 + $0x144] sm:$0xf]
      %v284 = vld [vmem:[%s193 + $0x148] sm:$0xf]
      %v285 = vld [vmem:[%s193 + $0x14c] sm:$0xf]
      %v286 = vld [vmem:[%s193 + $0x150] sm:$0xf]
      %v287 = vld [vmem:[%s193 + $0x154] sm:$0xf]
      %v288 = vld [vmem:[%s193 + $0x158] sm:$0xf]
      %v289 = vld [vmem:[%s193 + $0x15c] sm:$0xf]
      %v290 = vld [vmem:[%s193 + $0x160] sm:$0xf]
      %v291 = vld [vmem:[%s193 + $0x164] sm:$0xf]
      %v292 = vld [vmem:[%s193 + $0x168] sm:$0xf]
      %v293 = vld [vmem:[%s193 + $0x16c] sm:$0xf]
      %v294 = vld [vmem:[%s193 + $0x170] sm:$0xf]
      %v295 = vld [vmem:[%s193 + $0x174] sm:$0xf]
      %v296 = vld [vmem:[%s193 + $0x178] sm:$0xf]
      %v297 = vld [vmem:[%s193 + $0x17c] sm:$0xf]
      %v298 = vld [vmem:[%s193 + $0x180] sm:$0xf]
      %v299 = vld [vmem:[%s193 + $0x184] sm:$0xf]
      %v300 = vld [vmem:[%s193 + $0x188] sm:$0xf]
      %v301 = vld [vmem:[%s193 + $0x18c] sm:$0xf]
      %v302 = vld [vmem:[%s193 + $0x190] sm:$0xf]
      %v303 = vld [vmem:[%s193 + $0x194] sm:$0xf]
      %v304 = vld [vmem:[%s193 + $0x198] sm:$0xf]
      %v305 = vld [vmem:[%s193 + $0x19c] sm:$0xf]
      %v306 = vld [vmem:[%s193 + $0x1a0] sm:$0xf]
      %v307 = vld [vmem:[%s193 + $0x1a4] sm:$0xf]
      %v308 = vld [vmem:[%s193 + $0x1a8] sm:$0xf]
      %v309 = vld [vmem:[%s193 + $0x1ac] sm:$0xf]
      %v310 = vld [vmem:[%s193 + $0x1b0] sm:$0xf]
      %v311 = vld [vmem:[%s193 + $0x1b4] sm:$0xf]
      %v312 = vld [vmem:[%s193 + $0x1b8] sm:$0xf]
      %v313 = vld [vmem:[%s193 + $0x1bc] sm:$0xf]
      %v314 = vld [vmem:[%s193 + $0x1c0] sm:$0xf]
      %v315 = vld [vmem:[%s193 + $0x1c4] sm:$0xf]
      %v316 = vld [vmem:[%s193 + $0x1c8] sm:$0xf]
      %v317 = vld [vmem:[%s193 + $0x1cc] sm:$0xf]
      %v318 = vld [vmem:[%s193 + $0x1d0] sm:$0xf]
      %v319 = vld [vmem:[%s193 + $0x1d4] sm:$0xf]
      %v320 = vld [vmem:[%s193 + $0x1d8] sm:$0xf]
      %v321 = vld [vmem:[%s193 + $0x1dc] sm:$0xf]
      %v322 = vld [vmem:[%s193 + $0x1e0] sm:$0xf]
      %v323 = vld [vmem:[%s193 + $0x1e4] sm:$0xf]
      %v324 = vld [vmem:[%s193 + $0x1e8] sm:$0xf]
      %v325 = vld [vmem:[%s193 + $0x1ec] sm:$0xf]
      %v326 = vld [vmem:[%s193 + $0x1f0] sm:$0xf]
      %v327 = vld [vmem:[%s193 + $0x1f4] sm:$0xf]
      %v328 = vld [vmem:[%s193 + $0x1f8] sm:$0xf]
      %v329 = vld [vmem:[%s193 + $0x1fc] sm:$0xf]
      %v330 = vld [vmem:[#allocation2] sm:$0x1]
      %332 = vset.pattern.permute.xlu0 0
      %333 = vperm.xlu0 %332, %v330
      %v334 = vpop.permute.xlu0 %333
      %v336 = vlaneseq
      %v337 = vshrl.u32 %v336, 7
      %v338 = vsub.s32 0, %v337
      %v339 = vrot.slane %v334, %v338
      %v341 = vcombine.high %v201, %v201
      %v343 = vunpack.c.l.s4 1966171168
      %v344 = vunpack.c.0.s8 %v343
      %v345 = vlaneseq
      %v346 = vshrl.u32 %v345, 7
      %v347 = vsub.s32 %v344, %v346
      %v348 = vrot.slane %v201, %v347
      %v350 = vunpack.c.l.s4 1966171168
      %v351 = vunpack.c.0.s8 %v350
      %v352 = vlaneseq
      %v353 = vshrl.u32 %v352, 7
      %v354 = vsub.s32 %v351, %v353
      %v355 = vrot.slane %v341, %v354
      %v356 = vcombine.high %v348, %v348
      %v357 = vcombine.high %v355, %v355
      %v359 = vunpack.c.l.s4 1966171168
      %v360 = vunpack.c.0.s8 %v359
      %v361 = vlaneseq
      %v362 = vshrl.u32 %v361, 7
      %v363 = vsub.s32 %v360, %v362
      %v364 = vrot.slane %v348, %v363
      %v366 = vunpack.c.l.s4 1966171168
      %v367 = vunpack.c.0.s8 %v366
      %v368 = vlaneseq
      %v369 = vshrl.u32 %v368, 7
      %v370 = vsub.s32 %v367, %v369
      %v371 = vrot.slane %v355, %v370
      %v373 = vunpack.c.l.s4 1966171168
      %v374 = vunpack.c.0.s8 %v373
      %v375 = vlaneseq
      %v376 = vshrl.u32 %v375, 7
      %v377 = vsub.s32 %v374, %v376
      %v378 = vrot.slane %v356, %v377
      %v380 = vunpack.c.l.s4 1966171168
      %v381 = vunpack.c.0.s8 %v380
      %v382 = vlaneseq
      %v383 = vshrl.u32 %v382, 7
      %v384 = vsub.s32 %v381, %v383
      %v385 = vrot.slane %v357, %v384
      %v386 = vcombine.high %v364, %v364
      %v387 = vcombine.high %v371, %v371
      %v388 = vcombine.high %v378, %v378
      %v389 = vcombine.high %v385, %v385
      %v526 = vunpack.c.l.b16 %v202
      %v527 = vunpack.c.l.b16 %v203
      %v528 = vunpack.c.l.b16 %v204
      %v529 = vunpack.c.l.b16 %v205
      %v530 = vunpack.c.l.b16 %v206
      %v531 = vunpack.c.l.b16 %v207
      %v532 = vunpack.c.l.b16 %v208
      %v533 = vunpack.c.l.b16 %v209
      %v534 = vunpack.c.l.b16 %v210
      %v535 = vunpack.c.l.b16 %v211
      %v536 = vunpack.c.l.b16 %v212
      %v537 = vunpack.c.l.b16 %v213
      %v538 = vunpack.c.l.b16 %v214
      %v539 = vunpack.c.l.b16 %v215
      %v540 = vunpack.c.l.b16 %v216
      %v541 = vunpack.c.l.b16 %v217
      %v542 = vunpack.c.l.b16 %v218
      %v543 = vunpack.c.l.b16 %v219
      %v544 = vunpack.c.l.b16 %v220
      %v545 = vunpack.c.l.b16 %v221
      %v546 = vunpack.c.l.b16 %v222
      %v547 = vunpack.c.l.b16 %v223
      %v548 = vunpack.c.l.b16 %v224
      %v549 = vunpack.c.l.b16 %v225
      %v550 = vunpack.c.l.b16 %v226
      %v551 = vunpack.c.l.b16 %v227
      %v552 = vunpack.c.l.b16 %v228
      %v553 = vunpack.c.l.b16 %v229
      %v554 = vunpack.c.l.b16 %v230
      %v555 = vunpack.c.l.b16 %v231
      %v556 = vunpack.c.l.b16 %v232
      %v557 = vunpack.c.l.b16 %v233
      %v558 = vunpack.c.l.b16 %v234
      %v559 = vunpack.c.l.b16 %v235
      %v560 = vunpack.c.l.b16 %v236
      %v561 = vunpack.c.l.b16 %v237
      %v562 = vunpack.c.l.b16 %v238
      %v563 = vunpack.c.l.b16 %v239
      %v564 = vunpack.c.l.b16 %v240
      %v565 = vunpack.c.l.b16 %v241
      %v566 = vunpack.c.l.b16 %v242
      %v567 = vunpack.c.l.b16 %v243
      %v568 = vunpack.c.l.b16 %v244
      %v569 = vunpack.c.l.b16 %v245
      %v570 = vunpack.c.l.b16 %v246
      %v571 = vunpack.c.l.b16 %v247
      %v572 = vunpack.c.l.b16 %v248
      %v573 = vunpack.c.l.b16 %v249
      %v574 = vunpack.c.l.b16 %v250
      %v575 = vunpack.c.l.b16 %v251
      %v576 = vunpack.c.l.b16 %v252
      %v577 = vunpack.c.l.b16 %v253
      %v578 = vunpack.c.l.b16 %v254
      %v579 = vunpack.c.l.b16 %v255
      %v580 = vunpack.c.l.b16 %v256
      %v581 = vunpack.c.l.b16 %v257
      %v582 = vunpack.c.l.b16 %v258
      %v583 = vunpack.c.l.b16 %v259
      %v584 = vunpack.c.l.b16 %v260
      %v585 = vunpack.c.l.b16 %v261
      %v586 = vunpack.c.l.b16 %v262
      %v587 = vunpack.c.l.b16 %v263
      %v588 = vunpack.c.l.b16 %v264
      %v589 = vunpack.c.l.b16 %v265
      %v590 = vunpack.c.l.b16 %v266
      %v591 = vunpack.c.l.b16 %v267
      %v592 = vunpack.c.l.b16 %v268
      %v593 = vunpack.c.l.b16 %v269
      %v594 = vunpack.c.l.b16 %v270
      %v595 = vunpack.c.l.b16 %v271
      %v596 = vunpack.c.l.b16 %v272
      %v597 = vunpack.c.l.b16 %v273
      %v598 = vunpack.c.l.b16 %v274
      %v599 = vunpack.c.l.b16 %v275
      %v600 = vunpack.c.l.b16 %v276
      %v601 = vunpack.c.l.b16 %v277
      %v602 = vunpack.c.l.b16 %v278
      %v603 = vunpack.c.l.b16 %v279
      %v604 = vunpack.c.l.b16 %v280
      %v605 = vunpack.c.l.b16 %v281
      %v606 = vunpack.c.l.b16 %v282
      %v607 = vunpack.c.l.b16 %v283
      %v608 = vunpack.c.l.b16 %v284
      %v609 = vunpack.c.l.b16 %v285
      %v610 = vunpack.c.l.b16 %v286
      %v611 = vunpack.c.l.b16 %v287
      %v612 = vunpack.c.l.b16 %v288
      %v613 = vunpack.c.l.b16 %v289
      %v614 = vunpack.c.l.b16 %v290
      %v615 = vunpack.c.l.b16 %v291
      %v616 = vunpack.c.l.b16 %v292
      %v617 = vunpack.c.l.b16 %v293
      %v618 = vunpack.c.l.b16 %v294
      %v619 = vunpack.c.l.b16 %v295
      %v620 = vunpack.c.l.b16 %v296
      %v621 = vunpack.c.l.b16 %v297
      %v622 = vunpack.c.l.b16 %v298
      %v623 = vunpack.c.l.b16 %v299
      %v624 = vunpack.c.l.b16 %v300
      %v625 = vunpack.c.l.b16 %v301
      %v626 = vunpack.c.l.b16 %v302
      %v627 = vunpack.c.l.b16 %v303
      %v628 = vunpack.c.l.b16 %v304
      %v629 = vunpack.c.l.b16 %v305
      %v630 = vunpack.c.l.b16 %v306
      %v631 = vunpack.c.l.b16 %v307
      %v632 = vunpack.c.l.b16 %v308
      %v633 = vunpack.c.l.b16 %v309
      %v634 = vunpack.c.l.b16 %v310
      %v635 = vunpack.c.l.b16 %v311
      %v636 = vunpack.c.l.b16 %v312
      %v637 = vunpack.c.l.b16 %v313
      %v638 = vunpack.c.l.b16 %v314
      %v639 = vunpack.c.l.b16 %v315
      %v640 = vunpack.c.l.b16 %v316
      %v641 = vunpack.c.l.b16 %v317
      %v642 = vunpack.c.l.b16 %v318
      %v643 = vunpack.c.l.b16 %v319
      %v644 = vunpack.c.l.b16 %v320
      %v645 = vunpack.c.l.b16 %v321
      %v646 = vunpack.c.l.b16 %v322
      %v647 = vunpack.c.l.b16 %v323
      %v648 = vunpack.c.l.b16 %v324
      %v649 = vunpack.c.l.b16 %v325
      %v650 = vunpack.c.l.b16 %v326
      %v651 = vunpack.c.l.b16 %v327
      %v652 = vunpack.c.l.b16 %v328
      %v653 = vunpack.c.l.b16 %v329
      %v654 = vpack.c.b16 %v527, %v526
      %v655 = vpack.c.b16 %v529, %v528
      %v656 = vpack.c.b16 %v531, %v530
      %v657 = vpack.c.b16 %v533, %v532
      %v658 = vpack.c.b16 %v535, %v534
      %v659 = vpack.c.b16 %v537, %v536
      %v660 = vpack.c.b16 %v539, %v538
      %v661 = vpack.c.b16 %v541, %v540
      %v662 = vpack.c.b16 %v543, %v542
      %v663 = vpack.c.b16 %v545, %v544
      %v664 = vpack.c.b16 %v547, %v546
      %v665 = vpack.c.b16 %v549, %v548
      %v666 = vpack.c.b16 %v551, %v550
      %v667 = vpack.c.b16 %v553, %v552
      %v668 = vpack.c.b16 %v555, %v554
      %v669 = vpack.c.b16 %v557, %v556
      %v670 = vpack.c.b16 %v559, %v558
      %v671 = vpack.c.b16 %v561, %v560
      %v672 = vpack.c.b16 %v563, %v562
      %v673 = vpack.c.b16 %v565, %v564
      %v674 = vpack.c.b16 %v567, %v566
      %v675 = vpack.c.b16 %v569, %v568
      %v676 = vpack.c.b16 %v571, %v570
      %v677 = vpack.c.b16 %v573, %v572
      %v678 = vpack.c.b16 %v575, %v574
      %v679 = vpack.c.b16 %v577, %v576
      %v680 = vpack.c.b16 %v579, %v578
      %v681 = vpack.c.b16 %v581, %v580
      %v682 = vpack.c.b16 %v583, %v582
      %v683 = vpack.c.b16 %v585, %v584
      %v684 = vpack.c.b16 %v587, %v586
      %v685 = vpack.c.b16 %v589, %v588
      %v686 = vpack.c.b16 %v591, %v590
      %v687 = vpack.c.b16 %v593, %v592
      %v688 = vpack.c.b16 %v595, %v594
      %v689 = vpack.c.b16 %v597, %v596
      %v690 = vpack.c.b16 %v599, %v598
      %v691 = vpack.c.b16 %v601, %v600
      %v692 = vpack.c.b16 %v603, %v602
      %v693 = vpack.c.b16 %v605, %v604
      %v694 = vpack.c.b16 %v607, %v606
      %v695 = vpack.c.b16 %v609, %v608
      %v696 = vpack.c.b16 %v611, %v610
      %v697 = vpack.c.b16 %v613, %v612
      %v698 = vpack.c.b16 %v615, %v614
      %v699 = vpack.c.b16 %v617, %v616
      %v700 = vpack.c.b16 %v619, %v618
      %v701 = vpack.c.b16 %v621, %v620
      %v702 = vpack.c.b16 %v623, %v622
      %v703 = vpack.c.b16 %v625, %v624
      %v704 = vpack.c.b16 %v627, %v626
      %v705 = vpack.c.b16 %v629, %v628
      %v706 = vpack.c.b16 %v631, %v630
      %v707 = vpack.c.b16 %v633, %v632
      %v708 = vpack.c.b16 %v635, %v634
      %v709 = vpack.c.b16 %v637, %v636
      %v710 = vpack.c.b16 %v639, %v638
      %v711 = vpack.c.b16 %v641, %v640
      %v712 = vpack.c.b16 %v643, %v642
      %v713 = vpack.c.b16 %v645, %v644
      %v714 = vpack.c.b16 %v647, %v646
      %v715 = vpack.c.b16 %v649, %v648
      %v716 = vpack.c.b16 %v651, %v650
      %v717 = vpack.c.b16 %v653, %v652
      %782 = vmatprep.subr.bf16.mxu0 0
      %783 = vmatpush1.bf16.msra.mxu0 %v661
      %784 = vmatprep.subr.bf16.mxu0 0
      %785 = vmatpush1.bf16.msra.mxu0 %v660
      %786 = vmatprep.subr.bf16.mxu0 0
      %787 = vmatpush1.bf16.msra.mxu0 %v659
      %788 = vmatprep.subr.bf16.mxu0 0
      %789 = vmatpush1.bf16.msra.mxu0 %v658
      %790 = vmatprep.subr.bf16.mxu0 0
      %791 = vmatpush1.bf16.msra.mxu0 %v657
      %792 = vmatprep.subr.bf16.mxu0 0
      %793 = vmatpush1.bf16.msra.mxu0 %v656
      %794 = vmatprep.subr.bf16.mxu0 0
      %795 = vmatpush1.bf16.msra.mxu0 %v655
      %796 = vmatprep.subr.bf16.mxu0 0
      %797 = vmatpush1.bf16.msra.mxu0 %v654
      %798 = vmatprep.subr.bf16.mxu0 0
      %799 = vmatpush2.bf16.msra.mxu0 %v669
      %800 = vmatprep.subr.bf16.mxu0 0
      %801 = vmatpush2.bf16.msra.mxu0 %v668
      %802 = vmatprep.subr.bf16.mxu0 0
      %803 = vmatpush2.bf16.msra.mxu0 %v667
      %804 = vmatprep.subr.bf16.mxu0 0
      %805 = vmatpush2.bf16.msra.mxu0 %v666
      %806 = vmatprep.subr.bf16.mxu0 0
      %807 = vmatpush2.bf16.msra.mxu0 %v665
      %808 = vmatprep.subr.bf16.mxu0 0
      %809 = vmatpush2.bf16.msra.mxu0 %v664
      %810 = vmatprep.subr.bf16.mxu0 0
      %811 = vmatpush2.bf16.msra.mxu0 %v663
      %812 = vmatprep.subr.bf16.mxu0 0
      %813 = vmatpush2.bf16.msra.mxu0 %v662
      %814 = vmatprep.mubr.bf16.mxu0 %v378
      %815 = vmatmul.mubr.bf16.gmra.mxu0 %v364
      %v816 = vpop.f32.mrf.mxu0
      %v817 = vadd.f32 %v339, %v816
      %v818 = vpop.f32.mrf.mxu0
      %v819 = vpop.f32.mrf.mxu0
      %v820 = vpop.f32.mrf.mxu0
      %821 = vdwg.mxu0
      %822 = vmatprep.subr.bf16.mxu0 0
      %823 = vmatpush1.bf16.msra.mxu0 %v677
      %824 = vmatprep.subr.bf16.mxu0 0
      %825 = vmatpush1.bf16.msra.mxu0 %v676
      %826 = vmatprep.subr.bf16.mxu0 0
      %827 = vmatpush1.bf16.msra.mxu0 %v675
      %828 = vmatprep.subr.bf16.mxu0 0
      %829 = vmatpush1.bf16.msra.mxu0 %v674
      %830 = vmatprep.subr.bf16.mxu0 0
      %831 = vmatpush1.bf16.msra.mxu0 %v673
      %832 = vmatprep.subr.bf16.mxu0 0
      %833 = vmatpush1.bf16.msra.mxu0 %v672
      %834 = vmatprep.subr.bf16.mxu0 0
      %835 = vmatpush1.bf16.msra.mxu0 %v671
      %836 = vmatprep.subr.bf16.mxu0 0
      %837 = vmatpush1.bf16.msra.mxu0 %v670
      %838 = vmatprep.subr.bf16.mxu0 0
      %839 = vmatpush2.bf16.msra.mxu0 %v685
      %840 = vmatprep.subr.bf16.mxu0 0
      %841 = vmatpush2.bf16.msra.mxu0 %v684
      %842 = vmatprep.subr.bf16.mxu0 0
      %843 = vmatpush2.bf16.msra.mxu0 %v683
      %844 = vmatprep.subr.bf16.mxu0 0
      %845 = vmatpush2.bf16.msra.mxu0 %v682
      %846 = vmatprep.subr.bf16.mxu0 0
      %847 = vmatpush2.bf16.msra.mxu0 %v681
      %848 = vmatprep.subr.bf16.mxu0 0
      %849 = vmatpush2.bf16.msra.mxu0 %v680
      %850 = vmatprep.subr.bf16.mxu0 0
      %851 = vmatpush2.bf16.msra.mxu0 %v679
      %852 = vmatprep.subr.bf16.mxu0 0
      %853 = vmatpush2.bf16.msra.mxu0 %v678
      %854 = vmatprep.mubr.bf16.mxu0 %v388
      %855 = vmatmul.mubr.bf16.gmra.mxu0 %v386
      %v856 = vpop.f32.mrf.mxu0
      %v857 = vadd.f32 %v817, %v856
      %v858 = vpop.f32.mrf.mxu0
      %v859 = vpop.f32.mrf.mxu0
      %v860 = vpop.f32.mrf.mxu0
      %861 = vdwg.mxu0
      %862 = vmatprep.subr.bf16.mxu0 0
      %863 = vmatpush1.bf16.msra.mxu0 %v693
      %864 = vmatprep.subr.bf16.mxu0 0
      %865 = vmatpush1.bf16.msra.mxu0 %v692
      %866 = vmatprep.subr.bf16.mxu0 0
      %867 = vmatpush1.bf16.msra.mxu0 %v691
      %868 = vmatprep.subr.bf16.mxu0 0
      %869 = vmatpush1.bf16.msra.mxu0 %v690
      %870 = vmatprep.subr.bf16.mxu0 0
      %871 = vmatpush1.bf16.msra.mxu0 %v689
      %872 = vmatprep.subr.bf16.mxu0 0
      %873 = vmatpush1.bf16.msra.mxu0 %v688
      %874 = vmatprep.subr.bf16.mxu0 0
      %875 = vmatpush1.bf16.msra.mxu0 %v687
      %876 = vmatprep.subr.bf16.mxu0 0
      %877 = vmatpush1.bf16.msra.mxu0 %v686
      %878 = vmatprep.subr.bf16.mxu0 0
      %879 = vmatpush2.bf16.msra.mxu0 %v701
      %880 = vmatprep.subr.bf16.mxu0 0
      %881 = vmatpush2.bf16.msra.mxu0 %v700
      %882 = vmatprep.subr.bf16.mxu0 0
      %883 = vmatpush2.bf16.msra.mxu0 %v699
      %884 = vmatprep.subr.bf16.mxu0 0
      %885 = vmatpush2.bf16.msra.mxu0 %v698
      %886 = vmatprep.subr.bf16.mxu0 0
      %887 = vmatpush2.bf16.msra.mxu0 %v697
      %888 = vmatprep.subr.bf16.mxu0 0
      %889 = vmatpush2.bf16.msra.mxu0 %v696
      %890 = vmatprep.subr.bf16.mxu0 0
      %891 = vmatpush2.bf16.msra.mxu0 %v695
      %892 = vmatprep.subr.bf16.mxu0 0
      %893 = vmatpush2.bf16.msra.mxu0 %v694
      %894 = vmatprep.mubr.bf16.mxu0 %v385
      %895 = vmatmul.mubr.bf16.gmra.mxu0 %v371
      %v896 = vpop.f32.mrf.mxu0
      %v897 = vadd.f32 %v857, %v896
      %v898 = vpop.f32.mrf.mxu0
      %v899 = vpop.f32.mrf.mxu0
      %v900 = vpop.f32.mrf.mxu0
      %901 = vdwg.mxu0
      %902 = vmatprep.subr.bf16.mxu0 0
      %903 = vmatpush1.bf16.msra.mxu0 %v709
      %904 = vmatprep.subr.bf16.mxu0 0
      %905 = vmatpush1.bf16.msra.mxu0 %v708
      %906 = vmatprep.subr.bf16.mxu0 0
      %907 = vmatpush1.bf16.msra.mxu0 %v707
      %908 = vmatprep.subr.bf16.mxu0 0
      %909 = vmatpush1.bf16.msra.mxu0 %v706
      %910 = vmatprep.subr.bf16.mxu0 0
      %911 = vmatpush1.bf16.msra.mxu0 %v705
      %912 = vmatprep.subr.bf16.mxu0 0
      %913 = vmatpush1.bf16.msra.mxu0 %v704
      %914 = vmatprep.subr.bf16.mxu0 0
      %915 = vmatpush1.bf16.msra.mxu0 %v703
      %916 = vmatprep.subr.bf16.mxu0 0
      %917 = vmatpush1.bf16.msra.mxu0 %v702
      %918 = vmatprep.subr.bf16.mxu0 0
      %919 = vmatpush2.bf16.msra.mxu0 %v717
      %920 = vmatprep.subr.bf16.mxu0 0
      %921 = vmatpush2.bf16.msra.mxu0 %v716
      %922 = vmatprep.subr.bf16.mxu0 0
      %923 = vmatpush2.bf16.msra.mxu0 %v715
      %924 = vmatprep.subr.bf16.mxu0 0
      %925 = vmatpush2.bf16.msra.mxu0 %v714
      %926 = vmatprep.subr.bf16.mxu0 0
      %927 = vmatpush2.bf16.msra.mxu0 %v713
      %928 = vmatprep.subr.bf16.mxu0 0
      %929 = vmatpush2.bf16.msra.mxu0 %v712
      %930 = vmatprep.subr.bf16.mxu0 0
      %931 = vmatpush2.bf16.msra.mxu0 %v711
      %932 = vmatprep.subr.bf16.mxu0 0
      %933 = vmatpush2.bf16.msra.mxu0 %v710
      %934 = vmatprep.mubr.bf16.mxu0 %v389
      %935 = vmatmul.mubr.bf16.gmra.mxu0 %v387
      %v936 = vpop.f32.mrf.mxu0
      %v937 = vadd.f32 %v897, %v936
      %v938 = vpop.f32.mrf.mxu0
      %v939 = vpop.f32.mrf.mxu0
      %v940 = vpop.f32.mrf.mxu0
      %941 = vdwg.mxu0
      %v942 = vxor.u32 %v937, 2147483648
      %v943 = vmul.f32 %v942, 1.442695
      %v944 = vpow.pop %v943
      %v945 = vadd.f32 %v944, 1.0
      %v946 = vrcp.pop %v945
      %v947 = vmul.f32 1.0, %v946
      %948 = vst [vmem:[%s199] sm:$0x1] %v947
      %p949 = scmp.lt.s32.totalorder %s20, 1
      %s950 = scalar_select %p949, %s20, 1
      %p951 = scmp.lt.s32.totalorder %s21, 0
      %s952 = scalar_select %p951, %s21, 0
      %s953 = sadd.s32 %s952, %s950
      %s954 = scalar_lea.vmem %s3, %s953
      // Predicated region
      $region33: #{discriminator_forward.23} parent=31 // pred_check
        %p955 = pneg %p118
      $region34: #{discriminator_forward.23} parent=31 // pred_check_branch
        %957 = sbr.rel (%p955) target = $region36
      $region35: #{discriminator_forward.23} parent=31 // pred_region
        _
      $region36: #{discriminator_forward.23} parent=31 // pred_fallthru
        _
    $region32: #{discriminator_forward.23} parent=5 // pred_fallthru
      _
    %p958 = scmp.le.s32.totalorder 2, %s11
    // Predicated region
    $region37: #{discriminator_forward.23} parent=5 // pred_check
      %p959 = pneg %p958
    $region38: #{discriminator_forward.23} parent=5 // pred_check_branch
      %961 = sbr.rel (%p959) target = $region40
    $region39: #{discriminator_forward.23} parent=5 // pred_region
      %s962 = ssub.s32 %s11, 2
      // Predicated region
      $region41: #{discriminator_forward.23} parent=39 // pred_check
        %p963 = pneg %p124
      $region42: #{discriminator_forward.23} parent=39 // pred_check_branch
        %965 = sbr.rel (%p963) target = $region44
      $region43: #{discriminator_forward.23} parent=39 // pred_region
        %p966 = scmp.lt.s32.totalorder %s22, 1
        %s967 = scalar_select %p966, %s22, 1
        %p968 = scmp.lt.s32.totalorder %s23, 0
        %s969 = scalar_select %p968, %s23, 0
        %s970 = sadd.s32 %s969, %s967
        %s971 = scalar_lea.vmem %s3, %s970
      $region44: #{discriminator_forward.23} parent=39 // pred_fallthru
        _
    $region40: #{discriminator_forward.23} parent=5 // pred_fallthru
      _
  $region6: #{discriminator_forward.23} parent=0 // loop_footer
    %s15 = sadd.s32 1, %s11
  $region7: #{discriminator_forward.23} parent=0 // loop_footer_branch
    %10 = sbr.rel target = $region3
  $region8: #{discriminator_forward.23} parent=0 // loop_exit
    _

</llo_original>
